<compile_context>
chip_gen: v5e
topology: v5e:2x2
jax: 0.10.0
libtpu: 0.0.40
codegen_flags: <defaults>
</compile_context>

<pallas_src>
from functools import partial

import numpy as np
import jax
import jax.numpy as jnp
from jax import lax
from jax.experimental import pallas as pl
from jax.experimental.pallas import tpu as pltpu  # noqa: F401  (no TPU-specific params needed at this size)

# ---- model hyper-parameters (small; n_head=6 requires d_model % 6 == 0) ----
D_MODEL = 48
N_HEAD = 6
HEAD_DIM = D_MODEL // N_HEAD
DIM_FF = 64
NUM_LAYER = 2
EPS = 1e-5
NEG_INF = -1e30

# rows of the per-layer bias / LayerNorm vector slab (width VEC_W)
(V_SA_BQKV, V_SA_BO, V_CA_BQ, V_CA_BKV, V_CA_BO,
 V_L1B, V_L2B, V_N1G, V_N1B, V_N2G, V_N2B, V_N3G, V_N3B) = range(13)
VEC_W = 3 * D_MODEL          # 144 (widest row: fused self-attn qkv bias)


# --------------------------- in-kernel helpers ------------------------------
def _layer_norm(x, g, b):
    mu = jnp.mean(x, axis=-1, keepdims=True)
    var = jnp.mean(jnp.square(x - mu), axis=-1, keepdims=True)
    return (x - mu) * lax.rsqrt(var + EPS) * g + b


# ------------------------------ Pallas kernel -------------------------------
def decoder_kernel(x_ref, mem_ref, smask_ref, cmask_ref,
                   w_sqkv_ref, w_small_ref, w_ckv_ref,
                   w_ff1_ref, w_ff2_ref, vec_ref, out_ref, *, num_layers):
    # TODO(synk): dropout layers run as identity (eval mode); attn / key-padding
    # masks and pos / query_pos embeddings are None (module call defaults).
    D, H, dh, F = D_MODEL, N_HEAD, HEAD_DIM, DIM_FF

    x = x_ref[...].astype(jnp.float32)        # (T*B, D)   row r = t*B + b
    mem = mem_ref[...].astype(jnp.float32)    # (S*B, D)   row r = s*B + b
    smask = smask_ref[...]                    # (T*B, T*B) 0 / -1e30 cross-batch
    cmask = cmask_ref[...]                    # (T*B, S*B)

    def split_heads(z, off):
        # (rows, >=off+H*dh) -> (H, rows, dh): static lane slices stacked on a
        # new leading axis (no minor-dim reshapes / transposes).
        return jnp.stack([z[:, off + h * dh: off + (h + 1) * dh]
                          for h in range(H)], axis=0)

    def attend(q, k, v, mask):
        # q:(H,Rq,dh)  k,v:(H,Rk,dh)  mask:(Rq,Rk).  Batch separation is done
        # by the additive mask; heads are batched in one einsum + one softmax.
        s = jnp.einsum("hqd,hkd->hqk", q, k,
                       preferred_element_type=jnp.float32) + mask[None]
        s = s - jnp.max(s, axis=-1, keepdims=True)
        e = jnp.exp(s)
        p = e * pl.reciprocal(jnp.sum(e, axis=-1, keepdims=True), approx=True)
        ctx = jnp.einsum("hqk,hkd->hqd", p, v,
                         preferred_element_type=jnp.float32)        # (H,Rq,dh)
        return jnp.concatenate([ctx[h] for h in range(H)], axis=-1)  # (Rq, D)

    for l in range(num_layers):               # static unroll over layers
        vl = vec_ref[l]                       # (13, VEC_W) bias / LN slab

        def vec(i, width=D, _vl=vl):
            return _vl[i:i + 1, :width]       # (1, width)

        # --- self-attention block (forward_post; dropout = identity) ---
        qkv = jnp.dot(x, w_sqkv_ref[l],
                      preferred_element_type=jnp.float32) + vec(V_SA_BQKV, 3 * D)
        ctx = attend(split_heads(qkv, 0), split_heads(qkv, D),
                     split_heads(qkv, 2 * D), smask)
        sa = jnp.dot(ctx, w_small_ref[l, 0],
                     preferred_element_type=jnp.float32) + vec(V_SA_BO)
        x = _layer_norm(x + sa, vec(V_N1G), vec(V_N1B))

        # --- cross-attention block (query = tgt, key = value = memory) ---
        qc = jnp.dot(x, w_small_ref[l, 1],
                     preferred_element_type=jnp.float32) + vec(V_CA_BQ)
        kv = jnp.dot(mem, w_ckv_ref[l],
                     preferred_element_type=jnp.float32) + vec(V_CA_BKV, 2 * D)
        ctx = attend(split_heads(qc, 0), split_heads(kv, 0),
                     split_heads(kv, D), cmask)
        ca = jnp.dot(ctx, w_small_ref[l, 2],
                     preferred_element_type=jnp.float32) + vec(V_CA_BO)
        x = _layer_norm(x + ca, vec(V_N2G), vec(V_N2B))

        # --- feed-forward block ---
        h1 = jnp.maximum(
            jnp.dot(x, w_ff1_ref[l], preferred_element_type=jnp.float32)
            + vec(V_L1B, F), 0.0)
        ff = jnp.dot(h1, w_ff2_ref[l],
                     preferred_element_type=jnp.float32) + vec(V_L2B)
        x = _layer_norm(x + ff, vec(V_N3G), vec(V_N3B))

    out_ref[...] = x.astype(out_ref.dtype)


# ------------------------------ wrappers -------------------------------------
def pack_params(params):
    """Pack per-layer dicts into fused slabs with a leading layer axis.

    The 1/sqrt(head_dim) scale is folded into W_q / b_q here (on parameters,
    once, host-side)."""
    scale = 1.0 / float(HEAD_DIM) ** 0.5
    w_sqkv, w_small, w_ckv, w_ff1, w_ff2, vecs = [], [], [], [], [], []
    for p in params:
        w_sqkv.append(jnp.concatenate(
            [p["sa_wq"] * scale, p["sa_wk"], p["sa_wv"]], axis=1))       # (D, 3D)
        w_small.append(jnp.stack(
            [p["sa_wo"], p["ca_wq"] * scale, p["ca_wo"]], axis=0))       # (3, D, D)
        w_ckv.append(jnp.concatenate([p["ca_wk"], p["ca_wv"]], axis=1))  # (D, 2D)
        w_ff1.append(p["l1_w"])                                          # (D, F)
        w_ff2.append(p["l2_w"])                                          # (F, D)
        rows = [
            jnp.concatenate([p["sa_bq"] * scale, p["sa_bk"], p["sa_bv"]], axis=1),
            p["sa_bo"],
            p["ca_bq"] * scale,
            jnp.concatenate([p["ca_bk"], p["ca_bv"]], axis=1),
            p["ca_bo"], p["l1_b"], p["l2_b"],
            p["n1_g"], p["n1_b"], p["n2_g"], p["n2_b"], p["n3_g"], p["n3_b"],
        ]
        vecs.append(jnp.concatenate(
            [jnp.pad(r, ((0, 0), (0, VEC_W - r.shape[1]))) for r in rows], axis=0))
    return (jnp.stack(w_sqkv), jnp.stack(w_small), jnp.stack(w_ckv),
            jnp.stack(w_ff1), jnp.stack(w_ff2), jnp.stack(vecs))


def _batch_masks(T, S, B):
    """Additive masks that forbid attention across batch elements.

    Rows of the flattened tgt are ordered t-major (r = t*B + b); rows of the
    flattened memory s-major (r = s*B + b), so batch(r) = r % B."""
    bq = np.arange(T * B) % B
    bs = np.arange(S * B) % B
    sm = np.where(bq[:, None] == bq[None, :], 0.0, NEG_INF).astype(np.float32)
    cm = np.where(bq[:, None] == bs[None, :], 0.0, NEG_INF).astype(np.float32)
    return jnp.asarray(sm), jnp.asarray(cm)


def transformer_decoder(tgt_tbd, memory_sbd, params):
    """Matches TransformerDecoder.forward (return_intermediate=False, norm=Identity)."""
    T, B, D = tgt_tbd.shape
    S = memory_sbd.shape[0]
    L = len(params)

    # (T,B,D)->(T*B,D) and (S,B,D)->(S*B,D) are contiguous reshapes (free; no
    # transpose, no extra HBM round trip).  Per-batch grouping is handled by
    # the additive cross-batch score masks inside the kernel.
    x2 = tgt_tbd.reshape(T * B, D)
    m2 = memory_sbd.reshape(S * B, D)
    smask, cmask = _batch_masks(T, S, B)
    slabs = pack_params(params)

    y = pl.pallas_call(
        partial(decoder_kernel, num_layers=L),
        out_shape=jax.ShapeDtypeStruct((T * B, D), jnp.float32),
    )(x2, m2, smask, cmask, *slabs)

    # norm = Identity; .unsqueeze(0) -> leading axis of size 1
    return y.reshape(T, B, D)[None]            # (1, T, B, D)


# -------------------------- deterministic params ------------------------------
def init_layer_params(key):
    ks = jax.random.split(key, 20)

    def w(k, shape, scale=0.05):
        return jax.random.normal(k, shape, jnp.float32) * scale

    D, F = D_MODEL, DIM_FF
    return {
        # self-attention (weights stored (in, out) so the kernel does x @ W)
        "sa_wq": w(ks[0], (D, D)), "sa_wk": w(ks[1], (D, D)), "sa_wv": w(ks[2], (D, D)),
        "sa_bq": w(ks[3], (1, D), 0.01), "sa_bk": w(ks[4], (1, D), 0.01),
        "sa_bv": w(ks[5], (1, D), 0.01),
        "sa_wo": w(ks[6], (D, D)), "sa_bo": w(ks[7], (1, D), 0.01),
        # cross-attention
        "ca_wq": w(ks[8], (D, D)), "ca_wk": w(ks[9], (D, D)), "ca_wv": w(ks[10], (D, D)),
        "ca_bq": w(ks[11], (1, D), 0.01), "ca_bk": w(ks[12], (1, D), 0.01),
        "ca_bv": w(ks[13], (1, D), 0.01),
        "ca_wo": w(ks[14], (D, D)), "ca_bo": w(ks[15], (1, D), 0.01),
        # feed-forward
        "l1_w": w(ks[16], (D, F)), "l1_b": w(ks[17], (1, F), 0.01),
        "l2_w": w(ks[18], (F, D)), "l2_b": w(ks[19], (1, D), 0.01),
        # layer norms (PyTorch default init)
        "n1_g": jnp.ones((1, D), jnp.float32), "n1_b": jnp.zeros((1, D), jnp.float32),
        "n2_g": jnp.ones((1, D), jnp.float32), "n2_b": jnp.zeros((1, D), jnp.float32),
        "n3_g": jnp.ones((1, D), jnp.float32), "n3_b": jnp.zeros((1, D), jnp.float32),
    }


# ------------------------------ JAX reference --------------------------------
def _ref_ln(x, g, b):
    mu = jnp.mean(x, axis=-1, keepdims=True)
    var = jnp.mean(jnp.square(x - mu), axis=-1, keepdims=True)
    return (x - mu) * lax.rsqrt(var + EPS) * g + b


def _ref_mha(q, k, v, wq, wk, wv, bq, bk, bv, wo, bo):
    B, Tq, D = q.shape
    Tk = k.shape[1]
    scale = 1.0 / (HEAD_DIM ** 0.5)
    Q = (q @ wq + bq).reshape(B, Tq, N_HEAD, HEAD_DIM).transpose(0, 2, 1, 3)
    K = (k @ wk + bk).reshape(B, Tk, N_HEAD, HEAD_DIM).transpose(0, 2, 1, 3)
    V = (v @ wv + bv).reshape(B, Tk, N_HEAD, HEAD_DIM).transpose(0, 2, 1, 3)
    s = jnp.einsum("bhqd,bhkd->bhqk", Q * scale, K)
    p = jax.nn.softmax(s, axis=-1)
    o = jnp.einsum("bhqk,bhkd->bhqd", p, V).transpose(0, 2, 1, 3).reshape(B, Tq, D)
    return o @ wo + bo


def _ref_layer(x, mem, lp):
    sa = _ref_mha(x, x, x, lp["sa_wq"], lp["sa_wk"], lp["sa_wv"],
                  lp["sa_bq"], lp["sa_bk"], lp["sa_bv"], lp["sa_wo"], lp["sa_bo"])
    x = _ref_ln(x + sa, lp["n1_g"], lp["n1_b"])
    ca = _ref_mha(x, mem, mem, lp["ca_wq"], lp["ca_wk"], lp["ca_wv"],
                  lp["ca_bq"], lp["ca_bk"], lp["ca_bv"], lp["ca_wo"], lp["ca_bo"])
    x = _ref_ln(x + ca, lp["n2_g"], lp["n2_b"])
    h = jnp.maximum(x @ lp["l1_w"] + lp["l1_b"], 0.0)
    ff = h @ lp["l2_w"] + lp["l2_b"]
    return _ref_ln(x + ff, lp["n3_g"], lp["n3_b"])


# ---------------------------------- main --------------------------------------
if __name__ == "__main__":
    T, S, B = 8, 16, 2
    key = jax.random.PRNGKey(0)
    k_t, k_m, k_p = jax.random.split(key, 3)
    tgt = jax.random.normal(k_t, (T, B, D_MODEL), jnp.float32)      # seq-first
    memory = jax.random.normal(k_m, (S, B, D_MODEL), jnp.float32)   # seq-first
    params = [init_layer_params(k) for k in jax.random.split(k_p, NUM_LAYER)]

    out = jax.block_until_ready(transformer_decoder(tgt, memory, params))

    # pure-JAX reference (same math, batched)
    x = jnp.transpose(tgt, (1, 0, 2))
    m = jnp.transpose(memory, (1, 0, 2))
    for lp in params:
        x = _ref_layer(x, m, lp)
    ref = jnp.transpose(x, (1, 0, 2))[None]

    assert out.shape == (1, T, B, D_MODEL), out.shape
    assert jnp.allclose(out, ref, atol=2e-3, rtol=2e-3), float(jnp.max(jnp.abs(out - ref)))
    print("KERNEL_OK")
</pallas_src>

<mosaic_0001>
module attributes {stable_mosaic.version = 11 : i64} {
  func.func @decoder_kernel(%arg0: memref<16x48xf32, #tpu.memory_space<vmem>>, %arg1: memref<32x48xf32, #tpu.memory_space<vmem>>, %arg2: memref<16x16xf32, #tpu.memory_space<vmem>>, %arg3: memref<16x32xf32, #tpu.memory_space<vmem>>, %arg4: memref<2x48x144xf32, #tpu.memory_space<vmem>>, %arg5: memref<2x3x48x48xf32, #tpu.memory_space<vmem>>, %arg6: memref<2x48x96xf32, #tpu.memory_space<vmem>>, %arg7: memref<2x48x64xf32, #tpu.memory_space<vmem>>, %arg8: memref<2x64x48xf32, #tpu.memory_space<vmem>>, %arg9: memref<2x13x144xf32, #tpu.memory_space<vmem>>, %arg10: memref<16x48xf32, #tpu.memory_space<vmem>>) attributes {dimension_semantics = [], scalar_prefetch = 0 : i64, scratch_operands = 0 : i64, tpu.core_type = #tpu.core_type<tc>} {
    %c0 = arith.constant 0 : index
    %c0_0 = arith.constant 0 : index
    %0 = vector.load %arg0[%c0, %c0_0] : memref<16x48xf32, #tpu.memory_space<vmem>>, vector<16x48xf32>
    %c0_1 = arith.constant 0 : index
    %c0_2 = arith.constant 0 : index
    %1 = vector.load %arg1[%c0_1, %c0_2] : memref<32x48xf32, #tpu.memory_space<vmem>>, vector<32x48xf32>
    %c0_3 = arith.constant 0 : index
    %c0_4 = arith.constant 0 : index
    %2 = vector.load %arg2[%c0_3, %c0_4] : memref<16x16xf32, #tpu.memory_space<vmem>>, vector<16x16xf32>
    %c0_5 = arith.constant 0 : index
    %c0_6 = arith.constant 0 : index
    %3 = vector.load %arg3[%c0_5, %c0_6] : memref<16x32xf32, #tpu.memory_space<vmem>>, vector<16x32xf32>
    %c0_7 = arith.constant 0 : index
    %c0_8 = arith.constant 0 : index
    %c0_9 = arith.constant 0 : index
    %4 = vector.load %arg9[%c0_7, %c0_8, %c0_9] : memref<2x13x144xf32, #tpu.memory_space<vmem>>, vector<1x13x144xf32>
    %5 = vector.shape_cast %4 : vector<1x13x144xf32> to vector<13x144xf32>
    %c0_10 = arith.constant 0 : index
    %c0_11 = arith.constant 0 : index
    %c0_12 = arith.constant 0 : index
    %6 = vector.load %arg4[%c0_10, %c0_11, %c0_12] : memref<2x48x144xf32, #tpu.memory_space<vmem>>, vector<1x48x144xf32>
    %7 = vector.shape_cast %6 : vector<1x48x144xf32> to vector<48x144xf32>
    %cst = arith.constant dense<0.000000e+00> : vector<16x144xf32>
    %8 = tpu.matmul %0, %7, %cst {dimension_numbers = #tpu.dot_dimension_numbers<[1], [0], [0], [1], [0, 0, 1, 1], [], []>} : vector<16x48xf32>, vector<48x144xf32>, vector<16x144xf32> -> vector<16x144xf32>
    %9 = vector.extract_strided_slice %5 {offsets = [0, 0], sizes = [1, 144], strides = [1, 1]} : vector<13x144xf32> to vector<1x144xf32>
    %10 = vector.broadcast %9 : vector<1x144xf32> to vector<16x144xf32>
    %11 = arith.addf %8, %10 : vector<16x144xf32>
    %12 = vector.extract_strided_slice %11 {offsets = [0, 0], sizes = [16, 8], strides = [1, 1]} : vector<16x144xf32> to vector<16x8xf32>
    %13 = vector.extract_strided_slice %11 {offsets = [0, 8], sizes = [16, 8], strides = [1, 1]} : vector<16x144xf32> to vector<16x8xf32>
    %14 = vector.extract_strided_slice %11 {offsets = [0, 16], sizes = [16, 8], strides = [1, 1]} : vector<16x144xf32> to vector<16x8xf32>
    %15 = vector.extract_strided_slice %11 {offsets = [0, 24], sizes = [16, 8], strides = [1, 1]} : vector<16x144xf32> to vector<16x8xf32>
    %16 = vector.extract_strided_slice %11 {offsets = [0, 32], sizes = [16, 8], strides = [1, 1]} : vector<16x144xf32> to vector<16x8xf32>
    %17 = vector.extract_strided_slice %11 {offsets = [0, 40], sizes = [16, 8], strides = [1, 1]} : vector<16x144xf32> to vector<16x8xf32>
    %18 = vector.shape_cast %12 : vector<16x8xf32> to vector<1x16x8xf32>
    %19 = vector.shape_cast %13 : vector<16x8xf32> to vector<1x16x8xf32>
    %20 = vector.shape_cast %14 : vector<16x8xf32> to vector<1x16x8xf32>
    %21 = vector.shape_cast %15 : vector<16x8xf32> to vector<1x16x8xf32>
    %22 = vector.shape_cast %16 : vector<16x8xf32> to vector<1x16x8xf32>
    %23 = vector.shape_cast %17 : vector<16x8xf32> to vector<1x16x8xf32>
    %24 = tpu.concatenate %18, %19, %20, %21, %22, %23 in 0 : vector<1x16x8xf32>, vector<1x16x8xf32>, vector<1x16x8xf32>, vector<1x16x8xf32>, vector<1x16x8xf32>, vector<1x16x8xf32> -> vector<6x16x8xf32>
    %25 = vector.extract_strided_slice %11 {offsets = [0, 48], sizes = [16, 8], strides = [1, 1]} : vector<16x144xf32> to vector<16x8xf32>
    %26 = vector.extract_strided_slice %11 {offsets = [0, 56], sizes = [16, 8], strides = [1, 1]} : vector<16x144xf32> to vector<16x8xf32>
    %27 = vector.extract_strided_slice %11 {offsets = [0, 64], sizes = [16, 8], strides = [1, 1]} : vector<16x144xf32> to vector<16x8xf32>
    %28 = vector.extract_strided_slice %11 {offsets = [0, 72], sizes = [16, 8], strides = [1, 1]} : vector<16x144xf32> to vector<16x8xf32>
    %29 = vector.extract_strided_slice %11 {offsets = [0, 80], sizes = [16, 8], strides = [1, 1]} : vector<16x144xf32> to vector<16x8xf32>
    %30 = vector.extract_strided_slice %11 {offsets = [0, 88], sizes = [16, 8], strides = [1, 1]} : vector<16x144xf32> to vector<16x8xf32>
    %31 = vector.shape_cast %25 : vector<16x8xf32> to vector<1x16x8xf32>
    %32 = vector.shape_cast %26 : vector<16x8xf32> to vector<1x16x8xf32>
    %33 = vector.shape_cast %27 : vector<16x8xf32> to vector<1x16x8xf32>
    %34 = vector.shape_cast %28 : vector<16x8xf32> to vector<1x16x8xf32>
    %35 = vector.shape_cast %29 : vector<16x8xf32> to vector<1x16x8xf32>
    %36 = vector.shape_cast %30 : vector<16x8xf32> to vector<1x16x8xf32>
    %37 = tpu.concatenate %31, %32, %33, %34, %35, %36 in 0 : vector<1x16x8xf32>, vector<1x16x8xf32>, vector<1x16x8xf32>, vector<1x16x8xf32>, vector<1x16x8xf32>, vector<1x16x8xf32> -> vector<6x16x8xf32>
    %38 = vector.extract_strided_slice %11 {offsets = [0, 96], sizes = [16, 8], strides = [1, 1]} : vector<16x144xf32> to vector<16x8xf32>
    %39 = vector.extract_strided_slice %11 {offsets = [0, 104], sizes = [16, 8], strides = [1, 1]} : vector<16x144xf32> to vector<16x8xf32>
    %40 = vector.extract_strided_slice %11 {offsets = [0, 112], sizes = [16, 8], strides = [1, 1]} : vector<16x144xf32> to vector<16x8xf32>
    %41 = vector.extract_strided_slice %11 {offsets = [0, 120], sizes = [16, 8], strides = [1, 1]} : vector<16x144xf32> to vector<16x8xf32>
    %42 = vector.extract_strided_slice %11 {offsets = [0, 128], sizes = [16, 8], strides = [1, 1]} : vector<16x144xf32> to vector<16x8xf32>
    %43 = vector.extract_strided_slice %11 {offsets = [0, 136], sizes = [16, 8], strides = [1, 1]} : vector<16x144xf32> to vector<16x8xf32>
    %44 = vector.shape_cast %38 : vector<16x8xf32> to vector<1x16x8xf32>
    %45 = vector.shape_cast %39 : vector<16x8xf32> to vector<1x16x8xf32>
    %46 = vector.shape_cast %40 : vector<16x8xf32> to vector<1x16x8xf32>
    %47 = vector.shape_cast %41 : vector<16x8xf32> to vector<1x16x8xf32>
    %48 = vector.shape_cast %42 : vector<16x8xf32> to vector<1x16x8xf32>
    %49 = vector.shape_cast %43 : vector<16x8xf32> to vector<1x16x8xf32>
    %50 = tpu.concatenate %44, %45, %46, %47, %48, %49 in 0 : vector<1x16x8xf32>, vector<1x16x8xf32>, vector<1x16x8xf32>, vector<1x16x8xf32>, vector<1x16x8xf32>, vector<1x16x8xf32> -> vector<6x16x8xf32>
    "tpu.trace_start"() <{level = 10 : i32, message = "hqd,hkd->hqk"}> : () -> ()
    %cst_13 = arith.constant dense<0.000000e+00> : vector<6x16x16xf32>
    %51 = tpu.matmul %24, %37, %cst_13 {dimension_numbers = #tpu.dot_dimension_numbers<[2], [2], [1], [1], [0, 0, 0, 1, 1, 1], [0], [0]>} : vector<6x16x8xf32>, vector<6x16x8xf32>, vector<6x16x16xf32> -> vector<6x16x16xf32>
    "tpu.trace_stop"() : () -> ()
    %52 = vector.shape_cast %2 : vector<16x16xf32> to vector<1x16x16xf32>
    %53 = vector.broadcast %52 : vector<1x16x16xf32> to vector<6x16x16xf32>
    %54 = arith.addf %51, %53 : vector<6x16x16xf32>
    %cst_14 = arith.constant dense<0xFF800000> : vector<6x16xf32>
    %55 = vector.multi_reduction <maximumf>, %54, %cst_14 [2] : vector<6x16x16xf32> to vector<6x16xf32>
    %56 = vector.shape_cast %55 : vector<6x16xf32> to vector<6x16x1xf32>
    %57 = vector.broadcast %56 : vector<6x16x1xf32> to vector<6x16x16xf32>
    %58 = arith.subf %54, %57 : vector<6x16x16xf32>
    %59 = math.exp %58 : vector<6x16x16xf32>
    %cst_15 = arith.constant dense<0.000000e+00> : vector<6x16xf32>
    %60 = vector.multi_reduction <add>, %59, %cst_15 [2] : vector<6x16x16xf32> to vector<6x16xf32>
    %61 = vector.shape_cast %60 : vector<6x16xf32> to vector<6x16x1xf32>
    %62 = tpu.reciprocal %61 {approx = true} : vector<6x16x1xf32> -> vector<6x16x1xf32>
    %63 = vector.broadcast %62 : vector<6x16x1xf32> to vector<6x16x16xf32>
    %64 = arith.mulf %59, %63 : vector<6x16x16xf32>
    "tpu.trace_start"() <{level = 10 : i32, message = "hqk,hkd->hqd"}> : () -> ()
    %cst_16 = arith.constant dense<0.000000e+00> : vector<6x16x8xf32>
    %65 = tpu.matmul %64, %50, %cst_16 {dimension_numbers = #tpu.dot_dimension_numbers<[2], [1], [1], [2], [0, 0, 0, 1, 1, 2], [0], [0]>} : vector<6x16x16xf32>, vector<6x16x8xf32>, vector<6x16x8xf32> -> vector<6x16x8xf32>
    "tpu.trace_stop"() : () -> ()
    %66 = vector.extract_strided_slice %65 {offsets = [0, 0, 0], sizes = [1, 16, 8], strides = [1, 1, 1]} : vector<6x16x8xf32> to vector<1x16x8xf32>
    %67 = vector.shape_cast %66 : vector<1x16x8xf32> to vector<16x8xf32>
    %68 = vector.extract_strided_slice %65 {offsets = [1, 0, 0], sizes = [1, 16, 8], strides = [1, 1, 1]} : vector<6x16x8xf32> to vector<1x16x8xf32>
    %69 = vector.shape_cast %68 : vector<1x16x8xf32> to vector<16x8xf32>
    %70 = vector.extract_strided_slice %65 {offsets = [2, 0, 0], sizes = [1, 16, 8], strides = [1, 1, 1]} : vector<6x16x8xf32> to vector<1x16x8xf32>
    %71 = vector.shape_cast %70 : vector<1x16x8xf32> to vector<16x8xf32>
    %72 = vector.extract_strided_slice %65 {offsets = [3, 0, 0], sizes = [1, 16, 8], strides = [1, 1, 1]} : vector<6x16x8xf32> to vector<1x16x8xf32>
    %73 = vector.shape_cast %72 : vector<1x16x8xf32> to vector<16x8xf32>
    %74 = vector.extract_strided_slice %65 {offsets = [4, 0, 0], sizes = [1, 16, 8], strides = [1, 1, 1]} : vector<6x16x8xf32> to vector<1x16x8xf32>
    %75 = vector.shape_cast %74 : vector<1x16x8xf32> to vector<16x8xf32>
    %76 = vector.extract_strided_slice %65 {offsets = [5, 0, 0], sizes = [1, 16, 8], strides = [1, 1, 1]} : vector<6x16x8xf32> to vector<1x16x8xf32>
    %77 = vector.shape_cast %76 : vector<1x16x8xf32> to vector<16x8xf32>
    %78 = tpu.concatenate %67, %69, %71, %73, %75, %77 in 1 : vector<16x8xf32>, vector<16x8xf32>, vector<16x8xf32>, vector<16x8xf32>, vector<16x8xf32>, vector<16x8xf32> -> vector<16x48xf32>
    %c0_17 = arith.constant 0 : index
    %c0_18 = arith.constant 0 : index
    %c0_19 = arith.constant 0 : index
    %c0_20 = arith.constant 0 : index
    %79 = vector.load %arg5[%c0_17, %c0_18, %c0_19, %c0_20] : memref<2x3x48x48xf32, #tpu.memory_space<vmem>>, vector<1x1x48x48xf32>
    %80 = vector.shape_cast %79 : vector<1x1x48x48xf32> to vector<48x48xf32>
    %cst_21 = arith.constant dense<0.000000e+00> : vector<16x48xf32>
    %81 = tpu.matmul %78, %80, %cst_21 {dimension_numbers = #tpu.dot_dimension_numbers<[1], [0], [0], [1], [0, 0, 1, 1], [], []>} : vector<16x48xf32>, vector<48x48xf32>, vector<16x48xf32> -> vector<16x48xf32>
    %82 = vector.extract_strided_slice %5 {offsets = [1, 0], sizes = [1, 48], strides = [1, 1]} : vector<13x144xf32> to vector<1x48xf32>
    %83 = vector.broadcast %82 : vector<1x48xf32> to vector<16x48xf32>
    %84 = arith.addf %81, %83 : vector<16x48xf32>
    %85 = arith.addf %0, %84 : vector<16x48xf32>
    %86 = vector.extract_strided_slice %5 {offsets = [7, 0], sizes = [1, 48], strides = [1, 1]} : vector<13x144xf32> to vector<1x48xf32>
    %87 = vector.extract_strided_slice %5 {offsets = [8, 0], sizes = [1, 48], strides = [1, 1]} : vector<13x144xf32> to vector<1x48xf32>
    %cst_22 = arith.constant dense<0.000000e+00> : vector<16xf32>
    %88 = vector.multi_reduction <add>, %85, %cst_22 [1] : vector<16x48xf32> to vector<16xf32>
    %89 = vector.shape_cast %88 : vector<16xf32> to vector<16x1xf32>
    %cst_23 = arith.constant 4.800000e+01 : f32
    %90 = vector.broadcast %cst_23 : f32 to vector<16x1xf32>
    %91 = arith.divf %89, %90 : vector<16x1xf32>
    %92 = vector.broadcast %91 : vector<16x1xf32> to vector<16x48xf32>
    %93 = arith.subf %85, %92 : vector<16x48xf32>
    %94 = arith.mulf %93, %93 : vector<16x48xf32>
    %cst_24 = arith.constant dense<0.000000e+00> : vector<16xf32>
    %95 = vector.multi_reduction <add>, %94, %cst_24 [1] : vector<16x48xf32> to vector<16xf32>
    %96 = vector.shape_cast %95 : vector<16xf32> to vector<16x1xf32>
    %cst_25 = arith.constant 4.800000e+01 : f32
    %97 = vector.broadcast %cst_25 : f32 to vector<16x1xf32>
    %98 = arith.divf %96, %97 : vector<16x1xf32>
    %99 = vector.broadcast %91 : vector<16x1xf32> to vector<16x48xf32>
    %100 = arith.subf %85, %99 : vector<16x48xf32>
    %cst_26 = arith.constant 9.99999974E-6 : f32
    %101 = vector.broadcast %cst_26 : f32 to vector<16x1xf32>
    %102 = arith.addf %98, %101 : vector<16x1xf32>
    %103 = math.rsqrt %102 : vector<16x1xf32>
    %104 = vector.broadcast %103 : vector<16x1xf32> to vector<16x48xf32>
    %105 = arith.mulf %100, %104 : vector<16x48xf32>
    %106 = vector.broadcast %86 : vector<1x48xf32> to vector<16x48xf32>
    %107 = arith.mulf %105, %106 : vector<16x48xf32>
    %108 = vector.broadcast %87 : vector<1x48xf32> to vector<16x48xf32>
    %109 = arith.addf %107, %108 : vector<16x48xf32>
    %c0_27 = arith.constant 0 : index
    %c1 = arith.constant 1 : index
    %c0_28 = arith.constant 0 : index
    %c0_29 = arith.constant 0 : index
    %110 = vector.load %arg5[%c0_27, %c1, %c0_28, %c0_29] : memref<2x3x48x48xf32, #tpu.memory_space<vmem>>, vector<1x1x48x48xf32>
    %111 = vector.shape_cast %110 : vector<1x1x48x48xf32> to vector<48x48xf32>
    %cst_30 = arith.constant dense<0.000000e+00> : vector<16x48xf32>
    %112 = tpu.matmul %109, %111, %cst_30 {dimension_numbers = #tpu.dot_dimension_numbers<[1], [0], [0], [1], [0, 0, 1, 1], [], []>} : vector<16x48xf32>, vector<48x48xf32>, vector<16x48xf32> -> vector<16x48xf32>
    %113 = vector.extract_strided_slice %5 {offsets = [2, 0], sizes = [1, 48], strides = [1, 1]} : vector<13x144xf32> to vector<1x48xf32>
    %114 = vector.broadcast %113 : vector<1x48xf32> to vector<16x48xf32>
    %115 = arith.addf %112, %114 : vector<16x48xf32>
    %c0_31 = arith.constant 0 : index
    %c0_32 = arith.constant 0 : index
    %c0_33 = arith.constant 0 : index
    %116 = vector.load %arg6[%c0_31, %c0_32, %c0_33] : memref<2x48x96xf32, #tpu.memory_space<vmem>>, vector<1x48x96xf32>
    %117 = vector.shape_cast %116 : vector<1x48x96xf32> to vector<48x96xf32>
    %cst_34 = arith.constant dense<0.000000e+00> : vector<32x96xf32>
    %118 = tpu.matmul %1, %117, %cst_34 {dimension_numbers = #tpu.dot_dimension_numbers<[1], [0], [0], [1], [0, 0, 1, 1], [], []>} : vector<32x48xf32>, vector<48x96xf32>, vector<32x96xf32> -> vector<32x96xf32>
    %119 = vector.extract_strided_slice %5 {offsets = [3, 0], sizes = [1, 96], strides = [1, 1]} : vector<13x144xf32> to vector<1x96xf32>
    %120 = vector.broadcast %119 : vector<1x96xf32> to vector<32x96xf32>
    %121 = arith.addf %118, %120 : vector<32x96xf32>
    %122 = vector.extract_strided_slice %115 {offsets = [0, 0], sizes = [16, 8], strides = [1, 1]} : vector<16x48xf32> to vector<16x8xf32>
    %123 = vector.extract_strided_slice %115 {offsets = [0, 8], sizes = [16, 8], strides = [1, 1]} : vector<16x48xf32> to vector<16x8xf32>
    %124 = vector.extract_strided_slice %115 {offsets = [0, 16], sizes = [16, 8], strides = [1, 1]} : vector<16x48xf32> to vector<16x8xf32>
    %125 = vector.extract_strided_slice %115 {offsets = [0, 24], sizes = [16, 8], strides = [1, 1]} : vector<16x48xf32> to vector<16x8xf32>
    %126 = vector.extract_strided_slice %115 {offsets = [0, 32], sizes = [16, 8], strides = [1, 1]} : vector<16x48xf32> to vector<16x8xf32>
    %127 = vector.extract_strided_slice %115 {offsets = [0, 40], sizes = [16, 8], strides = [1, 1]} : vector<16x48xf32> to vector<16x8xf32>
    %128 = vector.shape_cast %122 : vector<16x8xf32> to vector<1x16x8xf32>
    %129 = vector.shape_cast %123 : vector<16x8xf32> to vector<1x16x8xf32>
    %130 = vector.shape_cast %124 : vector<16x8xf32> to vector<1x16x8xf32>
    %131 = vector.shape_cast %125 : vector<16x8xf32> to vector<1x16x8xf32>
    %132 = vector.shape_cast %126 : vector<16x8xf32> to vector<1x16x8xf32>
    %133 = vector.shape_cast %127 : vector<16x8xf32> to vector<1x16x8xf32>
    %134 = tpu.concatenate %128, %129, %130, %131, %132, %133 in 0 : vector<1x16x8xf32>, vector<1x16x8xf32>, vector<1x16x8xf32>, vector<1x16x8xf32>, vector<1x16x8xf32>, vector<1x16x8xf32> -> vector<6x16x8xf32>
    %135 = vector.extract_strided_slice %121 {offsets = [0, 0], sizes = [32, 8], strides = [1, 1]} : vector<32x96xf32> to vector<32x8xf32>
    %136 = vector.extract_strided_slice %121 {offsets = [0, 8], sizes = [32, 8], strides = [1, 1]} : vector<32x96xf32> to vector<32x8xf32>
    %137 = vector.extract_strided_slice %121 {offsets = [0, 16], sizes = [32, 8], strides = [1, 1]} : vector<32x96xf32> to vector<32x8xf32>
    %138 = vector.extract_strided_slice %121 {offsets = [0, 24], sizes = [32, 8], strides = [1, 1]} : vector<32x96xf32> to vector<32x8xf32>
    %139 = vector.extract_strided_slice %121 {offsets = [0, 32], sizes = [32, 8], strides = [1, 1]} : vector<32x96xf32> to vector<32x8xf32>
    %140 = vector.extract_strided_slice %121 {offsets = [0, 40], sizes = [32, 8], strides = [1, 1]} : vector<32x96xf32> to vector<32x8xf32>
    %141 = vector.shape_cast %135 : vector<32x8xf32> to vector<1x32x8xf32>
    %142 = vector.shape_cast %136 : vector<32x8xf32> to vector<1x32x8xf32>
    %143 = vector.shape_cast %137 : vector<32x8xf32> to vector<1x32x8xf32>
    %144 = vector.shape_cast %138 : vector<32x8xf32> to vector<1x32x8xf32>
    %145 = vector.shape_cast %139 : vector<32x8xf32> to vector<1x32x8xf32>
    %146 = vector.shape_cast %140 : vector<32x8xf32> to vector<1x32x8xf32>
    %147 = tpu.concatenate %141, %142, %143, %144, %145, %146 in 0 : vector<1x32x8xf32>, vector<1x32x8xf32>, vector<1x32x8xf32>, vector<1x32x8xf32>, vector<1x32x8xf32>, vector<1x32x8xf32> -> vector<6x32x8xf32>
    %148 = vector.extract_strided_slice %121 {offsets = [0, 48], sizes = [32, 8], strides = [1, 1]} : vector<32x96xf32> to vector<32x8xf32>
    %149 = vector.extract_strided_slice %121 {offsets = [0, 56], sizes = [32, 8], strides = [1, 1]} : vector<32x96xf32> to vector<32x8xf32>
    %150 = vector.extract_strided_slice %121 {offsets = [0, 64], sizes = [32, 8], strides = [1, 1]} : vector<32x96xf32> to vector<32x8xf32>
    %151 = vector.extract_strided_slice %121 {offsets = [0, 72], sizes = [32, 8], strides = [1, 1]} : vector<32x96xf32> to vector<32x8xf32>
    %152 = vector.extract_strided_slice %121 {offsets = [0, 80], sizes = [32, 8], strides = [1, 1]} : vector<32x96xf32> to vector<32x8xf32>
    %153 = vector.extract_strided_slice %121 {offsets = [0, 88], sizes = [32, 8], strides = [1, 1]} : vector<32x96xf32> to vector<32x8xf32>
    %154 = vector.shape_cast %148 : vector<32x8xf32> to vector<1x32x8xf32>
    %155 = vector.shape_cast %149 : vector<32x8xf32> to vector<1x32x8xf32>
    %156 = vector.shape_cast %150 : vector<32x8xf32> to vector<1x32x8xf32>
    %157 = vector.shape_cast %151 : vector<32x8xf32> to vector<1x32x8xf32>
    %158 = vector.shape_cast %152 : vector<32x8xf32> to vector<1x32x8xf32>
    %159 = vector.shape_cast %153 : vector<32x8xf32> to vector<1x32x8xf32>
    %160 = tpu.concatenate %154, %155, %156, %157, %158, %159 in 0 : vector<1x32x8xf32>, vector<1x32x8xf32>, vector<1x32x8xf32>, vector<1x32x8xf32>, vector<1x32x8xf32>, vector<1x32x8xf32> -> vector<6x32x8xf32>
    "tpu.trace_start"() <{level = 10 : i32, message = "hqd,hkd->hqk"}> : () -> ()
    %cst_35 = arith.constant dense<0.000000e+00> : vector<6x16x32xf32>
    %161 = tpu.matmul %134, %147, %cst_35 {dimension_numbers = #tpu.dot_dimension_numbers<[2], [2], [1], [1], [0, 0, 0, 1, 1, 1], [0], [0]>} : vector<6x16x8xf32>, vector<6x32x8xf32>, vector<6x16x32xf32> -> vector<6x16x32xf32>
    "tpu.trace_stop"() : () -> ()
    %162 = vector.shape_cast %3 : vector<16x32xf32> to vector<1x16x32xf32>
    %163 = vector.broadcast %162 : vector<1x16x32xf32> to vector<6x16x32xf32>
    %164 = arith.addf %161, %163 : vector<6x16x32xf32>
    %cst_36 = arith.constant dense<0xFF800000> : vector<6x16xf32>
    %165 = vector.multi_reduction <maximumf>, %164, %cst_36 [2] : vector<6x16x32xf32> to vector<6x16xf32>
    %166 = vector.shape_cast %165 : vector<6x16xf32> to vector<6x16x1xf32>
    %167 = vector.broadcast %166 : vector<6x16x1xf32> to vector<6x16x32xf32>
    %168 = arith.subf %164, %167 : vector<6x16x32xf32>
    %169 = math.exp %168 : vector<6x16x32xf32>
    %cst_37 = arith.constant dense<0.000000e+00> : vector<6x16xf32>
    %170 = vector.multi_reduction <add>, %169, %cst_37 [2] : vector<6x16x32xf32> to vector<6x16xf32>
    %171 = vector.shape_cast %170 : vector<6x16xf32> to vector<6x16x1xf32>
    %172 = tpu.reciprocal %171 {approx = true} : vector<6x16x1xf32> -> vector<6x16x1xf32>
    %173 = vector.broadcast %172 : vector<6x16x1xf32> to vector<6x16x32xf32>
    %174 = arith.mulf %169, %173 : vector<6x16x32xf32>
    "tpu.trace_start"() <{level = 10 : i32, message = "hqk,hkd->hqd"}> : () -> ()
    %cst_38 = arith.constant dense<0.000000e+00> : vector<6x16x8xf32>
    %175 = tpu.matmul %174, %160, %cst_38 {dimension_numbers = #tpu.dot_dimension_numbers<[2], [1], [1], [2], [0, 0, 0, 1, 1, 2], [0], [0]>} : vector<6x16x32xf32>, vector<6x32x8xf32>, vector<6x16x8xf32> -> vector<6x16x8xf32>
    "tpu.trace_stop"() : () -> ()
    %176 = vector.extract_strided_slice %175 {offsets = [0, 0, 0], sizes = [1, 16, 8], strides = [1, 1, 1]} : vector<6x16x8xf32> to vector<1x16x8xf32>
    %177 = vector.shape_cast %176 : vector<1x16x8xf32> to vector<16x8xf32>
    %178 = vector.extract_strided_slice %175 {offsets = [1, 0, 0], sizes = [1, 16, 8], strides = [1, 1, 1]} : vector<6x16x8xf32> to vector<1x16x8xf32>
    %179 = vector.shape_cast %178 : vector<1x16x8xf32> to vector<16x8xf32>
    %180 = vector.extract_strided_slice %175 {offsets = [2, 0, 0], sizes = [1, 16, 8], strides = [1, 1, 1]} : vector<6x16x8xf32> to vector<1x16x8xf32>
    %181 = vector.shape_cast %180 : vector<1x16x8xf32> to vector<16x8xf32>
    %182 = vector.extract_strided_slice %175 {offsets = [3, 0, 0], sizes = [1, 16, 8], strides = [1, 1, 1]} : vector<6x16x8xf32> to vector<1x16x8xf32>
    %183 = vector.shape_cast %182 : vector<1x16x8xf32> to vector<16x8xf32>
    %184 = vector.extract_strided_slice %175 {offsets = [4, 0, 0], sizes = [1, 16, 8], strides = [1, 1, 1]} : vector<6x16x8xf32> to vector<1x16x8xf32>
    %185 = vector.shape_cast %184 : vector<1x16x8xf32> to vector<16x8xf32>
    %186 = vector.extract_strided_slice %175 {offsets = [5, 0, 0], sizes = [1, 16, 8], strides = [1, 1, 1]} : vector<6x16x8xf32> to vector<1x16x8xf32>
    %187 = vector.shape_cast %186 : vector<1x16x8xf32> to vector<16x8xf32>
    %188 = tpu.concatenate %177, %179, %181, %183, %185, %187 in 1 : vector<16x8xf32>, vector<16x8xf32>, vector<16x8xf32>, vector<16x8xf32>, vector<16x8xf32>, vector<16x8xf32> -> vector<16x48xf32>
    %c0_39 = arith.constant 0 : index
    %c2 = arith.constant 2 : index
    %c0_40 = arith.constant 0 : index
    %c0_41 = arith.constant 0 : index
    %189 = vector.load %arg5[%c0_39, %c2, %c0_40, %c0_41] : memref<2x3x48x48xf32, #tpu.memory_space<vmem>>, vector<1x1x48x48xf32>
    %190 = vector.shape_cast %189 : vector<1x1x48x48xf32> to vector<48x48xf32>
    %cst_42 = arith.constant dense<0.000000e+00> : vector<16x48xf32>
    %191 = tpu.matmul %188, %190, %cst_42 {dimension_numbers = #tpu.dot_dimension_numbers<[1], [0], [0], [1], [0, 0, 1, 1], [], []>} : vector<16x48xf32>, vector<48x48xf32>, vector<16x48xf32> -> vector<16x48xf32>
    %192 = vector.extract_strided_slice %5 {offsets = [4, 0], sizes = [1, 48], strides = [1, 1]} : vector<13x144xf32> to vector<1x48xf32>
    %193 = vector.broadcast %192 : vector<1x48xf32> to vector<16x48xf32>
    %194 = arith.addf %191, %193 : vector<16x48xf32>
    %195 = arith.addf %109, %194 : vector<16x48xf32>
    %196 = vector.extract_strided_slice %5 {offsets = [9, 0], sizes = [1, 48], strides = [1, 1]} : vector<13x144xf32> to vector<1x48xf32>
    %197 = vector.extract_strided_slice %5 {offsets = [10, 0], sizes = [1, 48], strides = [1, 1]} : vector<13x144xf32> to vector<1x48xf32>
    %cst_43 = arith.constant dense<0.000000e+00> : vector<16xf32>
    %198 = vector.multi_reduction <add>, %195, %cst_43 [1] : vector<16x48xf32> to vector<16xf32>
    %199 = vector.shape_cast %198 : vector<16xf32> to vector<16x1xf32>
    %cst_44 = arith.constant 4.800000e+01 : f32
    %200 = vector.broadcast %cst_44 : f32 to vector<16x1xf32>
    %201 = arith.divf %199, %200 : vector<16x1xf32>
    %202 = vector.broadcast %201 : vector<16x1xf32> to vector<16x48xf32>
    %203 = arith.subf %195, %202 : vector<16x48xf32>
    %204 = arith.mulf %203, %203 : vector<16x48xf32>
    %cst_45 = arith.constant dense<0.000000e+00> : vector<16xf32>
    %205 = vector.multi_reduction <add>, %204, %cst_45 [1] : vector<16x48xf32> to vector<16xf32>
    %206 = vector.shape_cast %205 : vector<16xf32> to vector<16x1xf32>
    %cst_46 = arith.constant 4.800000e+01 : f32
    %207 = vector.broadcast %cst_46 : f32 to vector<16x1xf32>
    %208 = arith.divf %206, %207 : vector<16x1xf32>
    %209 = vector.broadcast %201 : vector<16x1xf32> to vector<16x48xf32>
    %210 = arith.subf %195, %209 : vector<16x48xf32>
    %cst_47 = arith.constant 9.99999974E-6 : f32
    %211 = vector.broadcast %cst_47 : f32 to vector<16x1xf32>
    %212 = arith.addf %208, %211 : vector<16x1xf32>
    %213 = math.rsqrt %212 : vector<16x1xf32>
    %214 = vector.broadcast %213 : vector<16x1xf32> to vector<16x48xf32>
    %215 = arith.mulf %210, %214 : vector<16x48xf32>
    %216 = vector.broadcast %196 : vector<1x48xf32> to vector<16x48xf32>
    %217 = arith.mulf %215, %216 : vector<16x48xf32>
    %218 = vector.broadcast %197 : vector<1x48xf32> to vector<16x48xf32>
    %219 = arith.addf %217, %218 : vector<16x48xf32>
    %c0_48 = arith.constant 0 : index
    %c0_49 = arith.constant 0 : index
    %c0_50 = arith.constant 0 : index
    %220 = vector.load %arg7[%c0_48, %c0_49, %c0_50] : memref<2x48x64xf32, #tpu.memory_space<vmem>>, vector<1x48x64xf32>
    %221 = vector.shape_cast %220 : vector<1x48x64xf32> to vector<48x64xf32>
    %cst_51 = arith.constant dense<0.000000e+00> : vector<16x64xf32>
    %222 = tpu.matmul %219, %221, %cst_51 {dimension_numbers = #tpu.dot_dimension_numbers<[1], [0], [0], [1], [0, 0, 1, 1], [], []>} : vector<16x48xf32>, vector<48x64xf32>, vector<16x64xf32> -> vector<16x64xf32>
    %223 = vector.extract_strided_slice %5 {offsets = [5, 0], sizes = [1, 64], strides = [1, 1]} : vector<13x144xf32> to vector<1x64xf32>
    %224 = vector.broadcast %223 : vector<1x64xf32> to vector<16x64xf32>
    %225 = arith.addf %222, %224 : vector<16x64xf32>
    %cst_52 = arith.constant 0.000000e+00 : f32
    %226 = vector.broadcast %cst_52 : f32 to vector<16x64xf32>
    %227 = arith.maximumf %225, %226 : vector<16x64xf32>
    %c0_53 = arith.constant 0 : index
    %c0_54 = arith.constant 0 : index
    %c0_55 = arith.constant 0 : index
    %228 = vector.load %arg8[%c0_53, %c0_54, %c0_55] : memref<2x64x48xf32, #tpu.memory_space<vmem>>, vector<1x64x48xf32>
    %229 = vector.shape_cast %228 : vector<1x64x48xf32> to vector<64x48xf32>
    %cst_56 = arith.constant dense<0.000000e+00> : vector<16x48xf32>
    %230 = tpu.matmul %227, %229, %cst_56 {dimension_numbers = #tpu.dot_dimension_numbers<[1], [0], [0], [1], [0, 0, 1, 1], [], []>} : vector<16x64xf32>, vector<64x48xf32>, vector<16x48xf32> -> vector<16x48xf32>
    %231 = vector.extract_strided_slice %5 {offsets = [6, 0], sizes = [1, 48], strides = [1, 1]} : vector<13x144xf32> to vector<1x48xf32>
    %232 = vector.broadcast %231 : vector<1x48xf32> to vector<16x48xf32>
    %233 = arith.addf %230, %232 : vector<16x48xf32>
    %234 = arith.addf %219, %233 : vector<16x48xf32>
    %235 = vector.extract_strided_slice %5 {offsets = [11, 0], sizes = [1, 48], strides = [1, 1]} : vector<13x144xf32> to vector<1x48xf32>
    %236 = vector.extract_strided_slice %5 {offsets = [12, 0], sizes = [1, 48], strides = [1, 1]} : vector<13x144xf32> to vector<1x48xf32>
    %cst_57 = arith.constant dense<0.000000e+00> : vector<16xf32>
    %237 = vector.multi_reduction <add>, %234, %cst_57 [1] : vector<16x48xf32> to vector<16xf32>
    %238 = vector.shape_cast %237 : vector<16xf32> to vector<16x1xf32>
    %cst_58 = arith.constant 4.800000e+01 : f32
    %239 = vector.broadcast %cst_58 : f32 to vector<16x1xf32>
    %240 = arith.divf %238, %239 : vector<16x1xf32>
    %241 = vector.broadcast %240 : vector<16x1xf32> to vector<16x48xf32>
    %242 = arith.subf %234, %241 : vector<16x48xf32>
    %243 = arith.mulf %242, %242 : vector<16x48xf32>
    %cst_59 = arith.constant dense<0.000000e+00> : vector<16xf32>
    %244 = vector.multi_reduction <add>, %243, %cst_59 [1] : vector<16x48xf32> to vector<16xf32>
    %245 = vector.shape_cast %244 : vector<16xf32> to vector<16x1xf32>
    %cst_60 = arith.constant 4.800000e+01 : f32
    %246 = vector.broadcast %cst_60 : f32 to vector<16x1xf32>
    %247 = arith.divf %245, %246 : vector<16x1xf32>
    %248 = vector.broadcast %240 : vector<16x1xf32> to vector<16x48xf32>
    %249 = arith.subf %234, %248 : vector<16x48xf32>
    %cst_61 = arith.constant 9.99999974E-6 : f32
    %250 = vector.broadcast %cst_61 : f32 to vector<16x1xf32>
    %251 = arith.addf %247, %250 : vector<16x1xf32>
    %252 = math.rsqrt %251 : vector<16x1xf32>
    %253 = vector.broadcast %252 : vector<16x1xf32> to vector<16x48xf32>
    %254 = arith.mulf %249, %253 : vector<16x48xf32>
    %255 = vector.broadcast %235 : vector<1x48xf32> to vector<16x48xf32>
    %256 = arith.mulf %254, %255 : vector<16x48xf32>
    %257 = vector.broadcast %236 : vector<1x48xf32> to vector<16x48xf32>
    %258 = arith.addf %256, %257 : vector<16x48xf32>
    %c1_62 = arith.constant 1 : index
    %c0_63 = arith.constant 0 : index
    %c0_64 = arith.constant 0 : index
    %259 = vector.load %arg9[%c1_62, %c0_63, %c0_64] : memref<2x13x144xf32, #tpu.memory_space<vmem>>, vector<1x13x144xf32>
    %260 = vector.shape_cast %259 : vector<1x13x144xf32> to vector<13x144xf32>
    %c1_65 = arith.constant 1 : index
    %c0_66 = arith.constant 0 : index
    %c0_67 = arith.constant 0 : index
    %261 = vector.load %arg4[%c1_65, %c0_66, %c0_67] : memref<2x48x144xf32, #tpu.memory_space<vmem>>, vector<1x48x144xf32>
    %262 = vector.shape_cast %261 : vector<1x48x144xf32> to vector<48x144xf32>
    %cst_68 = arith.constant dense<0.000000e+00> : vector<16x144xf32>
    %263 = tpu.matmul %258, %262, %cst_68 {dimension_numbers = #tpu.dot_dimension_numbers<[1], [0], [0], [1], [0, 0, 1, 1], [], []>} : vector<16x48xf32>, vector<48x144xf32>, vector<16x144xf32> -> vector<16x144xf32>
    %264 = vector.extract_strided_slice %260 {offsets = [0, 0], sizes = [1, 144], strides = [1, 1]} : vector<13x144xf32> to vector<1x144xf32>
    %265 = vector.broadcast %264 : vector<1x144xf32> to vector<16x144xf32>
    %266 = arith.addf %263, %265 : vector<16x144xf32>
    %267 = vector.extract_strided_slice %266 {offsets = [0, 0], sizes = [16, 8], strides = [1, 1]} : vector<16x144xf32> to vector<16x8xf32>
    %268 = vector.extract_strided_slice %266 {offsets = [0, 8], sizes = [16, 8], strides = [1, 1]} : vector<16x144xf32> to vector<16x8xf32>
    %269 = vector.extract_strided_slice %266 {offsets = [0, 16], sizes = [16, 8], strides = [1, 1]} : vector<16x144xf32> to vector<16x8xf32>
    %270 = vector.extract_strided_slice %266 {offsets = [0, 24], sizes = [16, 8], strides = [1, 1]} : vector<16x144xf32> to vector<16x8xf32>
    %271 = vector.extract_strided_slice %266 {offsets = [0, 32], sizes = [16, 8], strides = [1, 1]} : vector<16x144xf32> to vector<16x8xf32>
    %272 = vector.extract_strided_slice %266 {offsets = [0, 40], sizes = [16, 8], strides = [1, 1]} : vector<16x144xf32> to vector<16x8xf32>
    %273 = vector.shape_cast %267 : vector<16x8xf32> to vector<1x16x8xf32>
    %274 = vector.shape_cast %268 : vector<16x8xf32> to vector<1x16x8xf32>
    %275 = vector.shape_cast %269 : vector<16x8xf32> to vector<1x16x8xf32>
    %276 = vector.shape_cast %270 : vector<16x8xf32> to vector<1x16x8xf32>
    %277 = vector.shape_cast %271 : vector<16x8xf32> to vector<1x16x8xf32>
    %278 = vector.shape_cast %272 : vector<16x8xf32> to vector<1x16x8xf32>
    %279 = tpu.concatenate %273, %274, %275, %276, %277, %278 in 0 : vector<1x16x8xf32>, vector<1x16x8xf32>, vector<1x16x8xf32>, vector<1x16x8xf32>, vector<1x16x8xf32>, vector<1x16x8xf32> -> vector<6x16x8xf32>
    %280 = vector.extract_strided_slice %266 {offsets = [0, 48], sizes = [16, 8], strides = [1, 1]} : vector<16x144xf32> to vector<16x8xf32>
    %281 = vector.extract_strided_slice %266 {offsets = [0, 56], sizes = [16, 8], strides = [1, 1]} : vector<16x144xf32> to vector<16x8xf32>
    %282 = vector.extract_strided_slice %266 {offsets = [0, 64], sizes = [16, 8], strides = [1, 1]} : vector<16x144xf32> to vector<16x8xf32>
    %283 = vector.extract_strided_slice %266 {offsets = [0, 72], sizes = [16, 8], strides = [1, 1]} : vector<16x144xf32> to vector<16x8xf32>
    %284 = vector.extract_strided_slice %266 {offsets = [0, 80], sizes = [16, 8], strides = [1, 1]} : vector<16x144xf32> to vector<16x8xf32>
    %285 = vector.extract_strided_slice %266 {offsets = [0, 88], sizes = [16, 8], strides = [1, 1]} : vector<16x144xf32> to vector<16x8xf32>
    %286 = vector.shape_cast %280 : vector<16x8xf32> to vector<1x16x8xf32>
    %287 = vector.shape_cast %281 : vector<16x8xf32> to vector<1x16x8xf32>
    %288 = vector.shape_cast %282 : vector<16x8xf32> to vector<1x16x8xf32>
    %289 = vector.shape_cast %283 : vector<16x8xf32> to vector<1x16x8xf32>
    %290 = vector.shape_cast %284 : vector<16x8xf32> to vector<1x16x8xf32>
    %291 = vector.shape_cast %285 : vector<16x8xf32> to vector<1x16x8xf32>
    %292 = tpu.concatenate %286, %287, %288, %289, %290, %291 in 0 : vector<1x16x8xf32>, vector<1x16x8xf32>, vector<1x16x8xf32>, vector<1x16x8xf32>, vector<1x16x8xf32>, vector<1x16x8xf32> -> vector<6x16x8xf32>
    %293 = vector.extract_strided_slice %266 {offsets = [0, 96], sizes = [16, 8], strides = [1, 1]} : vector<16x144xf32> to vector<16x8xf32>
    %294 = vector.extract_strided_slice %266 {offsets = [0, 104], sizes = [16, 8], strides = [1, 1]} : vector<16x144xf32> to vector<16x8xf32>
    %295 = vector.extract_strided_slice %266 {offsets = [0, 112], sizes = [16, 8], strides = [1, 1]} : vector<16x144xf32> to vector<16x8xf32>
    %296 = vector.extract_strided_slice %266 {offsets = [0, 120], sizes = [16, 8], strides = [1, 1]} : vector<16x144xf32> to vector<16x8xf32>
    %297 = vector.extract_strided_slice %266 {offsets = [0, 128], sizes = [16, 8], strides = [1, 1]} : vector<16x144xf32> to vector<16x8xf32>
    %298 = vector.extract_strided_slice %266 {offsets = [0, 136], sizes = [16, 8], strides = [1, 1]} : vector<16x144xf32> to vector<16x8xf32>
    %299 = vector.shape_cast %293 : vector<16x8xf32> to vector<1x16x8xf32>
    %300 = vector.shape_cast %294 : vector<16x8xf32> to vector<1x16x8xf32>
    %301 = vector.shape_cast %295 : vector<16x8xf32> to vector<1x16x8xf32>
    %302 = vector.shape_cast %296 : vector<16x8xf32> to vector<1x16x8xf32>
    %303 = vector.shape_cast %297 : vector<16x8xf32> to vector<1x16x8xf32>
    %304 = vector.shape_cast %298 : vector<16x8xf32> to vector<1x16x8xf32>
    %305 = tpu.concatenate %299, %300, %301, %302, %303, %304 in 0 : vector<1x16x8xf32>, vector<1x16x8xf32>, vector<1x16x8xf32>, vector<1x16x8xf32>, vector<1x16x8xf32>, vector<1x16x8xf32> -> vector<6x16x8xf32>
    "tpu.trace_start"() <{level = 10 : i32, message = "hqd,hkd->hqk"}> : () -> ()
    %cst_69 = arith.constant dense<0.000000e+00> : vector<6x16x16xf32>
    %306 = tpu.matmul %279, %292, %cst_69 {dimension_numbers = #tpu.dot_dimension_numbers<[2], [2], [1], [1], [0, 0, 0, 1, 1, 1], [0], [0]>} : vector<6x16x8xf32>, vector<6x16x8xf32>, vector<6x16x16xf32> -> vector<6x16x16xf32>
    "tpu.trace_stop"() : () -> ()
    %307 = vector.shape_cast %2 : vector<16x16xf32> to vector<1x16x16xf32>
    %308 = vector.broadcast %307 : vector<1x16x16xf32> to vector<6x16x16xf32>
    %309 = arith.addf %306, %308 : vector<6x16x16xf32>
    %cst_70 = arith.constant dense<0xFF800000> : vector<6x16xf32>
    %310 = vector.multi_reduction <maximumf>, %309, %cst_70 [2] : vector<6x16x16xf32> to vector<6x16xf32>
    %311 = vector.shape_cast %310 : vector<6x16xf32> to vector<6x16x1xf32>
    %312 = vector.broadcast %311 : vector<6x16x1xf32> to vector<6x16x16xf32>
    %313 = arith.subf %309, %312 : vector<6x16x16xf32>
    %314 = math.exp %313 : vector<6x16x16xf32>
    %cst_71 = arith.constant dense<0.000000e+00> : vector<6x16xf32>
    %315 = vector.multi_reduction <add>, %314, %cst_71 [2] : vector<6x16x16xf32> to vector<6x16xf32>
    %316 = vector.shape_cast %315 : vector<6x16xf32> to vector<6x16x1xf32>
    %317 = tpu.reciprocal %316 {approx = true} : vector<6x16x1xf32> -> vector<6x16x1xf32>
    %318 = vector.broadcast %317 : vector<6x16x1xf32> to vector<6x16x16xf32>
    %319 = arith.mulf %314, %318 : vector<6x16x16xf32>
    "tpu.trace_start"() <{level = 10 : i32, message = "hqk,hkd->hqd"}> : () -> ()
    %cst_72 = arith.constant dense<0.000000e+00> : vector<6x16x8xf32>
    %320 = tpu.matmul %319, %305, %cst_72 {dimension_numbers = #tpu.dot_dimension_numbers<[2], [1], [1], [2], [0, 0, 0, 1, 1, 2], [0], [0]>} : vector<6x16x16xf32>, vector<6x16x8xf32>, vector<6x16x8xf32> -> vector<6x16x8xf32>
    "tpu.trace_stop"() : () -> ()
    %321 = vector.extract_strided_slice %320 {offsets = [0, 0, 0], sizes = [1, 16, 8], strides = [1, 1, 1]} : vector<6x16x8xf32> to vector<1x16x8xf32>
    %322 = vector.shape_cast %321 : vector<1x16x8xf32> to vector<16x8xf32>
    %323 = vector.extract_strided_slice %320 {offsets = [1, 0, 0], sizes = [1, 16, 8], strides = [1, 1, 1]} : vector<6x16x8xf32> to vector<1x16x8xf32>
    %324 = vector.shape_cast %323 : vector<1x16x8xf32> to vector<16x8xf32>
    %325 = vector.extract_strided_slice %320 {offsets = [2, 0, 0], sizes = [1, 16, 8], strides = [1, 1, 1]} : vector<6x16x8xf32> to vector<1x16x8xf32>
    %326 = vector.shape_cast %325 : vector<1x16x8xf32> to vector<16x8xf32>
    %327 = vector.extract_strided_slice %320 {offsets = [3, 0, 0], sizes = [1, 16, 8], strides = [1, 1, 1]} : vector<6x16x8xf32> to vector<1x16x8xf32>
    %328 = vector.shape_cast %327 : vector<1x16x8xf32> to vector<16x8xf32>
    %329 = vector.extract_strided_slice %320 {offsets = [4, 0, 0], sizes = [1, 16, 8], strides = [1, 1, 1]} : vector<6x16x8xf32> to vector<1x16x8xf32>
    %330 = vector.shape_cast %329 : vector<1x16x8xf32> to vector<16x8xf32>
    %331 = vector.extract_strided_slice %320 {offsets = [5, 0, 0], sizes = [1, 16, 8], strides = [1, 1, 1]} : vector<6x16x8xf32> to vector<1x16x8xf32>
    %332 = vector.shape_cast %331 : vector<1x16x8xf32> to vector<16x8xf32>
    %333 = tpu.concatenate %322, %324, %326, %328, %330, %332 in 1 : vector<16x8xf32>, vector<16x8xf32>, vector<16x8xf32>, vector<16x8xf32>, vector<16x8xf32>, vector<16x8xf32> -> vector<16x48xf32>
    %c1_73 = arith.constant 1 : index
    %c0_74 = arith.constant 0 : index
    %c0_75 = arith.constant 0 : index
    %c0_76 = arith.constant 0 : index
    %334 = vector.load %arg5[%c1_73, %c0_74, %c0_75, %c0_76] : memref<2x3x48x48xf32, #tpu.memory_space<vmem>>, vector<1x1x48x48xf32>
    %335 = vector.shape_cast %334 : vector<1x1x48x48xf32> to vector<48x48xf32>
    %cst_77 = arith.constant dense<0.000000e+00> : vector<16x48xf32>
    %336 = tpu.matmul %333, %335, %cst_77 {dimension_numbers = #tpu.dot_dimension_numbers<[1], [0], [0], [1], [0, 0, 1, 1], [], []>} : vector<16x48xf32>, vector<48x48xf32>, vector<16x48xf32> -> vector<16x48xf32>
    %337 = vector.extract_strided_slice %260 {offsets = [1, 0], sizes = [1, 48], strides = [1, 1]} : vector<13x144xf32> to vector<1x48xf32>
    %338 = vector.broadcast %337 : vector<1x48xf32> to vector<16x48xf32>
    %339 = arith.addf %336, %338 : vector<16x48xf32>
    %340 = arith.addf %258, %339 : vector<16x48xf32>
    %341 = vector.extract_strided_slice %260 {offsets = [7, 0], sizes = [1, 48], strides = [1, 1]} : vector<13x144xf32> to vector<1x48xf32>
    %342 = vector.extract_strided_slice %260 {offsets = [8, 0], sizes = [1, 48], strides = [1, 1]} : vector<13x144xf32> to vector<1x48xf32>
    %cst_78 = arith.constant dense<0.000000e+00> : vector<16xf32>
    %343 = vector.multi_reduction <add>, %340, %cst_78 [1] : vector<16x48xf32> to vector<16xf32>
    %344 = vector.shape_cast %343 : vector<16xf32> to vector<16x1xf32>
    %cst_79 = arith.constant 4.800000e+01 : f32
    %345 = vector.broadcast %cst_79 : f32 to vector<16x1xf32>
    %346 = arith.divf %344, %345 : vector<16x1xf32>
    %347 = vector.broadcast %346 : vector<16x1xf32> to vector<16x48xf32>
    %348 = arith.subf %340, %347 : vector<16x48xf32>
    %349 = arith.mulf %348, %348 : vector<16x48xf32>
    %cst_80 = arith.constant dense<0.000000e+00> : vector<16xf32>
    %350 = vector.multi_reduction <add>, %349, %cst_80 [1] : vector<16x48xf32> to vector<16xf32>
    %351 = vector.shape_cast %350 : vector<16xf32> to vector<16x1xf32>
    %cst_81 = arith.constant 4.800000e+01 : f32
    %352 = vector.broadcast %cst_81 : f32 to vector<16x1xf32>
    %353 = arith.divf %351, %352 : vector<16x1xf32>
    %354 = vector.broadcast %346 : vector<16x1xf32> to vector<16x48xf32>
    %355 = arith.subf %340, %354 : vector<16x48xf32>
    %cst_82 = arith.constant 9.99999974E-6 : f32
    %356 = vector.broadcast %cst_82 : f32 to vector<16x1xf32>
    %357 = arith.addf %353, %356 : vector<16x1xf32>
    %358 = math.rsqrt %357 : vector<16x1xf32>
    %359 = vector.broadcast %358 : vector<16x1xf32> to vector<16x48xf32>
    %360 = arith.mulf %355, %359 : vector<16x48xf32>
    %361 = vector.broadcast %341 : vector<1x48xf32> to vector<16x48xf32>
    %362 = arith.mulf %360, %361 : vector<16x48xf32>
    %363 = vector.broadcast %342 : vector<1x48xf32> to vector<16x48xf32>
    %364 = arith.addf %362, %363 : vector<16x48xf32>
    %c1_83 = arith.constant 1 : index
    %c1_84 = arith.constant 1 : index
    %c0_85 = arith.constant 0 : index
    %c0_86 = arith.constant 0 : index
    %365 = vector.load %arg5[%c1_83, %c1_84, %c0_85, %c0_86] : memref<2x3x48x48xf32, #tpu.memory_space<vmem>>, vector<1x1x48x48xf32>
    %366 = vector.shape_cast %365 : vector<1x1x48x48xf32> to vector<48x48xf32>
    %cst_87 = arith.constant dense<0.000000e+00> : vector<16x48xf32>
    %367 = tpu.matmul %364, %366, %cst_87 {dimension_numbers = #tpu.dot_dimension_numbers<[1], [0], [0], [1], [0, 0, 1, 1], [], []>} : vector<16x48xf32>, vector<48x48xf32>, vector<16x48xf32> -> vector<16x48xf32>
    %368 = vector.extract_strided_slice %260 {offsets = [2, 0], sizes = [1, 48], strides = [1, 1]} : vector<13x144xf32> to vector<1x48xf32>
    %369 = vector.broadcast %368 : vector<1x48xf32> to vector<16x48xf32>
    %370 = arith.addf %367, %369 : vector<16x48xf32>
    %c1_88 = arith.constant 1 : index
    %c0_89 = arith.constant 0 : index
    %c0_90 = arith.constant 0 : index
    %371 = vector.load %arg6[%c1_88, %c0_89, %c0_90] : memref<2x48x96xf32, #tpu.memory_space<vmem>>, vector<1x48x96xf32>
    %372 = vector.shape_cast %371 : vector<1x48x96xf32> to vector<48x96xf32>
    %cst_91 = arith.constant dense<0.000000e+00> : vector<32x96xf32>
    %373 = tpu.matmul %1, %372, %cst_91 {dimension_numbers = #tpu.dot_dimension_numbers<[1], [0], [0], [1], [0, 0, 1, 1], [], []>} : vector<32x48xf32>, vector<48x96xf32>, vector<32x96xf32> -> vector<32x96xf32>
    %374 = vector.extract_strided_slice %260 {offsets = [3, 0], sizes = [1, 96], strides = [1, 1]} : vector<13x144xf32> to vector<1x96xf32>
    %375 = vector.broadcast %374 : vector<1x96xf32> to vector<32x96xf32>
    %376 = arith.addf %373, %375 : vector<32x96xf32>
    %377 = vector.extract_strided_slice %370 {offsets = [0, 0], sizes = [16, 8], strides = [1, 1]} : vector<16x48xf32> to vector<16x8xf32>
    %378 = vector.extract_strided_slice %370 {offsets = [0, 8], sizes = [16, 8], strides = [1, 1]} : vector<16x48xf32> to vector<16x8xf32>
    %379 = vector.extract_strided_slice %370 {offsets = [0, 16], sizes = [16, 8], strides = [1, 1]} : vector<16x48xf32> to vector<16x8xf32>
    %380 = vector.extract_strided_slice %370 {offsets = [0, 24], sizes = [16, 8], strides = [1, 1]} : vector<16x48xf32> to vector<16x8xf32>
    %381 = vector.extract_strided_slice %370 {offsets = [0, 32], sizes = [16, 8], strides = [1, 1]} : vector<16x48xf32> to vector<16x8xf32>
    %382 = vector.extract_strided_slice %370 {offsets = [0, 40], sizes = [16, 8], strides = [1, 1]} : vector<16x48xf32> to vector<16x8xf32>
    %383 = vector.shape_cast %377 : vector<16x8xf32> to vector<1x16x8xf32>
    %384 = vector.shape_cast %378 : vector<16x8xf32> to vector<1x16x8xf32>
    %385 = vector.shape_cast %379 : vector<16x8xf32> to vector<1x16x8xf32>
    %386 = vector.shape_cast %380 : vector<16x8xf32> to vector<1x16x8xf32>
    %387 = vector.shape_cast %381 : vector<16x8xf32> to vector<1x16x8xf32>
    %388 = vector.shape_cast %382 : vector<16x8xf32> to vector<1x16x8xf32>
    %389 = tpu.concatenate %383, %384, %385, %386, %387, %388 in 0 : vector<1x16x8xf32>, vector<1x16x8xf32>, vector<1x16x8xf32>, vector<1x16x8xf32>, vector<1x16x8xf32>, vector<1x16x8xf32> -> vector<6x16x8xf32>
    %390 = vector.extract_strided_slice %376 {offsets = [0, 0], sizes = [32, 8], strides = [1, 1]} : vector<32x96xf32> to vector<32x8xf32>
    %391 = vector.extract_strided_slice %376 {offsets = [0, 8], sizes = [32, 8], strides = [1, 1]} : vector<32x96xf32> to vector<32x8xf32>
    %392 = vector.extract_strided_slice %376 {offsets = [0, 16], sizes = [32, 8], strides = [1, 1]} : vector<32x96xf32> to vector<32x8xf32>
    %393 = vector.extract_strided_slice %376 {offsets = [0, 24], sizes = [32, 8], strides = [1, 1]} : vector<32x96xf32> to vector<32x8xf32>
    %394 = vector.extract_strided_slice %376 {offsets = [0, 32], sizes = [32, 8], strides = [1, 1]} : vector<32x96xf32> to vector<32x8xf32>
    %395 = vector.extract_strided_slice %376 {offsets = [0, 40], sizes = [32, 8], strides = [1, 1]} : vector<32x96xf32> to vector<32x8xf32>
    %396 = vector.shape_cast %390 : vector<32x8xf32> to vector<1x32x8xf32>
    %397 = vector.shape_cast %391 : vector<32x8xf32> to vector<1x32x8xf32>
    %398 = vector.shape_cast %392 : vector<32x8xf32> to vector<1x32x8xf32>
    %399 = vector.shape_cast %393 : vector<32x8xf32> to vector<1x32x8xf32>
    %400 = vector.shape_cast %394 : vector<32x8xf32> to vector<1x32x8xf32>
    %401 = vector.shape_cast %395 : vector<32x8xf32> to vector<1x32x8xf32>
    %402 = tpu.concatenate %396, %397, %398, %399, %400, %401 in 0 : vector<1x32x8xf32>, vector<1x32x8xf32>, vector<1x32x8xf32>, vector<1x32x8xf32>, vector<1x32x8xf32>, vector<1x32x8xf32> -> vector<6x32x8xf32>
    %403 = vector.extract_strided_slice %376 {offsets = [0, 48], sizes = [32, 8], strides = [1, 1]} : vector<32x96xf32> to vector<32x8xf32>
    %404 = vector.extract_strided_slice %376 {offsets = [0, 56], sizes = [32, 8], strides = [1, 1]} : vector<32x96xf32> to vector<32x8xf32>
    %405 = vector.extract_strided_slice %376 {offsets = [0, 64], sizes = [32, 8], strides = [1, 1]} : vector<32x96xf32> to vector<32x8xf32>
    %406 = vector.extract_strided_slice %376 {offsets = [0, 72], sizes = [32, 8], strides = [1, 1]} : vector<32x96xf32> to vector<32x8xf32>
    %407 = vector.extract_strided_slice %376 {offsets = [0, 80], sizes = [32, 8], strides = [1, 1]} : vector<32x96xf32> to vector<32x8xf32>
    %408 = vector.extract_strided_slice %376 {offsets = [0, 88], sizes = [32, 8], strides = [1, 1]} : vector<32x96xf32> to vector<32x8xf32>
    %409 = vector.shape_cast %403 : vector<32x8xf32> to vector<1x32x8xf32>
    %410 = vector.shape_cast %404 : vector<32x8xf32> to vector<1x32x8xf32>
    %411 = vector.shape_cast %405 : vector<32x8xf32> to vector<1x32x8xf32>
    %412 = vector.shape_cast %406 : vector<32x8xf32> to vector<1x32x8xf32>
    %413 = vector.shape_cast %407 : vector<32x8xf32> to vector<1x32x8xf32>
    %414 = vector.shape_cast %408 : vector<32x8xf32> to vector<1x32x8xf32>
    %415 = tpu.concatenate %409, %410, %411, %412, %413, %414 in 0 : vector<1x32x8xf32>, vector<1x32x8xf32>, vector<1x32x8xf32>, vector<1x32x8xf32>, vector<1x32x8xf32>, vector<1x32x8xf32> -> vector<6x32x8xf32>
    "tpu.trace_start"() <{level = 10 : i32, message = "hqd,hkd->hqk"}> : () -> ()
    %cst_92 = arith.constant dense<0.000000e+00> : vector<6x16x32xf32>
    %416 = tpu.matmul %389, %402, %cst_92 {dimension_numbers = #tpu.dot_dimension_numbers<[2], [2], [1], [1], [0, 0, 0, 1, 1, 1], [0], [0]>} : vector<6x16x8xf32>, vector<6x32x8xf32>, vector<6x16x32xf32> -> vector<6x16x32xf32>
    "tpu.trace_stop"() : () -> ()
    %417 = vector.shape_cast %3 : vector<16x32xf32> to vector<1x16x32xf32>
    %418 = vector.broadcast %417 : vector<1x16x32xf32> to vector<6x16x32xf32>
    %419 = arith.addf %416, %418 : vector<6x16x32xf32>
    %cst_93 = arith.constant dense<0xFF800000> : vector<6x16xf32>
    %420 = vector.multi_reduction <maximumf>, %419, %cst_93 [2] : vector<6x16x32xf32> to vector<6x16xf32>
    %421 = vector.shape_cast %420 : vector<6x16xf32> to vector<6x16x1xf32>
    %422 = vector.broadcast %421 : vector<6x16x1xf32> to vector<6x16x32xf32>
    %423 = arith.subf %419, %422 : vector<6x16x32xf32>
    %424 = math.exp %423 : vector<6x16x32xf32>
    %cst_94 = arith.constant dense<0.000000e+00> : vector<6x16xf32>
    %425 = vector.multi_reduction <add>, %424, %cst_94 [2] : vector<6x16x32xf32> to vector<6x16xf32>
    %426 = vector.shape_cast %425 : vector<6x16xf32> to vector<6x16x1xf32>
    %427 = tpu.reciprocal %426 {approx = true} : vector<6x16x1xf32> -> vector<6x16x1xf32>
    %428 = vector.broadcast %427 : vector<6x16x1xf32> to vector<6x16x32xf32>
    %429 = arith.mulf %424, %428 : vector<6x16x32xf32>
    "tpu.trace_start"() <{level = 10 : i32, message = "hqk,hkd->hqd"}> : () -> ()
    %cst_95 = arith.constant dense<0.000000e+00> : vector<6x16x8xf32>
    %430 = tpu.matmul %429, %415, %cst_95 {dimension_numbers = #tpu.dot_dimension_numbers<[2], [1], [1], [2], [0, 0, 0, 1, 1, 2], [0], [0]>} : vector<6x16x32xf32>, vector<6x32x8xf32>, vector<6x16x8xf32> -> vector<6x16x8xf32>
    "tpu.trace_stop"() : () -> ()
    %431 = vector.extract_strided_slice %430 {offsets = [0, 0, 0], sizes = [1, 16, 8], strides = [1, 1, 1]} : vector<6x16x8xf32> to vector<1x16x8xf32>
    %432 = vector.shape_cast %431 : vector<1x16x8xf32> to vector<16x8xf32>
    %433 = vector.extract_strided_slice %430 {offsets = [1, 0, 0], sizes = [1, 16, 8], strides = [1, 1, 1]} : vector<6x16x8xf32> to vector<1x16x8xf32>
    %434 = vector.shape_cast %433 : vector<1x16x8xf32> to vector<16x8xf32>
    %435 = vector.extract_strided_slice %430 {offsets = [2, 0, 0], sizes = [1, 16, 8], strides = [1, 1, 1]} : vector<6x16x8xf32> to vector<1x16x8xf32>
    %436 = vector.shape_cast %435 : vector<1x16x8xf32> to vector<16x8xf32>
    %437 = vector.extract_strided_slice %430 {offsets = [3, 0, 0], sizes = [1, 16, 8], strides = [1, 1, 1]} : vector<6x16x8xf32> to vector<1x16x8xf32>
    %438 = vector.shape_cast %437 : vector<1x16x8xf32> to vector<16x8xf32>
    %439 = vector.extract_strided_slice %430 {offsets = [4, 0, 0], sizes = [1, 16, 8], strides = [1, 1, 1]} : vector<6x16x8xf32> to vector<1x16x8xf32>
    %440 = vector.shape_cast %439 : vector<1x16x8xf32> to vector<16x8xf32>
    %441 = vector.extract_strided_slice %430 {offsets = [5, 0, 0], sizes = [1, 16, 8], strides = [1, 1, 1]} : vector<6x16x8xf32> to vector<1x16x8xf32>
    %442 = vector.shape_cast %441 : vector<1x16x8xf32> to vector<16x8xf32>
    %443 = tpu.concatenate %432, %434, %436, %438, %440, %442 in 1 : vector<16x8xf32>, vector<16x8xf32>, vector<16x8xf32>, vector<16x8xf32>, vector<16x8xf32>, vector<16x8xf32> -> vector<16x48xf32>
    %c1_96 = arith.constant 1 : index
    %c2_97 = arith.constant 2 : index
    %c0_98 = arith.constant 0 : index
    %c0_99 = arith.constant 0 : index
    %444 = vector.load %arg5[%c1_96, %c2_97, %c0_98, %c0_99] : memref<2x3x48x48xf32, #tpu.memory_space<vmem>>, vector<1x1x48x48xf32>
    %445 = vector.shape_cast %444 : vector<1x1x48x48xf32> to vector<48x48xf32>
    %cst_100 = arith.constant dense<0.000000e+00> : vector<16x48xf32>
    %446 = tpu.matmul %443, %445, %cst_100 {dimension_numbers = #tpu.dot_dimension_numbers<[1], [0], [0], [1], [0, 0, 1, 1], [], []>} : vector<16x48xf32>, vector<48x48xf32>, vector<16x48xf32> -> vector<16x48xf32>
    %447 = vector.extract_strided_slice %260 {offsets = [4, 0], sizes = [1, 48], strides = [1, 1]} : vector<13x144xf32> to vector<1x48xf32>
    %448 = vector.broadcast %447 : vector<1x48xf32> to vector<16x48xf32>
    %449 = arith.addf %446, %448 : vector<16x48xf32>
    %450 = arith.addf %364, %449 : vector<16x48xf32>
    %451 = vector.extract_strided_slice %260 {offsets = [9, 0], sizes = [1, 48], strides = [1, 1]} : vector<13x144xf32> to vector<1x48xf32>
    %452 = vector.extract_strided_slice %260 {offsets = [10, 0], sizes = [1, 48], strides = [1, 1]} : vector<13x144xf32> to vector<1x48xf32>
    %cst_101 = arith.constant dense<0.000000e+00> : vector<16xf32>
    %453 = vector.multi_reduction <add>, %450, %cst_101 [1] : vector<16x48xf32> to vector<16xf32>
    %454 = vector.shape_cast %453 : vector<16xf32> to vector<16x1xf32>
    %cst_102 = arith.constant 4.800000e+01 : f32
    %455 = vector.broadcast %cst_102 : f32 to vector<16x1xf32>
    %456 = arith.divf %454, %455 : vector<16x1xf32>
    %457 = vector.broadcast %456 : vector<16x1xf32> to vector<16x48xf32>
    %458 = arith.subf %450, %457 : vector<16x48xf32>
    %459 = arith.mulf %458, %458 : vector<16x48xf32>
    %cst_103 = arith.constant dense<0.000000e+00> : vector<16xf32>
    %460 = vector.multi_reduction <add>, %459, %cst_103 [1] : vector<16x48xf32> to vector<16xf32>
    %461 = vector.shape_cast %460 : vector<16xf32> to vector<16x1xf32>
    %cst_104 = arith.constant 4.800000e+01 : f32
    %462 = vector.broadcast %cst_104 : f32 to vector<16x1xf32>
    %463 = arith.divf %461, %462 : vector<16x1xf32>
    %464 = vector.broadcast %456 : vector<16x1xf32> to vector<16x48xf32>
    %465 = arith.subf %450, %464 : vector<16x48xf32>
    %cst_105 = arith.constant 9.99999974E-6 : f32
    %466 = vector.broadcast %cst_105 : f32 to vector<16x1xf32>
    %467 = arith.addf %463, %466 : vector<16x1xf32>
    %468 = math.rsqrt %467 : vector<16x1xf32>
    %469 = vector.broadcast %468 : vector<16x1xf32> to vector<16x48xf32>
    %470 = arith.mulf %465, %469 : vector<16x48xf32>
    %471 = vector.broadcast %451 : vector<1x48xf32> to vector<16x48xf32>
    %472 = arith.mulf %470, %471 : vector<16x48xf32>
    %473 = vector.broadcast %452 : vector<1x48xf32> to vector<16x48xf32>
    %474 = arith.addf %472, %473 : vector<16x48xf32>
    %c1_106 = arith.constant 1 : index
    %c0_107 = arith.constant 0 : index
    %c0_108 = arith.constant 0 : index
    %475 = vector.load %arg7[%c1_106, %c0_107, %c0_108] : memref<2x48x64xf32, #tpu.memory_space<vmem>>, vector<1x48x64xf32>
    %476 = vector.shape_cast %475 : vector<1x48x64xf32> to vector<48x64xf32>
    %cst_109 = arith.constant dense<0.000000e+00> : vector<16x64xf32>
    %477 = tpu.matmul %474, %476, %cst_109 {dimension_numbers = #tpu.dot_dimension_numbers<[1], [0], [0], [1], [0, 0, 1, 1], [], []>} : vector<16x48xf32>, vector<48x64xf32>, vector<16x64xf32> -> vector<16x64xf32>
    %478 = vector.extract_strided_slice %260 {offsets = [5, 0], sizes = [1, 64], strides = [1, 1]} : vector<13x144xf32> to vector<1x64xf32>
    %479 = vector.broadcast %478 : vector<1x64xf32> to vector<16x64xf32>
    %480 = arith.addf %477, %479 : vector<16x64xf32>
    %cst_110 = arith.constant 0.000000e+00 : f32
    %481 = vector.broadcast %cst_110 : f32 to vector<16x64xf32>
    %482 = arith.maximumf %480, %481 : vector<16x64xf32>
    %c1_111 = arith.constant 1 : index
    %c0_112 = arith.constant 0 : index
    %c0_113 = arith.constant 0 : index
    %483 = vector.load %arg8[%c1_111, %c0_112, %c0_113] : memref<2x64x48xf32, #tpu.memory_space<vmem>>, vector<1x64x48xf32>
    %484 = vector.shape_cast %483 : vector<1x64x48xf32> to vector<64x48xf32>
    %cst_114 = arith.constant dense<0.000000e+00> : vector<16x48xf32>
    %485 = tpu.matmul %482, %484, %cst_114 {dimension_numbers = #tpu.dot_dimension_numbers<[1], [0], [0], [1], [0, 0, 1, 1], [], []>} : vector<16x64xf32>, vector<64x48xf32>, vector<16x48xf32> -> vector<16x48xf32>
    %486 = vector.extract_strided_slice %260 {offsets = [6, 0], sizes = [1, 48], strides = [1, 1]} : vector<13x144xf32> to vector<1x48xf32>
    %487 = vector.broadcast %486 : vector<1x48xf32> to vector<16x48xf32>
    %488 = arith.addf %485, %487 : vector<16x48xf32>
    %489 = arith.addf %474, %488 : vector<16x48xf32>
    %490 = vector.extract_strided_slice %260 {offsets = [11, 0], sizes = [1, 48], strides = [1, 1]} : vector<13x144xf32> to vector<1x48xf32>
    %491 = vector.extract_strided_slice %260 {offsets = [12, 0], sizes = [1, 48], strides = [1, 1]} : vector<13x144xf32> to vector<1x48xf32>
    %cst_115 = arith.constant dense<0.000000e+00> : vector<16xf32>
    %492 = vector.multi_reduction <add>, %489, %cst_115 [1] : vector<16x48xf32> to vector<16xf32>
    %493 = vector.shape_cast %492 : vector<16xf32> to vector<16x1xf32>
    %cst_116 = arith.constant 4.800000e+01 : f32
    %494 = vector.broadcast %cst_116 : f32 to vector<16x1xf32>
    %495 = arith.divf %493, %494 : vector<16x1xf32>
    %496 = vector.broadcast %495 : vector<16x1xf32> to vector<16x48xf32>
    %497 = arith.subf %489, %496 : vector<16x48xf32>
    %498 = arith.mulf %497, %497 : vector<16x48xf32>
    %cst_117 = arith.constant dense<0.000000e+00> : vector<16xf32>
    %499 = vector.multi_reduction <add>, %498, %cst_117 [1] : vector<16x48xf32> to vector<16xf32>
    %500 = vector.shape_cast %499 : vector<16xf32> to vector<16x1xf32>
    %cst_118 = arith.constant 4.800000e+01 : f32
    %501 = vector.broadcast %cst_118 : f32 to vector<16x1xf32>
    %502 = arith.divf %500, %501 : vector<16x1xf32>
    %503 = vector.broadcast %495 : vector<16x1xf32> to vector<16x48xf32>
    %504 = arith.subf %489, %503 : vector<16x48xf32>
    %cst_119 = arith.constant 9.99999974E-6 : f32
    %505 = vector.broadcast %cst_119 : f32 to vector<16x1xf32>
    %506 = arith.addf %502, %505 : vector<16x1xf32>
    %507 = math.rsqrt %506 : vector<16x1xf32>
    %508 = vector.broadcast %507 : vector<16x1xf32> to vector<16x48xf32>
    %509 = arith.mulf %504, %508 : vector<16x48xf32>
    %510 = vector.broadcast %490 : vector<1x48xf32> to vector<16x48xf32>
    %511 = arith.mulf %509, %510 : vector<16x48xf32>
    %512 = vector.broadcast %491 : vector<1x48xf32> to vector<16x48xf32>
    %513 = arith.addf %511, %512 : vector<16x48xf32>
    %c0_120 = arith.constant 0 : index
    %c0_121 = arith.constant 0 : index
    %514 = vector.load %arg10[%c0_120, %c0_121] : memref<16x48xf32, #tpu.memory_space<vmem>>, vector<16x48xf32>
    tpu.vector_store %arg10[%c0_120, %c0_121], %513 {strides = array<i32>} : memref<16x48xf32, #tpu.memory_space<vmem>>, vector<16x48xf32>,
    return
  }
}

</mosaic_0001>

<llo_original>
// kernel: tpu_custom_call.1
$region0: #{tpu_custom_call.1}
  #allocation0 [shape = 'u32[]', space=smem, size = 0x4, offset = 0x4, fixed_abs, tag = 'smem constant byte address 0x4 - core index']
  #allocation1 [shape = 'u32[72,128]{1,0:T(1,128)}', space=vmem, size = 0x9000, scoped, tag = 'internal scratch']
  %s0 = inlined_call_operand.vmem [shape: f32[16,48], index: 0, kind: input, shape index: {}]
  %s1 = inlined_call_operand.vmem [shape: f32[32,48], index: 1, kind: input, shape index: {}]
  %s2 = inlined_call_operand.hbm [shape: f32[16,16], index: 2, kind: input, shape index: {}]
  %s3 = inlined_call_operand.hbm [shape: f32[16,32], index: 3, kind: input, shape index: {}]
  %s4 = inlined_call_operand.vmem [shape: f32[2,48,144], index: 4, kind: input, shape index: {}]
  %s5 = inlined_call_operand.hbm [shape: f32[2,3,48,48], index: 5, kind: input, shape index: {}]
  %s6 = inlined_call_operand.hbm [shape: f32[2,48,96], index: 6, kind: input, shape index: {}]
  %s7 = inlined_call_operand.hbm [shape: f32[2,48,64], index: 7, kind: input, shape index: {}]
  %s8 = inlined_call_operand.vmem [shape: f32[2,64,48], index: 8, kind: input, shape index: {}]
  %s9 = inlined_call_operand.vmem [shape: f32[2,13,144], index: 9, kind: input, shape index: {}]
  %s10 = inlined_call_operand.hbm [shape: f32[16,48], index: 10, kind: output, shape index: {}]
  %s11 = sld [smem:[#allocation0]]
  $region70: #{tpu_custom_call.1} parent=0
    _
  %s13 = ssub.s32 1, %s11
  %s14 = scalar_select 0, %s13, %s11
  $region1: #{tpu_custom_call.1} parent=0
    #allocation2 [shape = 'u8[8192]{0}', space=vmem, size = 0x2000, scoped, tag = 'input window, operand 2, single buffered']
    #allocation3 [shape = 's32[1]{0}', space=sflag, size = 0x4, scoped, tag = 'scoped memory for tpu_custom_call.1']
    #allocation4 [shape = 's32[1]{0}', space=sflag, size = 0x4, scoped, tag = 'scoped memory for tpu_custom_call.1']
    #allocation5 [shape = 'u8[8192]{0}', space=vmem, size = 0x2000, scoped, tag = 'input window, operand 3, single buffered']
    #allocation6 [shape = 's32[1]{0}', space=sflag, size = 0x4, scoped, tag = 'scoped memory for tpu_custom_call.1']
    #allocation7 [shape = 'u8[147456]{0}', space=vmem, size = 0x24000, scoped, tag = 'input window, operand 5, single buffered']
    #allocation8 [shape = 'u8[49152]{0}', space=vmem, size = 0xc000, scoped, tag = 'input window, operand 6, single buffered']
    #allocation9 [shape = 's32[1]{0}', space=sflag, size = 0x4, scoped, tag = 'scoped memory for tpu_custom_call.1']
    #allocation10 [shape = 'u8[49152]{0}', space=vmem, size = 0xc000, scoped, tag = 'input window, operand 7, single buffered']
    #allocation11 [shape = 'u8[8192]{0}', space=vmem, size = 0x2000, scoped, tag = 'output window, operand 0, single buffered']
    %15 = vsyncpa [#allocation3], 0
    %16 = vsyncpa [#allocation6], 0
    %17 = vsyncpa [#allocation9], 0
    %18 = vsyncpa [#allocation4], 0
    // Predicated region
    $region2: #{tpu_custom_call.1} parent=1 // pred_check
      _
    $region3: #{tpu_custom_call.1} parent=1 // pred_check_branch
      %20 = sbr.rel (0) target = $region5
    $region4: #{tpu_custom_call.1} parent=1 // pred_region
      _
    $region5: #{tpu_custom_call.1} parent=1 // pred_fallthru
      _
    // Predicated region
    $region6: #{tpu_custom_call.1} parent=1 // pred_check
      _
    $region7: #{tpu_custom_call.1} parent=1 // pred_check_branch
      %22 = sbr.rel (0) target = $region9
    $region8: #{tpu_custom_call.1} parent=1 // pred_region
      _
    $region9: #{tpu_custom_call.1} parent=1 // pred_fallthru
      _
    // Predicated region
    $region10: #{tpu_custom_call.1} parent=1 // pred_check
      _
    $region11: #{tpu_custom_call.1} parent=1 // pred_check_branch
      %24 = sbr.rel (0) target = $region13
    $region12: #{tpu_custom_call.1} parent=1 // pred_region
      %26 = vsyncadd [#allocation3], 0
      %s27 = sshll.u32 %s2, 4
      %s28 = int_to_ptr.hbm [resolvable:$true] %s27
      %s29 = sshll.u32 [#allocation2], 4
      %s30 = int_to_ptr.vmem [resolvable:$true] %s29
      %35 = dma.hbm_to_vmem [thread:$0]  %s28, 256, %s30, [#allocation3], 128, 128, 8
    $region13: #{tpu_custom_call.1} parent=1 // pred_fallthru
      _
    // Predicated region
    $region14: #{tpu_custom_call.1} parent=1 // pred_check
      _
    $region15: #{tpu_custom_call.1} parent=1 // pred_check_branch
      %37 = sbr.rel (0) target = $region17
    $region16: #{tpu_custom_call.1} parent=1 // pred_region
      %39 = vsyncadd [#allocation6], 0
      %s40 = sshll.u32 %s3, 4
      %s41 = int_to_ptr.hbm [resolvable:$true] %s40
      %s42 = sshll.u32 [#allocation5], 4
      %s43 = int_to_ptr.vmem [resolvable:$true] %s42
      %48 = dma.hbm_to_vmem [thread:$0]  %s41, 256, %s43, [#allocation6], 128, 128, 8
    $region17: #{tpu_custom_call.1} parent=1 // pred_fallthru
      _
    // Predicated region
    $region18: #{tpu_custom_call.1} parent=1 // pred_check
      _
    $region19: #{tpu_custom_call.1} parent=1 // pred_check_branch
      %50 = sbr.rel (0) target = $region21
    $region20: #{tpu_custom_call.1} parent=1 // pred_region
      _
    $region21: #{tpu_custom_call.1} parent=1 // pred_fallthru
      _
    // Predicated region
    $region22: #{tpu_custom_call.1} parent=1 // pred_check
      _
    $region23: #{tpu_custom_call.1} parent=1 // pred_check_branch
      %52 = sbr.rel (0) target = $region25
    $region24: #{tpu_custom_call.1} parent=1 // pred_region
      %54 = vsyncadd [#allocation6], 0
      %s55 = sshll.u32 %s5, 4
      %s56 = int_to_ptr.hbm [resolvable:$true] %s55
      %s57 = sshll.u32 [#allocation7], 4
      %s58 = int_to_ptr.vmem [resolvable:$true] %s57
      %63 = dma.hbm_to_vmem [thread:$0]  %s56, 4608, %s58, [#allocation6], 128, 128, 8
    $region25: #{tpu_custom_call.1} parent=1 // pred_fallthru
      _
    // Predicated region
    $region26: #{tpu_custom_call.1} parent=1 // pred_check
      _
    $region27: #{tpu_custom_call.1} parent=1 // pred_check_branch
      %65 = sbr.rel (0) target = $region29
    $region28: #{tpu_custom_call.1} parent=1 // pred_region
      %67 = vsyncadd [#allocation9], 0
      %s68 = sshll.u32 %s6, 4
      %s69 = int_to_ptr.hbm [resolvable:$true] %s68
      %s70 = sshll.u32 [#allocation8], 4
      %s71 = int_to_ptr.vmem [resolvable:$true] %s70
      %76 = dma.hbm_to_vmem [thread:$0]  %s69, 1536, %s71, [#allocation9], 128, 128, 8
    $region29: #{tpu_custom_call.1} parent=1 // pred_fallthru
      _
    // Predicated region
    $region30: #{tpu_custom_call.1} parent=1 // pred_check
      _
    $region31: #{tpu_custom_call.1} parent=1 // pred_check_branch
      %78 = sbr.rel (0) target = $region33
    $region32: #{tpu_custom_call.1} parent=1 // pred_region
      %80 = vsyncadd [#allocation9], 0
      %s81 = sshll.u32 %s7, 4
      %s82 = int_to_ptr.hbm [resolvable:$true] %s81
      %s83 = sshll.u32 [#allocation10], 4
      %s84 = int_to_ptr.vmem [resolvable:$true] %s83
      %89 = dma.hbm_to_vmem [thread:$0]  %s82, 1536, %s84, [#allocation9], 128, 128, 8
    $region33: #{tpu_custom_call.1} parent=1 // pred_fallthru
      _
    // Predicated region
    $region34: #{tpu_custom_call.1} parent=1 // pred_check
      _
    $region35: #{tpu_custom_call.1} parent=1 // pred_check_branch
      %91 = sbr.rel (0) target = $region37
    $region36: #{tpu_custom_call.1} parent=1 // pred_region
      _
    $region37: #{tpu_custom_call.1} parent=1 // pred_fallthru
      _
    // Predicated region
    $region38: #{tpu_custom_call.1} parent=1 // pred_check
      _
    $region39: #{tpu_custom_call.1} parent=1 // pred_check_branch
      %93 = sbr.rel (0) target = $region41
    $region40: #{tpu_custom_call.1} parent=1 // pred_region
      _
    $region41: #{tpu_custom_call.1} parent=1 // pred_fallthru
      _
    // Predicated region
    $region42: #{tpu_custom_call.1} parent=1 // pred_check
      _
    $region43: #{tpu_custom_call.1} parent=1 // pred_check_branch
      %95 = sbr.rel (0) target = $region45
    $region44: #{tpu_custom_call.1} parent=1 // pred_region
      %97 = dma.done [#allocation3], 256
    $region45: #{tpu_custom_call.1} parent=1 // pred_fallthru
      _
    // Predicated region
    $region46: #{tpu_custom_call.1} parent=1 // pred_check
      _
    $region47: #{tpu_custom_call.1} parent=1 // pred_check_branch
      %99 = sbr.rel (0) target = $region49
    $region48: #{tpu_custom_call.1} parent=1 // pred_region
      %101 = dma.done [#allocation6], 256
    $region49: #{tpu_custom_call.1} parent=1 // pred_fallthru
      _
    // Predicated region
    $region50: #{tpu_custom_call.1} parent=1 // pred_check
      _
    $region51: #{tpu_custom_call.1} parent=1 // pred_check_branch
      %103 = sbr.rel (0) target = $region53
    $region52: #{tpu_custom_call.1} parent=1 // pred_region
      %105 = dma.done [#allocation6], 4608
    $region53: #{tpu_custom_call.1} parent=1 // pred_fallthru
      _
    // Predicated region
    $region54: #{tpu_custom_call.1} parent=1 // pred_check
      _
    $region55: #{tpu_custom_call.1} parent=1 // pred_check_branch
      %107 = sbr.rel (0) target = $region57
    $region56: #{tpu_custom_call.1} parent=1 // pred_region
      %109 = dma.done [#allocation9], 1536
    $region57: #{tpu_custom_call.1} parent=1 // pred_fallthru
      _
    // Predicated region
    $region58: #{tpu_custom_call.1} parent=1 // pred_check
      _
    $region59: #{tpu_custom_call.1} parent=1 // pred_check_branch
      %111 = sbr.rel (0) target = $region61
    $region60: #{tpu_custom_call.1} parent=1 // pred_region
      %113 = dma.done [#allocation9], 1536
    $region61: #{tpu_custom_call.1} parent=1 // pred_fallthru
      _
    %v114 = vld [vmem:[%s0] sm:$0xff]
    %v115 = vld [vmem:[%s0 + $0x8] sm:$0xff]
    %v116 = vld [vmem:[%s1] sm:$0xff]
    %v117 = vld [vmem:[%s1 + $0x8] sm:$0xff]
    %v118 = vld [vmem:[%s1 + $0x10] sm:$0xff]
    %v119 = vld [vmem:[%s1 + $0x18] sm:$0xff]
    %v120 = vld [vmem:[#allocation2] sm:$0xff]
    %v121 = vld [vmem:[#allocation2 + $0x8] sm:$0xff]
    %v122 = vld [vmem:[#allocation5] sm:$0xff]
    %v123 = vld [vmem:[#allocation5 + $0x8] sm:$0xff]
    %v124 = vld [vmem:[%s9] sm:$0xff]
    %v125 = vld [vmem:[%s9 + $0x8] sm:$0xff]
    %v126 = vld [vmem:[%s9 + $0x10] sm:$0x1f]
    %v127 = vld [vmem:[%s4] sm:$0xff]
    %v128 = vld [vmem:[%s4 + $0x8] sm:$0xff]
    %v129 = vld [vmem:[%s4 + $0x10] sm:$0xff]
    %v130 = vld [vmem:[%s4 + $0x18] sm:$0xff]
    %v131 = vld [vmem:[%s4 + $0x20] sm:$0xff]
    %v132 = vld [vmem:[%s4 + $0x28] sm:$0xff]
    %v133 = vld [vmem:[%s4 + $0x30] sm:$0xff]
    %v134 = vld [vmem:[%s4 + $0x38] sm:$0xff]
    %v135 = vld [vmem:[%s4 + $0x40] sm:$0xff]
    %v136 = vld [vmem:[%s4 + $0x48] sm:$0xff]
    %v137 = vld [vmem:[%s4 + $0x50] sm:$0xff]
    %v138 = vld [vmem:[%s4 + $0x58] sm:$0xff]
    %v139 = vperm.slane %v124, 0
    %v140 = vperm.slane %v125, 0
    %vm141 = vcmask 392192
    %v143 = vsel %vm141, %v114, 0
    %v146 = vsel %vm141, %v115, 0
    %148 = vmatpush.msra.mxu0 0.0
    %149 = vmatpush.msra.mxu0 0.0
    %150 = vmatpush.msra.mxu0 0.0
    %151 = vmatpush.msra.mxu0 0.0
    %152 = vmatpush.msra.mxu0 0.0
    %153 = vmatpush.msra.mxu0 0.0
    %154 = vmatpush.msra.mxu0 0.0
    %155 = vmatpush.msra.mxu0 0.0
    %156 = vmatpush.msra.mxu0 0.0
    %157 = vmatpush.msra.mxu0 0.0
    %158 = vmatpush.msra.mxu0 %v137
    %159 = vmatpush.msra.mxu0 %v135
    %160 = vmatpush.msra.mxu0 %v133
    %161 = vmatpush.msra.mxu0 %v131
    %162 = vmatpush.msra.mxu0 %v129
    %163 = vmatpush.msra.mxu0 %v127
    %164 = vmatmul.f32.gmra.mxu0 %v143
    %v165 = vpop.f32.mrf.mxu0
    %v166 = vadd.f32 %v139, %v165
    %167 = vmatmul.f32.gmra.mxu0 %v146
    %v168 = vpop.f32.mrf.mxu0
    %v169 = vadd.f32 %v139, %v168
    %170 = vdwg.mxu0
    %171 = vmatpush.msra.mxu0 0.0
    %172 = vmatpush.msra.mxu0 0.0
    %173 = vmatpush.msra.mxu0 0.0
    %174 = vmatpush.msra.mxu0 0.0
    %175 = vmatpush.msra.mxu0 0.0
    %176 = vmatpush.msra.mxu0 0.0
    %177 = vmatpush.msra.mxu0 0.0
    %178 = vmatpush.msra.mxu0 0.0
    %179 = vmatpush.msra.mxu0 0.0
    %180 = vmatpush.msra.mxu0 0.0
    %181 = vmatpush.msra.mxu0 %v138
    %182 = vmatpush.msra.mxu0 %v136
    %183 = vmatpush.msra.mxu0 %v134
    %184 = vmatpush.msra.mxu0 %v132
    %185 = vmatpush.msra.mxu0 %v130
    %186 = vmatpush.msra.mxu0 %v128
    %187 = vmatmul.f32.gmra.mxu0 %v143
    %v188 = vpop.f32.mrf.mxu0
    %v189 = vadd.f32 %v140, %v188
    %190 = vmatmul.f32.gmra.mxu0 %v146
    %v191 = vpop.f32.mrf.mxu0
    %v192 = vadd.f32 %v140, %v191
    %193 = vdwg.mxu0
    %196 = vrot.lane.b32.xlu0 %v166, 120
    %v197 = vpop.permute.xlu0 %196
    %198 = vrot.lane.b32.xlu0 %v169, 120
    %v199 = vpop.permute.xlu0 %198
    %200 = vrot.lane.b32.xlu0 %v166, 112
    %v201 = vpop.permute.xlu0 %200
    %202 = vrot.lane.b32.xlu0 %v169, 112
    %v203 = vpop.permute.xlu0 %202
    %204 = vrot.lane.b32.xlu0 %v166, 104
    %v205 = vpop.permute.xlu0 %204
    %206 = vrot.lane.b32.xlu0 %v169, 104
    %v207 = vpop.permute.xlu0 %206
    %208 = vrot.lane.b32.xlu0 %v166, 96
    %v209 = vpop.permute.xlu0 %208
    %210 = vrot.lane.b32.xlu0 %v169, 96
    %v211 = vpop.permute.xlu0 %210
    %212 = vrot.lane.b32.xlu0 %v166, 88
    %v213 = vpop.permute.xlu0 %212
    %214 = vrot.lane.b32.xlu0 %v169, 88
    %v215 = vpop.permute.xlu0 %214
    %218 = vrot.lane.b32.xlu0 %v189, 96
    %v219 = vpop.permute.xlu0 %218
    %220 = vrot.lane.b32.xlu0 %v192, 96
    %v221 = vpop.permute.xlu0 %220
    %222 = vrot.lane.b32.xlu0 %v189, 88
    %v223 = vpop.permute.xlu0 %222
    %224 = vrot.lane.b32.xlu0 %v192, 88
    %v225 = vpop.permute.xlu0 %224
    %226 = vrot.lane.b32.xlu0 %v166, 80
    %v227 = vpop.permute.xlu0 %226
    %228 = vrot.lane.b32.xlu0 %v169, 80
    %v229 = vpop.permute.xlu0 %228
    %vm230 = vcmask 64512
    %v231 = vsel %vm230, %v166, 0
    %v233 = vsel %vm230, %v169, 0
    %v235 = vsel %vm230, %v227, 0
    %v237 = vsel %vm230, %v229, 0
    %239 = vmatpush.xpose.msra.mxu0 0.0
    %240 = vmatpush.xpose.msra.mxu0 0.0
    %241 = vmatpush.xpose.msra.mxu0 0.0
    %242 = vmatpush.xpose.msra.mxu0 0.0
    %243 = vmatpush.xpose.msra.mxu0 0.0
    %244 = vmatpush.xpose.msra.mxu0 0.0
    %245 = vmatpush.xpose.msra.mxu0 0.0
    %246 = vmatpush.xpose.msra.mxu0 0.0
    %247 = vmatpush.xpose.msra.mxu0 0.0
    %248 = vmatpush.xpose.msra.mxu0 0.0
    %249 = vmatpush.xpose.msra.mxu0 0.0
    %250 = vmatpush.xpose.msra.mxu0 0.0
    %251 = vmatpush.xpose.msra.mxu0 0.0
    %252 = vmatpush.xpose.msra.mxu0 0.0
    %253 = vmatpush.xpose.msra.mxu0 %v237
    %254 = vmatpush.xpose.msra.mxu0 %v235
    %255 = vmatmul.f32.gmra.mxu0 %v231
    %v256 = vpop.f32.mrf.mxu0
    %v257 = vadd.f32 %v120, %v256
    %258 = vmatmul.f32.gmra.mxu0 %v233
    %v259 = vpop.f32.mrf.mxu0
    %v260 = vadd.f32 %v121, %v259
    %261 = vdwg.mxu0
    %262 = vrot.lane.b32.xlu0 %v197, 80
    %v263 = vpop.permute.xlu0 %262
    %264 = vrot.lane.b32.xlu0 %v199, 80
    %v265 = vpop.permute.xlu0 %264
    %v266 = vsel %vm230, %v197, 0
    %v268 = vsel %vm230, %v199, 0
    %v270 = vsel %vm230, %v263, 0
    %v272 = vsel %vm230, %v265, 0
    %274 = vmatpush.xpose.msra.mxu0 0.0
    %275 = vmatpush.xpose.msra.mxu0 0.0
    %276 = vmatpush.xpose.msra.mxu0 0.0
    %277 = vmatpush.xpose.msra.mxu0 0.0
    %278 = vmatpush.xpose.msra.mxu0 0.0
    %279 = vmatpush.xpose.msra.mxu0 0.0
    %280 = vmatpush.xpose.msra.mxu0 0.0
    %281 = vmatpush.xpose.msra.mxu0 0.0
    %282 = vmatpush.xpose.msra.mxu0 0.0
    %283 = vmatpush.xpose.msra.mxu0 0.0
    %284 = vmatpush.xpose.msra.mxu0 0.0
    %285 = vmatpush.xpose.msra.mxu0 0.0
    %286 = vmatpush.xpose.msra.mxu0 0.0
    %287 = vmatpush.xpose.msra.mxu0 0.0
    %288 = vmatpush.xpose.msra.mxu0 %v272
    %289 = vmatpush.xpose.msra.mxu0 %v270
    %290 = vmatmul.f32.gmra.mxu0 %v266
    %v291 = vpop.f32.mrf.mxu0
    %v292 = vadd.f32 %v120, %v291
    %293 = vmatmul.f32.gmra.mxu0 %v268
    %v294 = vpop.f32.mrf.mxu0
    %v295 = vadd.f32 %v121, %v294
    %296 = vdwg.mxu0
    %297 = vrot.lane.b32.xlu0 %v201, 80
    %v298 = vpop.permute.xlu0 %297
    %299 = vrot.lane.b32.xlu0 %v203, 80
    %v300 = vpop.permute.xlu0 %299
    %v301 = vsel %vm230, %v201, 0
    %v303 = vsel %vm230, %v203, 0
    %v305 = vsel %vm230, %v298, 0
    %v307 = vsel %vm230, %v300, 0
    %309 = vmatpush.xpose.msra.mxu0 0.0
    %310 = vmatpush.xpose.msra.mxu0 0.0
    %311 = vmatpush.xpose.msra.mxu0 0.0
    %312 = vmatpush.xpose.msra.mxu0 0.0
    %313 = vmatpush.xpose.msra.mxu0 0.0
    %314 = vmatpush.xpose.msra.mxu0 0.0
    %315 = vmatpush.xpose.msra.mxu0 0.0
    %316 = vmatpush.xpose.msra.mxu0 0.0
    %317 = vmatpush.xpose.msra.mxu0 0.0
    %318 = vmatpush.xpose.msra.mxu0 0.0
    %319 = vmatpush.xpose.msra.mxu0 0.0
    %320 = vmatpush.xpose.msra.mxu0 0.0
    %321 = vmatpush.xpose.msra.mxu0 0.0
    %322 = vmatpush.xpose.msra.mxu0 0.0
    %323 = vmatpush.xpose.msra.mxu0 %v307
    %324 = vmatpush.xpose.msra.mxu0 %v305
    %325 = vmatmul.f32.gmra.mxu0 %v301
    %v326 = vpop.f32.mrf.mxu0
    %v327 = vadd.f32 %v120, %v326
    %328 = vmatmul.f32.gmra.mxu0 %v303
    %v329 = vpop.f32.mrf.mxu0
    %v330 = vadd.f32 %v121, %v329
    %331 = vdwg.mxu0
    %332 = vrot.lane.b32.xlu0 %v205, 80
    %v333 = vpop.permute.xlu0 %332
    %334 = vrot.lane.b32.xlu0 %v207, 80
    %v335 = vpop.permute.xlu0 %334
    %v336 = vsel %vm230, %v205, 0
    %v338 = vsel %vm230, %v207, 0
    %v340 = vsel %vm230, %v333, 0
    %v342 = vsel %vm230, %v335, 0
    %344 = vmatpush.xpose.msra.mxu0 0.0
    %345 = vmatpush.xpose.msra.mxu0 0.0
    %346 = vmatpush.xpose.msra.mxu0 0.0
    %347 = vmatpush.xpose.msra.mxu0 0.0
    %348 = vmatpush.xpose.msra.mxu0 0.0
    %349 = vmatpush.xpose.msra.mxu0 0.0
    %350 = vmatpush.xpose.msra.mxu0 0.0
    %351 = vmatpush.xpose.msra.mxu0 0.0
    %352 = vmatpush.xpose.msra.mxu0 0.0
    %353 = vmatpush.xpose.msra.mxu0 0.0
    %354 = vmatpush.xpose.msra.mxu0 0.0
    %355 = vmatpush.xpose.msra.mxu0 0.0
    %356 = vmatpush.xpose.msra.mxu0 0.0
    %357 = vmatpush.xpose.msra.mxu0 0.0
    %358 = vmatpush.xpose.msra.mxu0 %v342
    %359 = vmatpush.xpose.msra.mxu0 %v340
    %360 = vmatmul.f32.gmra.mxu0 %v336
    %v361 = vpop.f32.mrf.mxu0
    %v362 = vadd.f32 %v120, %v361
    %363 = vmatmul.f32.gmra.mxu0 %v338
    %v364 = vpop.f32.mrf.mxu0
    %v365 = vadd.f32 %v121, %v364
    %366 = vdwg.mxu0
    %367 = vrot.lane.b32.xlu0 %v209, 80
    %v368 = vpop.permute.xlu0 %367
    %369 = vrot.lane.b32.xlu0 %v211, 80
    %v370 = vpop.permute.xlu0 %369
    %v371 = vsel %vm230, %v209, 0
    %v373 = vsel %vm230, %v211, 0
    %v375 = vsel %vm230, %v368, 0
    %v377 = vsel %vm230, %v370, 0
    %379 = vmatpush.xpose.msra.mxu0 0.0
    %380 = vmatpush.xpose.msra.mxu0 0.0
    %381 = vmatpush.xpose.msra.mxu0 0.0
    %382 = vmatpush.xpose.msra.mxu0 0.0
    %383 = vmatpush.xpose.msra.mxu0 0.0
    %384 = vmatpush.xpose.msra.mxu0 0.0
    %385 = vmatpush.xpose.msra.mxu0 0.0
    %386 = vmatpush.xpose.msra.mxu0 0.0
    %387 = vmatpush.xpose.msra.mxu0 0.0
    %388 = vmatpush.xpose.msra.mxu0 0.0
    %389 = vmatpush.xpose.msra.mxu0 0.0
    %390 = vmatpush.xpose.msra.mxu0 0.0
    %391 = vmatpush.xpose.msra.mxu0 0.0
    %392 = vmatpush.xpose.msra.mxu0 0.0
    %393 = vmatpush.xpose.msra.mxu0 %v377
    %394 = vmatpush.xpose.msra.mxu0 %v375
    %395 = vmatmul.f32.gmra.mxu0 %v371
    %v396 = vpop.f32.mrf.mxu0
    %v397 = vadd.f32 %v120, %v396
    %398 = vmatmul.f32.gmra.mxu0 %v373
    %v399 = vpop.f32.mrf.mxu0
    %v400 = vadd.f32 %v121, %v399
    %401 = vdwg.mxu0
    %402 = vrot.lane.b32.xlu0 %v213, 80
    %v403 = vpop.permute.xlu0 %402
    %404 = vrot.lane.b32.xlu0 %v215, 80
    %v405 = vpop.permute.xlu0 %404
    %v406 = vsel %vm230, %v213, 0
    %v408 = vsel %vm230, %v215, 0
    %v410 = vsel %vm230, %v403, 0
    %v412 = vsel %vm230, %v405, 0
    %414 = vmatpush.xpose.msra.mxu0 0.0
    %415 = vmatpush.xpose.msra.mxu0 0.0
    %416 = vmatpush.xpose.msra.mxu0 0.0
    %417 = vmatpush.xpose.msra.mxu0 0.0
    %418 = vmatpush.xpose.msra.mxu0 0.0
    %419 = vmatpush.xpose.msra.mxu0 0.0
    %420 = vmatpush.xpose.msra.mxu0 0.0
    %421 = vmatpush.xpose.msra.mxu0 0.0
    %422 = vmatpush.xpose.msra.mxu0 0.0
    %423 = vmatpush.xpose.msra.mxu0 0.0
    %424 = vmatpush.xpose.msra.mxu0 0.0
    %425 = vmatpush.xpose.msra.mxu0 0.0
    %426 = vmatpush.xpose.msra.mxu0 0.0
    %427 = vmatpush.xpose.msra.mxu0 0.0
    %428 = vmatpush.xpose.msra.mxu0 %v412
    %429 = vmatpush.xpose.msra.mxu0 %v410
    %430 = vmatmul.f32.gmra.mxu0 %v406
    %v431 = vpop.f32.mrf.mxu0
    %v432 = vadd.f32 %v120, %v431
    %433 = vmatmul.f32.gmra.mxu0 %v408
    %v434 = vpop.f32.mrf.mxu0
    %v435 = vadd.f32 %v121, %v434
    %436 = vdwg.mxu0
    %vm437 = vcmask 130048
    %v438 = vsel %vm437, %v257, -inf
    %439 = vmax.xlane.f32.xlu0 %v438
    %v440 = vpop.xlane.xlu0 %439
    %v441 = vsel %vm437, %v260, -inf
    %442 = vmax.xlane.f32.xlu0 %v441
    %v443 = vpop.xlane.xlu0 %442
    %v444 = vsel %vm437, %v292, -inf
    %445 = vmax.xlane.f32.xlu0 %v444
    %v446 = vpop.xlane.xlu0 %445
    %v447 = vsel %vm437, %v295, -inf
    %448 = vmax.xlane.f32.xlu0 %v447
    %v449 = vpop.xlane.xlu0 %448
    %v450 = vsel %vm437, %v327, -inf
    %451 = vmax.xlane.f32.xlu0 %v450
    %v452 = vpop.xlane.xlu0 %451
    %v453 = vsel %vm437, %v330, -inf
    %454 = vmax.xlane.f32.xlu0 %v453
    %v455 = vpop.xlane.xlu0 %454
    %v456 = vsel %vm437, %v362, -inf
    %457 = vmax.xlane.f32.xlu0 %v456
    %v458 = vpop.xlane.xlu0 %457
    %v459 = vsel %vm437, %v365, -inf
    %460 = vmax.xlane.f32.xlu0 %v459
    %v461 = vpop.xlane.xlu0 %460
    %v462 = vsel %vm437, %v397, -inf
    %463 = vmax.xlane.f32.xlu0 %v462
    %v464 = vpop.xlane.xlu0 %463
    %v465 = vsel %vm437, %v400, -inf
    %466 = vmax.xlane.f32.xlu0 %v465
    %v467 = vpop.xlane.xlu0 %466
    %v468 = vsel %vm437, %v432, -inf
    %469 = vmax.xlane.f32.xlu0 %v468
    %v470 = vpop.xlane.xlu0 %469
    %v471 = vsel %vm437, %v435, -inf
    %472 = vmax.xlane.f32.xlu0 %v471
    %v473 = vpop.xlane.xlu0 %472
    %v474 = vsub.f32 %v257, %v440
    %v475 = vsub.f32 %v260, %v443
    %v476 = vsub.f32 %v292, %v446
    %v477 = vsub.f32 %v295, %v449
    %v478 = vsub.f32 %v327, %v452
    %v479 = vsub.f32 %v330, %v455
    %v480 = vsub.f32 %v362, %v458
    %v481 = vsub.f32 %v365, %v461
    %v482 = vsub.f32 %v397, %v464
    %v483 = vsub.f32 %v400, %v467
    %v484 = vsub.f32 %v432, %v470
    %v485 = vsub.f32 %v435, %v473
    %v486 = vmul.f32 %v474, 1.442695
    %v487 = vpow.pop %v486
    %v488 = vmul.f32 %v475, 1.442695
    %v489 = vpow.pop %v488
    %v490 = vmul.f32 %v476, 1.442695
    %v491 = vpow.pop %v490
    %v492 = vmul.f32 %v477, 1.442695
    %v493 = vpow.pop %v492
    %v494 = vmul.f32 %v478, 1.442695
    %v495 = vpow.pop %v494
    %v496 = vmul.f32 %v479, 1.442695
    %v497 = vpow.pop %v496
    %v498 = vmul.f32 %v480, 1.442695
    %v499 = vpow.pop %v498
    %v500 = vmul.f32 %v481, 1.442695
    %v501 = vpow.pop %v500
    %v502 = vmul.f32 %v482, 1.442695
    %v503 = vpow.pop %v502
    %v504 = vmul.f32 %v483, 1.442695
    %v505 = vpow.pop %v504
    %v506 = vmul.f32 %v484, 1.442695
    %v507 = vpow.pop %v506
    %v508 = vmul.f32 %v485, 1.442695
    %v509 = vpow.pop %v508
    %v510 = vsel %vm437, %v487, 0.0
    %511 = vadd.xlane.f32.xlu0 %v510
    %v512 = vpop.xlane.xlu0 %511
    %v513 = vsel %vm437, %v489, 0.0
    %514 = vadd.xlane.f32.xlu0 %v513
    %v515 = vpop.xlane.xlu0 %514
    %v516 = vsel %vm437, %v491, 0.0
    %517 = vadd.xlane.f32.xlu0 %v516
    %v518 = vpop.xlane.xlu0 %517
    %v519 = vsel %vm437, %v493, 0.0
    %520 = vadd.xlane.f32.xlu0 %v519
    %v521 = vpop.xlane.xlu0 %520
    %v522 = vsel %vm437, %v495, 0.0
    %523 = vadd.xlane.f32.xlu0 %v522
    %v524 = vpop.xlane.xlu0 %523
    %v525 = vsel %vm437, %v497, 0.0
    %526 = vadd.xlane.f32.xlu0 %v525
    %v527 = vpop.xlane.xlu0 %526
    %v528 = vsel %vm437, %v499, 0.0
    %529 = vadd.xlane.f32.xlu0 %v528
    %v530 = vpop.xlane.xlu0 %529
    %v531 = vsel %vm437, %v501, 0.0
    %532 = vadd.xlane.f32.xlu0 %v531
    %v533 = vpop.xlane.xlu0 %532
    %v534 = vsel %vm437, %v503, 0.0
    %535 = vadd.xlane.f32.xlu0 %v534
    %v536 = vpop.xlane.xlu0 %535
    %v537 = vsel %vm437, %v505, 0.0
    %538 = vadd.xlane.f32.xlu0 %v537
    %v539 = vpop.xlane.xlu0 %538
    %v540 = vsel %vm437, %v507, 0.0
    %541 = vadd.xlane.f32.xlu0 %v540
    %v542 = vpop.xlane.xlu0 %541
    %v543 = vsel %vm437, %v509, 0.0
    %544 = vadd.xlane.f32.xlu0 %v543
    %v545 = vpop.xlane.xlu0 %544
    %v546 = vrcp.pop %v512
    %v547 = vrcp.pop %v515
    %v548 = vrcp.pop %v518
    %v549 = vrcp.pop %v521
    %v550 = vrcp.pop %v524
    %v551 = vrcp.pop %v527
    %v552 = vrcp.pop %v530
    %v553 = vrcp.pop %v533
    %v554 = vrcp.pop %v536
    %v555 = vrcp.pop %v539
    %v556 = vrcp.pop %v542
    %v557 = vrcp.pop %v545
    %v558 = vmul.f32 %v487, %v546
    %v559 = vmul.f32 %v489, %v547
    %v560 = vmul.f32 %v491, %v548
    %v561 = vmul.f32 %v493, %v549
    %v562 = vmul.f32 %v495, %v550
    %v563 = vmul.f32 %v497, %v551
    %v564 = vmul.f32 %v499, %v552
    %v565 = vmul.f32 %v501, %v553
    %v566 = vmul.f32 %v503, %v554
    %v567 = vmul.f32 %v505, %v555
    %v568 = vmul.f32 %v507, %v556
    %v569 = vmul.f32 %v509, %v557
    %570 = vrot.lane.b32.xlu0 %v166, 32
    %v571 = vpop.permute.xlu0 %570
    %572 = vrot.lane.b32.xlu0 %v169, 32
    %v573 = vpop.permute.xlu0 %572
    %v577 = vsel %vm437, %v558, 0
    %v580 = vsel %vm437, %v559, 0
    %582 = vmatpush.msra.mxu0 0.0
    %583 = vmatpush.msra.mxu0 0.0
    %584 = vmatpush.msra.mxu0 0.0
    %585 = vmatpush.msra.mxu0 0.0
    %586 = vmatpush.msra.mxu0 0.0
    %587 = vmatpush.msra.mxu0 0.0
    %588 = vmatpush.msra.mxu0 0.0
    %589 = vmatpush.msra.mxu0 0.0
    %590 = vmatpush.msra.mxu0 0.0
    %591 = vmatpush.msra.mxu0 0.0
    %592 = vmatpush.msra.mxu0 0.0
    %593 = vmatpush.msra.mxu0 0.0
    %594 = vmatpush.msra.mxu0 0.0
    %595 = vmatpush.msra.mxu0 0.0
    %596 = vmatpush.msra.mxu0 %v573
    %597 = vmatpush.msra.mxu0 %v571
    %598 = vmatmul.f32.gmra.mxu0 %v577
    %v599 = vpop.f32.mrf.mxu0
    %v600 = vadd.f32 0.0, %v599
    %601 = vmatmul.f32.gmra.mxu0 %v580
    %v602 = vpop.f32.mrf.mxu0
    %v603 = vadd.f32 0.0, %v602
    %604 = vdwg.mxu0
    %605 = vrot.lane.b32.xlu0 %v197, 32
    %v606 = vpop.permute.xlu0 %605
    %607 = vrot.lane.b32.xlu0 %v199, 32
    %v608 = vpop.permute.xlu0 %607
    %v612 = vsel %vm437, %v560, 0
    %v615 = vsel %vm437, %v561, 0
    %617 = vmatpush.msra.mxu0 0.0
    %618 = vmatpush.msra.mxu0 0.0
    %619 = vmatpush.msra.mxu0 0.0
    %620 = vmatpush.msra.mxu0 0.0
    %621 = vmatpush.msra.mxu0 0.0
    %622 = vmatpush.msra.mxu0 0.0
    %623 = vmatpush.msra.mxu0 0.0
    %624 = vmatpush.msra.mxu0 0.0
    %625 = vmatpush.msra.mxu0 0.0
    %626 = vmatpush.msra.mxu0 0.0
    %627 = vmatpush.msra.mxu0 0.0
    %628 = vmatpush.msra.mxu0 0.0
    %629 = vmatpush.msra.mxu0 0.0
    %630 = vmatpush.msra.mxu0 0.0
    %631 = vmatpush.msra.mxu0 %v608
    %632 = vmatpush.msra.mxu0 %v606
    %633 = vmatmul.f32.gmra.mxu0 %v612
    %v634 = vpop.f32.mrf.mxu0
    %v635 = vadd.f32 0.0, %v634
    %636 = vmatmul.f32.gmra.mxu0 %v615
    %v637 = vpop.f32.mrf.mxu0
    %v638 = vadd.f32 0.0, %v637
    %639 = vdwg.mxu0
    %640 = vrot.lane.b32.xlu0 %v201, 32
    %v641 = vpop.permute.xlu0 %640
    %642 = vrot.lane.b32.xlu0 %v203, 32
    %v643 = vpop.permute.xlu0 %642
    %v647 = vsel %vm437, %v562, 0
    %v650 = vsel %vm437, %v563, 0
    %652 = vmatpush.msra.mxu0 0.0
    %653 = vmatpush.msra.mxu0 0.0
    %654 = vmatpush.msra.mxu0 0.0
    %655 = vmatpush.msra.mxu0 0.0
    %656 = vmatpush.msra.mxu0 0.0
    %657 = vmatpush.msra.mxu0 0.0
    %658 = vmatpush.msra.mxu0 0.0
    %659 = vmatpush.msra.mxu0 0.0
    %660 = vmatpush.msra.mxu0 0.0
    %661 = vmatpush.msra.mxu0 0.0
    %662 = vmatpush.msra.mxu0 0.0
    %663 = vmatpush.msra.mxu0 0.0
    %664 = vmatpush.msra.mxu0 0.0
    %665 = vmatpush.msra.mxu0 0.0
    %666 = vmatpush.msra.mxu0 %v643
    %667 = vmatpush.msra.mxu0 %v641
    %668 = vmatmul.f32.gmra.mxu0 %v647
    %v669 = vpop.f32.mrf.mxu0
    %v670 = vadd.f32 0.0, %v669
    %671 = vmatmul.f32.gmra.mxu0 %v650
    %v672 = vpop.f32.mrf.mxu0
    %v673 = vadd.f32 0.0, %v672
    %674 = vdwg.mxu0
    %675 = vrot.lane.b32.xlu0 %v205, 32
    %v676 = vpop.permute.xlu0 %675
    %677 = vrot.lane.b32.xlu0 %v207, 32
    %v678 = vpop.permute.xlu0 %677
    %v682 = vsel %vm437, %v564, 0
    %v685 = vsel %vm437, %v565, 0
    %687 = vmatpush.msra.mxu0 0.0
    %688 = vmatpush.msra.mxu0 0.0
    %689 = vmatpush.msra.mxu0 0.0
    %690 = vmatpush.msra.mxu0 0.0
    %691 = vmatpush.msra.mxu0 0.0
    %692 = vmatpush.msra.mxu0 0.0
    %693 = vmatpush.msra.mxu0 0.0
    %694 = vmatpush.msra.mxu0 0.0
    %695 = vmatpush.msra.mxu0 0.0
    %696 = vmatpush.msra.mxu0 0.0
    %697 = vmatpush.msra.mxu0 0.0
    %698 = vmatpush.msra.mxu0 0.0
    %699 = vmatpush.msra.mxu0 0.0
    %700 = vmatpush.msra.mxu0 0.0
    %701 = vmatpush.msra.mxu0 %v678
    %702 = vmatpush.msra.mxu0 %v676
    %703 = vmatmul.f32.gmra.mxu0 %v682
    %v704 = vpop.f32.mrf.mxu0
    %v705 = vadd.f32 0.0, %v704
    %706 = vmatmul.f32.gmra.mxu0 %v685
    %v707 = vpop.f32.mrf.mxu0
    %v708 = vadd.f32 0.0, %v707
    %709 = vdwg.mxu0
    %710 = vrot.lane.b32.xlu0 %v219, 32
    %v711 = vpop.permute.xlu0 %710
    %712 = vrot.lane.b32.xlu0 %v221, 32
    %v713 = vpop.permute.xlu0 %712
    %v717 = vsel %vm437, %v566, 0
    %v720 = vsel %vm437, %v567, 0
    %722 = vmatpush.msra.mxu0 0.0
    %723 = vmatpush.msra.mxu0 0.0
    %724 = vmatpush.msra.mxu0 0.0
    %725 = vmatpush.msra.mxu0 0.0
    %726 = vmatpush.msra.mxu0 0.0
    %727 = vmatpush.msra.mxu0 0.0
    %728 = vmatpush.msra.mxu0 0.0
    %729 = vmatpush.msra.mxu0 0.0
    %730 = vmatpush.msra.mxu0 0.0
    %731 = vmatpush.msra.mxu0 0.0
    %732 = vmatpush.msra.mxu0 0.0
    %733 = vmatpush.msra.mxu0 0.0
    %734 = vmatpush.msra.mxu0 0.0
    %735 = vmatpush.msra.mxu0 0.0
    %736 = vmatpush.msra.mxu0 %v713
    %737 = vmatpush.msra.mxu0 %v711
    %738 = vmatmul.f32.gmra.mxu0 %v717
    %v739 = vpop.f32.mrf.mxu0
    %v740 = vadd.f32 0.0, %v739
    %741 = vmatmul.f32.gmra.mxu0 %v720
    %v742 = vpop.f32.mrf.mxu0
    %v743 = vadd.f32 0.0, %v742
    %744 = vdwg.mxu0
    %745 = vrot.lane.b32.xlu0 %v223, 32
    %v746 = vpop.permute.xlu0 %745
    %747 = vrot.lane.b32.xlu0 %v225, 32
    %v748 = vpop.permute.xlu0 %747
    %v752 = vsel %vm437, %v568, 0
    %v755 = vsel %vm437, %v569, 0
    %757 = vmatpush.msra.mxu0 0.0
    %758 = vmatpush.msra.mxu0 0.0
    %759 = vmatpush.msra.mxu0 0.0
    %760 = vmatpush.msra.mxu0 0.0
    %761 = vmatpush.msra.mxu0 0.0
    %762 = vmatpush.msra.mxu0 0.0
    %763 = vmatpush.msra.mxu0 0.0
    %764 = vmatpush.msra.mxu0 0.0
    %765 = vmatpush.msra.mxu0 0.0
    %766 = vmatpush.msra.mxu0 0.0
    %767 = vmatpush.msra.mxu0 0.0
    %768 = vmatpush.msra.mxu0 0.0
    %769 = vmatpush.msra.mxu0 0.0
    %770 = vmatpush.msra.mxu0 0.0
    %771 = vmatpush.msra.mxu0 %v748
    %772 = vmatpush.msra.mxu0 %v746
    %773 = vmatmul.f32.gmra.mxu0 %v752
    %v774 = vpop.f32.mrf.mxu0
    %v775 = vadd.f32 0.0, %v774
    %776 = vmatmul.f32.gmra.mxu0 %v755
    %v777 = vpop.f32.mrf.mxu0
    %v778 = vadd.f32 0.0, %v777
    %779 = vdwg.mxu0
    %782 = vrot.lane.b32.xlu0 %v635, 8
    %v783 = vpop.permute.xlu0 %782
    %784 = vrot.lane.b32.xlu0 %v638, 8
    %v785 = vpop.permute.xlu0 %784
    %790 = vrot.lane.b32.xlu0 %v670, 16
    %v791 = vpop.permute.xlu0 %790
    %792 = vrot.lane.b32.xlu0 %v673, 16
    %v793 = vpop.permute.xlu0 %792
    %798 = vrot.lane.b32.xlu0 %v705, 24
    %v799 = vpop.permute.xlu0 %798
    %800 = vrot.lane.b32.xlu0 %v708, 24
    %v801 = vpop.permute.xlu0 %800
    %806 = vrot.lane.b32.xlu0 %v740, 32
    %v807 = vpop.permute.xlu0 %806
    %808 = vrot.lane.b32.xlu0 %v743, 32
    %v809 = vpop.permute.xlu0 %808
    %814 = vrot.lane.b32.xlu0 %v775, 40
    %v815 = vpop.permute.xlu0 %814
    %816 = vrot.lane.b32.xlu0 %v778, 40
    %v817 = vpop.permute.xlu0 %816
    %v820 = vsel %vm230, %v600, %v783
    %v821 = vsel %vm230, %v603, %v785
    %v822 = vsel %vm437, %v820, %v791
    %v823 = vsel %vm437, %v821, %v793
    %vm824 = vcmask 195584
    %v825 = vsel %vm824, %v822, %v799
    %v826 = vsel %vm824, %v823, %v801
    %vm827 = vcmask 261120
    %v828 = vsel %vm827, %v825, %v807
    %v829 = vsel %vm827, %v826, %v809
    %vm830 = vcmask 326656
    %v831 = vsel %vm830, %v828, %v815
    %v832 = vsel %vm830, %v829, %v817
    %v833 = vld [vmem:[#allocation7] sm:$0xff]
    %v834 = vld [vmem:[#allocation7 + $0x8] sm:$0xff]
    %v835 = vld [vmem:[#allocation7 + $0x10] sm:$0xff]
    %v836 = vld [vmem:[#allocation7 + $0x18] sm:$0xff]
    %v837 = vld [vmem:[#allocation7 + $0x20] sm:$0xff]
    %v838 = vld [vmem:[#allocation7 + $0x28] sm:$0xff]
    %v839 = vperm.slane %v124, 1
    %v841 = vsel %vm141, %v831, 0
    %v844 = vsel %vm141, %v832, 0
    %846 = vmatpush.msra.mxu0 0.0
    %847 = vmatpush.msra.mxu0 0.0
    %848 = vmatpush.msra.mxu0 0.0
    %849 = vmatpush.msra.mxu0 0.0
    %850 = vmatpush.msra.mxu0 0.0
    %851 = vmatpush.msra.mxu0 0.0
    %852 = vmatpush.msra.mxu0 0.0
    %853 = vmatpush.msra.mxu0 0.0
    %854 = vmatpush.msra.mxu0 0.0
    %855 = vmatpush.msra.mxu0 0.0
    %856 = vmatpush.msra.mxu0 %v838
    %857 = vmatpush.msra.mxu0 %v837
    %858 = vmatpush.msra.mxu0 %v836
    %859 = vmatpush.msra.mxu0 %v835
    %860 = vmatpush.msra.mxu0 %v834
    %861 = vmatpush.msra.mxu0 %v833
    %862 = vmatmul.f32.gmra.mxu0 %v841
    %v863 = vpop.f32.mrf.mxu0
    %v864 = vadd.f32 %v839, %v863
    %865 = vmatmul.f32.gmra.mxu0 %v844
    %v866 = vpop.f32.mrf.mxu0
    %v867 = vadd.f32 %v839, %v866
    %868 = vdwg.mxu0
    %v869 = vadd.f32 %v114, %v864
    %v870 = vadd.f32 %v115, %v867
    %v871 = vsel %vm141, %v869, 0.0
    %872 = vadd.xlane.f32.xlu0 %v871
    %v873 = vpop.xlane.xlu0 %872
    %v874 = vsel %vm141, %v870, 0.0
    %875 = vadd.xlane.f32.xlu0 %v874
    %v876 = vpop.xlane.xlu0 %875
    %v877 = vrcp.pop 48.0
    %v878 = vmul.f32 48.0, %v877
    %v879 = vsub.f32 1.0, %v878
    %v880 = vmul.f32 %v877, %v879
    %v881 = vadd.f32 %v877, %v880
    %vm882 = vweird.f32 %v877
    %v883 = vsel %vm882, %v877, %v881
    %v884 = vmul.f32 %v873, %v883
    %v885 = vmul.f32 %v876, %v883
    %v886 = vsub.f32 %v869, %v884
    %v887 = vsub.f32 %v870, %v885
    %v888 = vmul.f32 %v886, %v886
    %v889 = vmul.f32 %v887, %v887
    %v890 = vsel %vm141, %v888, 0.0
    %891 = vadd.xlane.f32.xlu0 %v890
    %v892 = vpop.xlane.xlu0 %891
    %v893 = vsel %vm141, %v889, 0.0
    %894 = vadd.xlane.f32.xlu0 %v893
    %v895 = vpop.xlane.xlu0 %894
    %v896 = vmul.f32 %v892, %v883
    %v897 = vmul.f32 %v895, %v883
    %v898 = vadd.f32 %v896, 1e-05
    %v899 = vadd.f32 %v897, 1e-05
    %v900 = vrsqrt.pop %v898
    %v901 = vmul.f32 %v900, %v898
    %v902 = vmul.f32 %v901, %v900
    %v903 = vmul.f32 0.5, %v902
    %v904 = vsub.f32 1.5, %v903
    %v905 = vmul.f32 %v900, %v904
    %vm906 = vweird.f32 %v898
    %vm907 = vweird.f32 %v900
    %vm908 = vmor %vm906, %vm907
    %v909 = vsel %vm908, %v900, %v905
    %v910 = vrsqrt.pop %v899
    %v911 = vmul.f32 %v910, %v899
    %v912 = vmul.f32 %v911, %v910
    %v913 = vmul.f32 0.5, %v912
    %v914 = vsub.f32 1.5, %v913
    %v915 = vmul.f32 %v910, %v914
    %vm916 = vweird.f32 %v899
    %vm917 = vweird.f32 %v910
    %vm918 = vmor %vm916, %vm917
    %v919 = vsel %vm918, %v910, %v915
    %v920 = vmul.f32 %v886, %v909
    %v921 = vmul.f32 %v887, %v919
    %v922 = vperm.slane %v124, 7
    %v923 = vmul.f32 %v920, %v922
    %v924 = vmul.f32 %v921, %v922
    %v925 = vperm.slane %v126, 0
    %v926 = vadd.f32 %v923, %v925
    %v927 = vadd.f32 %v924, %v925
    %s928 = scalar_lea.vmem [#allocation7], 48
    %v929 = vld [vmem:[%s928] sm:$0xff]
    %v930 = vld [vmem:[%s928 + $0x8] sm:$0xff]
    %v931 = vld [vmem:[%s928 + $0x10] sm:$0xff]
    %v932 = vld [vmem:[%s928 + $0x18] sm:$0xff]
    %v933 = vld [vmem:[%s928 + $0x20] sm:$0xff]
    %v934 = vld [vmem:[%s928 + $0x28] sm:$0xff]
    %v935 = vperm.slane %v124, 2
    %v937 = vsel %vm141, %v926, 0
    %v940 = vsel %vm141, %v927, 0
    %942 = vmatpush.msra.mxu0 0.0
    %943 = vmatpush.msra.mxu0 0.0
    %944 = vmatpush.msra.mxu0 0.0
    %945 = vmatpush.msra.mxu0 0.0
    %946 = vmatpush.msra.mxu0 0.0
    %947 = vmatpush.msra.mxu0 0.0
    %948 = vmatpush.msra.mxu0 0.0
    %949 = vmatpush.msra.mxu0 0.0
    %950 = vmatpush.msra.mxu0 0.0
    %951 = vmatpush.msra.mxu0 0.0
    %952 = vmatpush.msra.mxu0 %v934
    %953 = vmatpush.msra.mxu0 %v933
    %954 = vmatpush.msra.mxu0 %v932
    %955 = vmatpush.msra.mxu0 %v931
    %956 = vmatpush.msra.mxu0 %v930
    %957 = vmatpush.msra.mxu0 %v929
    %958 = vmatmul.f32.gmra.mxu0 %v937
    %v959 = vpop.f32.mrf.mxu0
    %v960 = vadd.f32 %v935, %v959
    %961 = vmatmul.f32.gmra.mxu0 %v940
    %v962 = vpop.f32.mrf.mxu0
    %v963 = vadd.f32 %v935, %v962
    %964 = vdwg.mxu0
    %v965 = vld [vmem:[#allocation8] sm:$0xff]
    %v966 = vld [vmem:[#allocation8 + $0x8] sm:$0xff]
    %v967 = vld [vmem:[#allocation8 + $0x10] sm:$0xff]
    %v968 = vld [vmem:[#allocation8 + $0x18] sm:$0xff]
    %v969 = vld [vmem:[#allocation8 + $0x20] sm:$0xff]
    %v970 = vld [vmem:[#allocation8 + $0x28] sm:$0xff]
    %v971 = vperm.slane %v124, 3
    %v973 = vsel %vm141, %v116, 0
    %v976 = vsel %vm141, %v117, 0
    %v979 = vsel %vm141, %v118, 0
    %v982 = vsel %vm141, %v119, 0
    %984 = vmatpush.msra.mxu0 0.0
    %985 = vmatpush.msra.mxu0 0.0
    %986 = vmatpush.msra.mxu0 0.0
    %987 = vmatpush.msra.mxu0 0.0
    %988 = vmatpush.msra.mxu0 0.0
    %989 = vmatpush.msra.mxu0 0.0
    %990 = vmatpush.msra.mxu0 0.0
    %991 = vmatpush.msra.mxu0 0.0
    %992 = vmatpush.msra.mxu0 0.0
    %993 = vmatpush.msra.mxu0 0.0
    %994 = vmatpush.msra.mxu0 %v970
    %995 = vmatpush.msra.mxu0 %v969
    %996 = vmatpush.msra.mxu0 %v968
    %997 = vmatpush.msra.mxu0 %v967
    %998 = vmatpush.msra.mxu0 %v966
    %999 = vmatpush.msra.mxu0 %v965
    %1000 = vmatmul.f32.gmra.mxu0 %v973
    %v1001 = vpop.f32.mrf.mxu0
    %v1002 = vadd.f32 %v971, %v1001
    %1003 = vmatmul.f32.gmra.mxu0 %v976
    %v1004 = vpop.f32.mrf.mxu0
    %v1005 = vadd.f32 %v971, %v1004
    %1006 = vmatmul.f32.gmra.mxu0 %v979
    %v1007 = vpop.f32.mrf.mxu0
    %v1008 = vadd.f32 %v971, %v1007
    %1009 = vmatmul.f32.gmra.mxu0 %v982
    %v1010 = vpop.f32.mrf.mxu0
    %v1011 = vadd.f32 %v971, %v1010
    %1012 = vdwg.mxu0
    %1015 = vrot.lane.b32.xlu0 %v960, 120
    %v1016 = vpop.permute.xlu0 %1015
    %1017 = vrot.lane.b32.xlu0 %v963, 120
    %v1018 = vpop.permute.xlu0 %1017
    %1019 = vrot.lane.b32.xlu0 %v960, 112
    %v1020 = vpop.permute.xlu0 %1019
    %1021 = vrot.lane.b32.xlu0 %v963, 112
    %v1022 = vpop.permute.xlu0 %1021
    %1023 = vrot.lane.b32.xlu0 %v960, 104
    %v1024 = vpop.permute.xlu0 %1023
    %1025 = vrot.lane.b32.xlu0 %v963, 104
    %v1026 = vpop.permute.xlu0 %1025
    %1027 = vrot.lane.b32.xlu0 %v960, 96
    %v1028 = vpop.permute.xlu0 %1027
    %1029 = vrot.lane.b32.xlu0 %v963, 96
    %v1030 = vpop.permute.xlu0 %1029
    %1031 = vrot.lane.b32.xlu0 %v960, 88
    %v1032 = vpop.permute.xlu0 %1031
    %1033 = vrot.lane.b32.xlu0 %v963, 88
    %v1034 = vpop.permute.xlu0 %1033
    %1039 = vrot.lane.b32.xlu0 %v1002, 120
    %v1040 = vpop.permute.xlu0 %1039
    %1041 = vrot.lane.b32.xlu0 %v1005, 120
    %v1042 = vpop.permute.xlu0 %1041
    %1043 = vrot.lane.b32.xlu0 %v1008, 120
    %v1044 = vpop.permute.xlu0 %1043
    %1045 = vrot.lane.b32.xlu0 %v1011, 120
    %v1046 = vpop.permute.xlu0 %1045
    %1047 = vrot.lane.b32.xlu0 %v1002, 112
    %v1048 = vpop.permute.xlu0 %1047
    %1049 = vrot.lane.b32.xlu0 %v1005, 112
    %v1050 = vpop.permute.xlu0 %1049
    %1051 = vrot.lane.b32.xlu0 %v1008, 112
    %v1052 = vpop.permute.xlu0 %1051
    %1053 = vrot.lane.b32.xlu0 %v1011, 112
    %v1054 = vpop.permute.xlu0 %1053
    %1055 = vrot.lane.b32.xlu0 %v1002, 104
    %v1056 = vpop.permute.xlu0 %1055
    %1057 = vrot.lane.b32.xlu0 %v1005, 104
    %v1058 = vpop.permute.xlu0 %1057
    %1059 = vrot.lane.b32.xlu0 %v1008, 104
    %v1060 = vpop.permute.xlu0 %1059
    %1061 = vrot.lane.b32.xlu0 %v1011, 104
    %v1062 = vpop.permute.xlu0 %1061
    %1063 = vrot.lane.b32.xlu0 %v1002, 96
    %v1064 = vpop.permute.xlu0 %1063
    %1065 = vrot.lane.b32.xlu0 %v1005, 96
    %v1066 = vpop.permute.xlu0 %1065
    %1067 = vrot.lane.b32.xlu0 %v1008, 96
    %v1068 = vpop.permute.xlu0 %1067
    %1069 = vrot.lane.b32.xlu0 %v1011, 96
    %v1070 = vpop.permute.xlu0 %1069
    %1071 = vrot.lane.b32.xlu0 %v1002, 88
    %v1072 = vpop.permute.xlu0 %1071
    %1073 = vrot.lane.b32.xlu0 %v1005, 88
    %v1074 = vpop.permute.xlu0 %1073
    %1075 = vrot.lane.b32.xlu0 %v1008, 88
    %v1076 = vpop.permute.xlu0 %1075
    %1077 = vrot.lane.b32.xlu0 %v1011, 88
    %v1078 = vpop.permute.xlu0 %1077
    %v1079 = vsel %vm230, %v960, 0
    %v1081 = vsel %vm230, %v963, 0
    %v1083 = vsel %vm230, %v1002, 0
    %v1085 = vsel %vm230, %v1005, 0
    %v1087 = vsel %vm230, %v1008, 0
    %v1089 = vsel %vm230, %v1011, 0
    %1091 = vmatpush.xpose.msra.mxu0 0.0
    %1092 = vmatpush.xpose.msra.mxu0 0.0
    %1093 = vmatpush.xpose.msra.mxu0 0.0
    %1094 = vmatpush.xpose.msra.mxu0 0.0
    %1095 = vmatpush.xpose.msra.mxu0 0.0
    %1096 = vmatpush.xpose.msra.mxu0 0.0
    %1097 = vmatpush.xpose.msra.mxu0 0.0
    %1098 = vmatpush.xpose.msra.mxu0 0.0
    %1099 = vmatpush.xpose.msra.mxu0 0.0
    %1100 = vmatpush.xpose.msra.mxu0 0.0
    %1101 = vmatpush.xpose.msra.mxu0 0.0
    %1102 = vmatpush.xpose.msra.mxu0 0.0
    %1103 = vmatpush.xpose.msra.mxu0 %v1089
    %1104 = vmatpush.xpose.msra.mxu0 %v1087
    %1105 = vmatpush.xpose.msra.mxu0 %v1085
    %1106 = vmatpush.xpose.msra.mxu0 %v1083
    %1107 = vmatmul.f32.gmra.mxu0 %v1079
    %v1108 = vpop.f32.mrf.mxu0
    %v1109 = vadd.f32 %v122, %v1108
    %1110 = vmatmul.f32.gmra.mxu0 %v1081
    %v1111 = vpop.f32.mrf.mxu0
    %v1112 = vadd.f32 %v123, %v1111
    %1113 = vdwg.mxu0
    %v1114 = vsel %vm230, %v1016, 0
    %v1116 = vsel %vm230, %v1018, 0
    %v1118 = vsel %vm230, %v1040, 0
    %v1120 = vsel %vm230, %v1042, 0
    %v1122 = vsel %vm230, %v1044, 0
    %v1124 = vsel %vm230, %v1046, 0
    %1126 = vmatpush.xpose.msra.mxu0 0.0
    %1127 = vmatpush.xpose.msra.mxu0 0.0
    %1128 = vmatpush.xpose.msra.mxu0 0.0
    %1129 = vmatpush.xpose.msra.mxu0 0.0
    %1130 = vmatpush.xpose.msra.mxu0 0.0
    %1131 = vmatpush.xpose.msra.mxu0 0.0
    %1132 = vmatpush.xpose.msra.mxu0 0.0
    %1133 = vmatpush.xpose.msra.mxu0 0.0
    %1134 = vmatpush.xpose.msra.mxu0 0.0
    %1135 = vmatpush.xpose.msra.mxu0 0.0
    %1136 = vmatpush.xpose.msra.mxu0 0.0
    %1137 = vmatpush.xpose.msra.mxu0 0.0
    %1138 = vmatpush.xpose.msra.mxu0 %v1124
    %1139 = vmatpush.xpose.msra.mxu0 %v1122
    %1140 = vmatpush.xpose.msra.mxu0 %v1120
    %1141 = vmatpush.xpose.msra.mxu0 %v1118
    %1142 = vmatmul.f32.gmra.mxu0 %v1114
    %v1143 = vpop.f32.mrf.mxu0
    %v1144 = vadd.f32 %v122, %v1143
    %1145 = vmatmul.f32.gmra.mxu0 %v1116
    %v1146 = vpop.f32.mrf.mxu0
    %v1147 = vadd.f32 %v123, %v1146
    %1148 = vdwg.mxu0
    %v1149 = vsel %vm230, %v1020, 0
    %v1151 = vsel %vm230, %v1022, 0
    %v1153 = vsel %vm230, %v1048, 0
    %v1155 = vsel %vm230, %v1050, 0
    %v1157 = vsel %vm230, %v1052, 0
    %v1159 = vsel %vm230, %v1054, 0
    %1161 = vmatpush.xpose.msra.mxu0 0.0
    %1162 = vmatpush.xpose.msra.mxu0 0.0
    %1163 = vmatpush.xpose.msra.mxu0 0.0
    %1164 = vmatpush.xpose.msra.mxu0 0.0
    %1165 = vmatpush.xpose.msra.mxu0 0.0
    %1166 = vmatpush.xpose.msra.mxu0 0.0
    %1167 = vmatpush.xpose.msra.mxu0 0.0
    %1168 = vmatpush.xpose.msra.mxu0 0.0
    %1169 = vmatpush.xpose.msra.mxu0 0.0
    %1170 = vmatpush.xpose.msra.mxu0 0.0
    %1171 = vmatpush.xpose.msra.mxu0 0.0
    %1172 = vmatpush.xpose.msra.mxu0 0.0
    %1173 = vmatpush.xpose.msra.mxu0 %v1159
    %1174 = vmatpush.xpose.msra.mxu0 %v1157
    %1175 = vmatpush.xpose.msra.mxu0 %v1155
    %1176 = vmatpush.xpose.msra.mxu0 %v1153
    %1177 = vmatmul.f32.gmra.mxu0 %v1149
    %v1178 = vpop.f32.mrf.mxu0
    %v1179 = vadd.f32 %v122, %v1178
    %1180 = vmatmul.f32.gmra.mxu0 %v1151
    %v1181 = vpop.f32.mrf.mxu0
    %v1182 = vadd.f32 %v123, %v1181
    %1183 = vdwg.mxu0
    %v1184 = vsel %vm230, %v1024, 0
    %v1186 = vsel %vm230, %v1026, 0
    %v1188 = vsel %vm230, %v1056, 0
    %v1190 = vsel %vm230, %v1058, 0
    %v1192 = vsel %vm230, %v1060, 0
    %v1194 = vsel %vm230, %v1062, 0
    %1196 = vmatpush.xpose.msra.mxu0 0.0
    %1197 = vmatpush.xpose.msra.mxu0 0.0
    %1198 = vmatpush.xpose.msra.mxu0 0.0
    %1199 = vmatpush.xpose.msra.mxu0 0.0
    %1200 = vmatpush.xpose.msra.mxu0 0.0
    %1201 = vmatpush.xpose.msra.mxu0 0.0
    %1202 = vmatpush.xpose.msra.mxu0 0.0
    %1203 = vmatpush.xpose.msra.mxu0 0.0
    %1204 = vmatpush.xpose.msra.mxu0 0.0
    %1205 = vmatpush.xpose.msra.mxu0 0.0
    %1206 = vmatpush.xpose.msra.mxu0 0.0
    %1207 = vmatpush.xpose.msra.mxu0 0.0
    %1208 = vmatpush.xpose.msra.mxu0 %v1194
    %1209 = vmatpush.xpose.msra.mxu0 %v1192
    %1210 = vmatpush.xpose.msra.mxu0 %v1190
    %1211 = vmatpush.xpose.msra.mxu0 %v1188
    %1212 = vmatmul.f32.gmra.mxu0 %v1184
    %v1213 = vpop.f32.mrf.mxu0
    %v1214 = vadd.f32 %v122, %v1213
    %1215 = vmatmul.f32.gmra.mxu0 %v1186
    %v1216 = vpop.f32.mrf.mxu0
    %v1217 = vadd.f32 %v123, %v1216
    %1218 = vdwg.mxu0
    %v1219 = vsel %vm230, %v1028, 0
    %v1221 = vsel %vm230, %v1030, 0
    %v1223 = vsel %vm230, %v1064, 0
    %v1225 = vsel %vm230, %v1066, 0
    %v1227 = vsel %vm230, %v1068, 0
    %v1229 = vsel %vm230, %v1070, 0
    %1231 = vmatpush.xpose.msra.mxu0 0.0
    %1232 = vmatpush.xpose.msra.mxu0 0.0
    %1233 = vmatpush.xpose.msra.mxu0 0.0
    %1234 = vmatpush.xpose.msra.mxu0 0.0
    %1235 = vmatpush.xpose.msra.mxu0 0.0
    %1236 = vmatpush.xpose.msra.mxu0 0.0
    %1237 = vmatpush.xpose.msra.mxu0 0.0
    %1238 = vmatpush.xpose.msra.mxu0 0.0
    %1239 = vmatpush.xpose.msra.mxu0 0.0
    %1240 = vmatpush.xpose.msra.mxu0 0.0
    %1241 = vmatpush.xpose.msra.mxu0 0.0
    %1242 = vmatpush.xpose.msra.mxu0 0.0
    %1243 = vmatpush.xpose.msra.mxu0 %v1229
    %1244 = vmatpush.xpose.msra.mxu0 %v1227
    %1245 = vmatpush.xpose.msra.mxu0 %v1225
    %1246 = vmatpush.xpose.msra.mxu0 %v1223
    %1247 = vmatmul.f32.gmra.mxu0 %v1219
    %v1248 = vpop.f32.mrf.mxu0
    %v1249 = vadd.f32 %v122, %v1248
    %1250 = vmatmul.f32.gmra.mxu0 %v1221
    %v1251 = vpop.f32.mrf.mxu0
    %v1252 = vadd.f32 %v123, %v1251
    %1253 = vdwg.mxu0
    %v1254 = vsel %vm230, %v1032, 0
    %v1256 = vsel %vm230, %v1034, 0
    %v1258 = vsel %vm230, %v1072, 0
    %v1260 = vsel %vm230, %v1074, 0
    %v1262 = vsel %vm230, %v1076, 0
    %v1264 = vsel %vm230, %v1078, 0
    %1266 = vmatpush.xpose.msra.mxu0 0.0
    %1267 = vmatpush.xpose.msra.mxu0 0.0
    %1268 = vmatpush.xpose.msra.mxu0 0.0
    %1269 = vmatpush.xpose.msra.mxu0 0.0
    %1270 = vmatpush.xpose.msra.mxu0 0.0
    %1271 = vmatpush.xpose.msra.mxu0 0.0
    %1272 = vmatpush.xpose.msra.mxu0 0.0
    %1273 = vmatpush.xpose.msra.mxu0 0.0
    %1274 = vmatpush.xpose.msra.mxu0 0.0
    %1275 = vmatpush.xpose.msra.mxu0 0.0
    %1276 = vmatpush.xpose.msra.mxu0 0.0
    %1277 = vmatpush.xpose.msra.mxu0 0.0
    %1278 = vmatpush.xpose.msra.mxu0 %v1264
    %1279 = vmatpush.xpose.msra.mxu0 %v1262
    %1280 = vmatpush.xpose.msra.mxu0 %v1260
    %1281 = vmatpush.xpose.msra.mxu0 %v1258
    %1282 = vmatmul.f32.gmra.mxu0 %v1254
    %v1283 = vpop.f32.mrf.mxu0
    %v1284 = vadd.f32 %v122, %v1283
    %1285 = vmatmul.f32.gmra.mxu0 %v1256
    %v1286 = vpop.f32.mrf.mxu0
    %v1287 = vadd.f32 %v123, %v1286
    %1288 = vdwg.mxu0
    %v1289 = vsel %vm827, %v1109, -inf
    %1290 = vmax.xlane.f32.xlu0 %v1289
    %v1291 = vpop.xlane.xlu0 %1290
    %v1292 = vsel %vm827, %v1112, -inf
    %1293 = vmax.xlane.f32.xlu0 %v1292
    %v1294 = vpop.xlane.xlu0 %1293
    %v1295 = vsel %vm827, %v1144, -inf
    %1296 = vmax.xlane.f32.xlu0 %v1295
    %v1297 = vpop.xlane.xlu0 %1296
    %v1298 = vsel %vm827, %v1147, -inf
    %1299 = vmax.xlane.f32.xlu0 %v1298
    %v1300 = vpop.xlane.xlu0 %1299
    %v1301 = vsel %vm827, %v1179, -inf
    %1302 = vmax.xlane.f32.xlu0 %v1301
    %v1303 = vpop.xlane.xlu0 %1302
    %v1304 = vsel %vm827, %v1182, -inf
    %1305 = vmax.xlane.f32.xlu0 %v1304
    %v1306 = vpop.xlane.xlu0 %1305
    %v1307 = vsel %vm827, %v1214, -inf
    %1308 = vmax.xlane.f32.xlu0 %v1307
    %v1309 = vpop.xlane.xlu0 %1308
    %v1310 = vsel %vm827, %v1217, -inf
    %1311 = vmax.xlane.f32.xlu0 %v1310
    %v1312 = vpop.xlane.xlu0 %1311
    %v1313 = vsel %vm827, %v1249, -inf
    %1314 = vmax.xlane.f32.xlu0 %v1313
    %v1315 = vpop.xlane.xlu0 %1314
    %v1316 = vsel %vm827, %v1252, -inf
    %1317 = vmax.xlane.f32.xlu0 %v1316
    %v1318 = vpop.xlane.xlu0 %1317
    %v1319 = vsel %vm827, %v1284, -inf
    %1320 = vmax.xlane.f32.xlu0 %v1319
    %v1321 = vpop.xlane.xlu0 %1320
    %v1322 = vsel %vm827, %v1287, -inf
    %1323 = vmax.xlane.f32.xlu0 %v1322
    %v1324 = vpop.xlane.xlu0 %1323
    %v1325 = vsub.f32 %v1109, %v1291
    %v1326 = vsub.f32 %v1112, %v1294
    %v1327 = vsub.f32 %v1144, %v1297
    %v1328 = vsub.f32 %v1147, %v1300
    %v1329 = vsub.f32 %v1179, %v1303
    %v1330 = vsub.f32 %v1182, %v1306
    %v1331 = vsub.f32 %v1214, %v1309
    %v1332 = vsub.f32 %v1217, %v1312
    %v1333 = vsub.f32 %v1249, %v1315
    %v1334 = vsub.f32 %v1252, %v1318
    %v1335 = vsub.f32 %v1284, %v1321
    %v1336 = vsub.f32 %v1287, %v1324
    %v1337 = vmul.f32 %v1325, 1.442695
    %v1338 = vpow.pop %v1337
    %v1339 = vmul.f32 %v1326, 1.442695
    %v1340 = vpow.pop %v1339
    %v1341 = vmul.f32 %v1327, 1.442695
    %v1342 = vpow.pop %v1341
    %v1343 = vmul.f32 %v1328, 1.442695
    %v1344 = vpow.pop %v1343
    %v1345 = vmul.f32 %v1329, 1.442695
    %v1346 = vpow.pop %v1345
    %v1347 = vmul.f32 %v1330, 1.442695
    %v1348 = vpow.pop %v1347
    %v1349 = vmul.f32 %v1331, 1.442695
    %v1350 = vpow.pop %v1349
    %v1351 = vmul.f32 %v1332, 1.442695
    %v1352 = vpow.pop %v1351
    %v1353 = vmul.f32 %v1333, 1.442695
    %v1354 = vpow.pop %v1353
    %v1355 = vmul.f32 %v1334, 1.442695
    %v1356 = vpow.pop %v1355
    %v1357 = vmul.f32 %v1335, 1.442695
    %v1358 = vpow.pop %v1357
    %v1359 = vmul.f32 %v1336, 1.442695
    %v1360 = vpow.pop %v1359
    %v1361 = vsel %vm827, %v1338, 0.0
    %1362 = vadd.xlane.f32.xlu0 %v1361
    %v1363 = vpop.xlane.xlu0 %1362
    %v1364 = vsel %vm827, %v1340, 0.0
    %1365 = vadd.xlane.f32.xlu0 %v1364
    %v1366 = vpop.xlane.xlu0 %1365
    %v1367 = vsel %vm827, %v1342, 0.0
    %1368 = vadd.xlane.f32.xlu0 %v1367
    %v1369 = vpop.xlane.xlu0 %1368
    %v1370 = vsel %vm827, %v1344, 0.0
    %1371 = vadd.xlane.f32.xlu0 %v1370
    %v1372 = vpop.xlane.xlu0 %1371
    %v1373 = vsel %vm827, %v1346, 0.0
    %1374 = vadd.xlane.f32.xlu0 %v1373
    %v1375 = vpop.xlane.xlu0 %1374
    %v1376 = vsel %vm827, %v1348, 0.0
    %1377 = vadd.xlane.f32.xlu0 %v1376
    %v1378 = vpop.xlane.xlu0 %1377
    %v1379 = vsel %vm827, %v1350, 0.0
    %1380 = vadd.xlane.f32.xlu0 %v1379
    %v1381 = vpop.xlane.xlu0 %1380
    %v1382 = vsel %vm827, %v1352, 0.0
    %1383 = vadd.xlane.f32.xlu0 %v1382
    %v1384 = vpop.xlane.xlu0 %1383
    %v1385 = vsel %vm827, %v1354, 0.0
    %1386 = vadd.xlane.f32.xlu0 %v1385
    %v1387 = vpop.xlane.xlu0 %1386
    %v1388 = vsel %vm827, %v1356, 0.0
    %1389 = vadd.xlane.f32.xlu0 %v1388
    %v1390 = vpop.xlane.xlu0 %1389
    %v1391 = vsel %vm827, %v1358, 0.0
    %1392 = vadd.xlane.f32.xlu0 %v1391
    %v1393 = vpop.xlane.xlu0 %1392
    %v1394 = vsel %vm827, %v1360, 0.0
    %1395 = vadd.xlane.f32.xlu0 %v1394
    %v1396 = vpop.xlane.xlu0 %1395
    %v1397 = vrcp.pop %v1363
    %v1398 = vrcp.pop %v1366
    %v1399 = vrcp.pop %v1369
    %v1400 = vrcp.pop %v1372
    %v1401 = vrcp.pop %v1375
    %v1402 = vrcp.pop %v1378
    %v1403 = vrcp.pop %v1381
    %v1404 = vrcp.pop %v1384
    %v1405 = vrcp.pop %v1387
    %v1406 = vrcp.pop %v1390
    %v1407 = vrcp.pop %v1393
    %v1408 = vrcp.pop %v1396
    %v1409 = vmul.f32 %v1338, %v1397
    %v1410 = vmul.f32 %v1340, %v1398
    %v1411 = vmul.f32 %v1342, %v1399
    %v1412 = vmul.f32 %v1344, %v1400
    %v1413 = vmul.f32 %v1346, %v1401
    %v1414 = vmul.f32 %v1348, %v1402
    %v1415 = vmul.f32 %v1350, %v1403
    %v1416 = vmul.f32 %v1352, %v1404
    %v1417 = vmul.f32 %v1354, %v1405
    %v1418 = vmul.f32 %v1356, %v1406
    %v1419 = vmul.f32 %v1358, %v1407
    %v1420 = vmul.f32 %v1360, %v1408
    %1421 = vrot.lane.b32.xlu0 %v1002, 80
    %v1422 = vpop.permute.xlu0 %1421
    %1423 = vrot.lane.b32.xlu0 %v1005, 80
    %v1424 = vpop.permute.xlu0 %1423
    %1425 = vrot.lane.b32.xlu0 %v1008, 80
    %v1426 = vpop.permute.xlu0 %1425
    %1427 = vrot.lane.b32.xlu0 %v1011, 80
    %v1428 = vpop.permute.xlu0 %1427
    %v1434 = vsel %vm827, %v1409, 0
    %v1437 = vsel %vm827, %v1410, 0
    %1439 = vmatpush.msra.mxu0 0.0
    %1440 = vmatpush.msra.mxu0 0.0
    %1441 = vmatpush.msra.mxu0 0.0
    %1442 = vmatpush.msra.mxu0 0.0
    %1443 = vmatpush.msra.mxu0 0.0
    %1444 = vmatpush.msra.mxu0 0.0
    %1445 = vmatpush.msra.mxu0 0.0
    %1446 = vmatpush.msra.mxu0 0.0
    %1447 = vmatpush.msra.mxu0 0.0
    %1448 = vmatpush.msra.mxu0 0.0
    %1449 = vmatpush.msra.mxu0 0.0
    %1450 = vmatpush.msra.mxu0 0.0
    %1451 = vmatpush.msra.mxu0 %v1428
    %1452 = vmatpush.msra.mxu0 %v1426
    %1453 = vmatpush.msra.mxu0 %v1424
    %1454 = vmatpush.msra.mxu0 %v1422
    %1455 = vmatmul.f32.gmra.mxu0 %v1434
    %v1456 = vpop.f32.mrf.mxu0
    %v1457 = vadd.f32 0.0, %v1456
    %1458 = vmatmul.f32.gmra.mxu0 %v1437
    %v1459 = vpop.f32.mrf.mxu0
    %v1460 = vadd.f32 0.0, %v1459
    %1461 = vdwg.mxu0
    %1462 = vrot.lane.b32.xlu0 %v1040, 80
    %v1463 = vpop.permute.xlu0 %1462
    %1464 = vrot.lane.b32.xlu0 %v1042, 80
    %v1465 = vpop.permute.xlu0 %1464
    %1466 = vrot.lane.b32.xlu0 %v1044, 80
    %v1467 = vpop.permute.xlu0 %1466
    %1468 = vrot.lane.b32.xlu0 %v1046, 80
    %v1469 = vpop.permute.xlu0 %1468
    %v1475 = vsel %vm827, %v1411, 0
    %v1478 = vsel %vm827, %v1412, 0
    %1480 = vmatpush.msra.mxu0 0.0
    %1481 = vmatpush.msra.mxu0 0.0
    %1482 = vmatpush.msra.mxu0 0.0
    %1483 = vmatpush.msra.mxu0 0.0
    %1484 = vmatpush.msra.mxu0 0.0
    %1485 = vmatpush.msra.mxu0 0.0
    %1486 = vmatpush.msra.mxu0 0.0
    %1487 = vmatpush.msra.mxu0 0.0
    %1488 = vmatpush.msra.mxu0 0.0
    %1489 = vmatpush.msra.mxu0 0.0
    %1490 = vmatpush.msra.mxu0 0.0
    %1491 = vmatpush.msra.mxu0 0.0
    %1492 = vmatpush.msra.mxu0 %v1469
    %1493 = vmatpush.msra.mxu0 %v1467
    %1494 = vmatpush.msra.mxu0 %v1465
    %1495 = vmatpush.msra.mxu0 %v1463
    %1496 = vmatmul.f32.gmra.mxu0 %v1475
    %v1497 = vpop.f32.mrf.mxu0
    %v1498 = vadd.f32 0.0, %v1497
    %1499 = vmatmul.f32.gmra.mxu0 %v1478
    %v1500 = vpop.f32.mrf.mxu0
    %v1501 = vadd.f32 0.0, %v1500
    %1502 = vdwg.mxu0
    %1503 = vrot.lane.b32.xlu0 %v1048, 80
    %v1504 = vpop.permute.xlu0 %1503
    %1505 = vrot.lane.b32.xlu0 %v1050, 80
    %v1506 = vpop.permute.xlu0 %1505
    %1507 = vrot.lane.b32.xlu0 %v1052, 80
    %v1508 = vpop.permute.xlu0 %1507
    %1509 = vrot.lane.b32.xlu0 %v1054, 80
    %v1510 = vpop.permute.xlu0 %1509
    %v1516 = vsel %vm827, %v1413, 0
    %v1519 = vsel %vm827, %v1414, 0
    %1521 = vmatpush.msra.mxu0 0.0
    %1522 = vmatpush.msra.mxu0 0.0
    %1523 = vmatpush.msra.mxu0 0.0
    %1524 = vmatpush.msra.mxu0 0.0
    %1525 = vmatpush.msra.mxu0 0.0
    %1526 = vmatpush.msra.mxu0 0.0
    %1527 = vmatpush.msra.mxu0 0.0
    %1528 = vmatpush.msra.mxu0 0.0
    %1529 = vmatpush.msra.mxu0 0.0
    %1530 = vmatpush.msra.mxu0 0.0
    %1531 = vmatpush.msra.mxu0 0.0
    %1532 = vmatpush.msra.mxu0 0.0
    %1533 = vmatpush.msra.mxu0 %v1510
    %1534 = vmatpush.msra.mxu0 %v1508
    %1535 = vmatpush.msra.mxu0 %v1506
    %1536 = vmatpush.msra.mxu0 %v1504
    %1537 = vmatmul.f32.gmra.mxu0 %v1516
    %v1538 = vpop.f32.mrf.mxu0
    %v1539 = vadd.f32 0.0, %v1538
    %1540 = vmatmul.f32.gmra.mxu0 %v1519
    %v1541 = vpop.f32.mrf.mxu0
    %v1542 = vadd.f32 0.0, %v1541
    %1543 = vdwg.mxu0
    %1544 = vrot.lane.b32.xlu0 %v1056, 80
    %v1545 = vpop.permute.xlu0 %1544
    %1546 = vrot.lane.b32.xlu0 %v1058, 80
    %v1547 = vpop.permute.xlu0 %1546
    %1548 = vrot.lane.b32.xlu0 %v1060, 80
    %v1549 = vpop.permute.xlu0 %1548
    %1550 = vrot.lane.b32.xlu0 %v1062, 80
    %v1551 = vpop.permute.xlu0 %1550
    %v1557 = vsel %vm827, %v1415, 0
    %v1560 = vsel %vm827, %v1416, 0
    %1562 = vmatpush.msra.mxu0 0.0
    %1563 = vmatpush.msra.mxu0 0.0
    %1564 = vmatpush.msra.mxu0 0.0
    %1565 = vmatpush.msra.mxu0 0.0
    %1566 = vmatpush.msra.mxu0 0.0
    %1567 = vmatpush.msra.mxu0 0.0
    %1568 = vmatpush.msra.mxu0 0.0
    %1569 = vmatpush.msra.mxu0 0.0
    %1570 = vmatpush.msra.mxu0 0.0
    %1571 = vmatpush.msra.mxu0 0.0
    %1572 = vmatpush.msra.mxu0 0.0
    %1573 = vmatpush.msra.mxu0 0.0
    %1574 = vmatpush.msra.mxu0 %v1551
    %1575 = vmatpush.msra.mxu0 %v1549
    %1576 = vmatpush.msra.mxu0 %v1547
    %1577 = vmatpush.msra.mxu0 %v1545
    %1578 = vmatmul.f32.gmra.mxu0 %v1557
    %v1579 = vpop.f32.mrf.mxu0
    %v1580 = vadd.f32 0.0, %v1579
    %1581 = vmatmul.f32.gmra.mxu0 %v1560
    %v1582 = vpop.f32.mrf.mxu0
    %v1583 = vadd.f32 0.0, %v1582
    %1584 = vdwg.mxu0
    %1585 = vrot.lane.b32.xlu0 %v1064, 80
    %v1586 = vpop.permute.xlu0 %1585
    %1587 = vrot.lane.b32.xlu0 %v1066, 80
    %v1588 = vpop.permute.xlu0 %1587
    %1589 = vrot.lane.b32.xlu0 %v1068, 80
    %v1590 = vpop.permute.xlu0 %1589
    %1591 = vrot.lane.b32.xlu0 %v1070, 80
    %v1592 = vpop.permute.xlu0 %1591
    %v1598 = vsel %vm827, %v1417, 0
    %v1601 = vsel %vm827, %v1418, 0
    %1603 = vmatpush.msra.mxu0 0.0
    %1604 = vmatpush.msra.mxu0 0.0
    %1605 = vmatpush.msra.mxu0 0.0
    %1606 = vmatpush.msra.mxu0 0.0
    %1607 = vmatpush.msra.mxu0 0.0
    %1608 = vmatpush.msra.mxu0 0.0
    %1609 = vmatpush.msra.mxu0 0.0
    %1610 = vmatpush.msra.mxu0 0.0
    %1611 = vmatpush.msra.mxu0 0.0
    %1612 = vmatpush.msra.mxu0 0.0
    %1613 = vmatpush.msra.mxu0 0.0
    %1614 = vmatpush.msra.mxu0 0.0
    %1615 = vmatpush.msra.mxu0 %v1592
    %1616 = vmatpush.msra.mxu0 %v1590
    %1617 = vmatpush.msra.mxu0 %v1588
    %1618 = vmatpush.msra.mxu0 %v1586
    %1619 = vmatmul.f32.gmra.mxu0 %v1598
    %v1620 = vpop.f32.mrf.mxu0
    %v1621 = vadd.f32 0.0, %v1620
    %1622 = vmatmul.f32.gmra.mxu0 %v1601
    %v1623 = vpop.f32.mrf.mxu0
    %v1624 = vadd.f32 0.0, %v1623
    %1625 = vdwg.mxu0
    %1626 = vrot.lane.b32.xlu0 %v1072, 80
    %v1627 = vpop.permute.xlu0 %1626
    %1628 = vrot.lane.b32.xlu0 %v1074, 80
    %v1629 = vpop.permute.xlu0 %1628
    %1630 = vrot.lane.b32.xlu0 %v1076, 80
    %v1631 = vpop.permute.xlu0 %1630
    %1632 = vrot.lane.b32.xlu0 %v1078, 80
    %v1633 = vpop.permute.xlu0 %1632
    %v1639 = vsel %vm827, %v1419, 0
    %v1642 = vsel %vm827, %v1420, 0
    %1644 = vmatpush.msra.mxu0 0.0
    %1645 = vmatpush.msra.mxu0 0.0
    %1646 = vmatpush.msra.mxu0 0.0
    %1647 = vmatpush.msra.mxu0 0.0
    %1648 = vmatpush.msra.mxu0 0.0
    %1649 = vmatpush.msra.mxu0 0.0
    %1650 = vmatpush.msra.mxu0 0.0
    %1651 = vmatpush.msra.mxu0 0.0
    %1652 = vmatpush.msra.mxu0 0.0
    %1653 = vmatpush.msra.mxu0 0.0
    %1654 = vmatpush.msra.mxu0 0.0
    %1655 = vmatpush.msra.mxu0 0.0
    %1656 = vmatpush.msra.mxu0 %v1633
    %1657 = vmatpush.msra.mxu0 %v1631
    %1658 = vmatpush.msra.mxu0 %v1629
    %1659 = vmatpush.msra.mxu0 %v1627
    %1660 = vmatmul.f32.gmra.mxu0 %v1639
    %v1661 = vpop.f32.mrf.mxu0
    %v1662 = vadd.f32 0.0, %v1661
    %1663 = vmatmul.f32.gmra.mxu0 %v1642
    %v1664 = vpop.f32.mrf.mxu0
    %v1665 = vadd.f32 0.0, %v1664
    %1666 = vdwg.mxu0
    %1669 = vrot.lane.b32.xlu0 %v1498, 8
    %v1670 = vpop.permute.xlu0 %1669
    %1671 = vrot.lane.b32.xlu0 %v1501, 8
    %v1672 = vpop.permute.xlu0 %1671
    %1677 = vrot.lane.b32.xlu0 %v1539, 16
    %v1678 = vpop.permute.xlu0 %1677
    %1679 = vrot.lane.b32.xlu0 %v1542, 16
    %v1680 = vpop.permute.xlu0 %1679
    %1685 = vrot.lane.b32.xlu0 %v1580, 24
    %v1686 = vpop.permute.xlu0 %1685
    %1687 = vrot.lane.b32.xlu0 %v1583, 24
    %v1688 = vpop.permute.xlu0 %1687
    %1693 = vrot.lane.b32.xlu0 %v1621, 32
    %v1694 = vpop.permute.xlu0 %1693
    %1695 = vrot.lane.b32.xlu0 %v1624, 32
    %v1696 = vpop.permute.xlu0 %1695
    %1701 = vrot.lane.b32.xlu0 %v1662, 40
    %v1702 = vpop.permute.xlu0 %1701
    %1703 = vrot.lane.b32.xlu0 %v1665, 40
    %v1704 = vpop.permute.xlu0 %1703
    %v1707 = vsel %vm230, %v1457, %v1670
    %v1708 = vsel %vm230, %v1460, %v1672
    %v1709 = vsel %vm437, %v1707, %v1678
    %v1710 = vsel %vm437, %v1708, %v1680
    %v1711 = vsel %vm824, %v1709, %v1686
    %v1712 = vsel %vm824, %v1710, %v1688
    %v1713 = vsel %vm827, %v1711, %v1694
    %v1714 = vsel %vm827, %v1712, %v1696
    %v1715 = vsel %vm830, %v1713, %v1702
    %v1716 = vsel %vm830, %v1714, %v1704
    %s1717 = scalar_lea.vmem [#allocation7], 96
    %v1718 = vld [vmem:[%s1717] sm:$0xff]
    %v1719 = vld [vmem:[%s1717 + $0x8] sm:$0xff]
    %v1720 = vld [vmem:[%s1717 + $0x10] sm:$0xff]
    %v1721 = vld [vmem:[%s1717 + $0x18] sm:$0xff]
    %v1722 = vld [vmem:[%s1717 + $0x20] sm:$0xff]
    %v1723 = vld [vmem:[%s1717 + $0x28] sm:$0xff]
    %v1724 = vperm.slane %v124, 4
    %v1726 = vsel %vm141, %v1715, 0
    %v1729 = vsel %vm141, %v1716, 0
    %1731 = vmatpush.msra.mxu0 0.0
    %1732 = vmatpush.msra.mxu0 0.0
    %1733 = vmatpush.msra.mxu0 0.0
    %1734 = vmatpush.msra.mxu0 0.0
    %1735 = vmatpush.msra.mxu0 0.0
    %1736 = vmatpush.msra.mxu0 0.0
    %1737 = vmatpush.msra.mxu0 0.0
    %1738 = vmatpush.msra.mxu0 0.0
    %1739 = vmatpush.msra.mxu0 0.0
    %1740 = vmatpush.msra.mxu0 0.0
    %1741 = vmatpush.msra.mxu0 %v1723
    %1742 = vmatpush.msra.mxu0 %v1722
    %1743 = vmatpush.msra.mxu0 %v1721
    %1744 = vmatpush.msra.mxu0 %v1720
    %1745 = vmatpush.msra.mxu0 %v1719
    %1746 = vmatpush.msra.mxu0 %v1718
    %1747 = vmatmul.f32.gmra.mxu0 %v1726
    %v1748 = vpop.f32.mrf.mxu0
    %v1749 = vadd.f32 %v1724, %v1748
    %1750 = vmatmul.f32.gmra.mxu0 %v1729
    %v1751 = vpop.f32.mrf.mxu0
    %v1752 = vadd.f32 %v1724, %v1751
    %1753 = vdwg.mxu0
    %v1754 = vadd.f32 %v926, %v1749
    %v1755 = vadd.f32 %v927, %v1752
    %v1756 = vsel %vm141, %v1754, 0.0
    %1757 = vadd.xlane.f32.xlu0 %v1756
    %v1758 = vpop.xlane.xlu0 %1757
    %v1759 = vsel %vm141, %v1755, 0.0
    %1760 = vadd.xlane.f32.xlu0 %v1759
    %v1761 = vpop.xlane.xlu0 %1760
    %v1762 = vmul.f32 %v1758, %v883
    %v1763 = vmul.f32 %v1761, %v883
    %v1764 = vsub.f32 %v1754, %v1762
    %v1765 = vsub.f32 %v1755, %v1763
    %v1766 = vmul.f32 %v1764, %v1764
    %v1767 = vmul.f32 %v1765, %v1765
    %v1768 = vsel %vm141, %v1766, 0.0
    %1769 = vadd.xlane.f32.xlu0 %v1768
    %v1770 = vpop.xlane.xlu0 %1769
    %v1771 = vsel %vm141, %v1767, 0.0
    %1772 = vadd.xlane.f32.xlu0 %v1771
    %v1773 = vpop.xlane.xlu0 %1772
    %v1774 = vmul.f32 %v1770, %v883
    %v1775 = vmul.f32 %v1773, %v883
    %v1776 = vadd.f32 %v1774, 1e-05
    %v1777 = vadd.f32 %v1775, 1e-05
    %v1778 = vrsqrt.pop %v1776
    %v1779 = vmul.f32 %v1778, %v1776
    %v1780 = vmul.f32 %v1779, %v1778
    %v1781 = vmul.f32 0.5, %v1780
    %v1782 = vsub.f32 1.5, %v1781
    %v1783 = vmul.f32 %v1778, %v1782
    %vm1784 = vweird.f32 %v1776
    %vm1785 = vweird.f32 %v1778
    %vm1786 = vmor %vm1784, %vm1785
    %v1787 = vsel %vm1786, %v1778, %v1783
    %v1788 = vrsqrt.pop %v1777
    %v1789 = vmul.f32 %v1788, %v1777
    %v1790 = vmul.f32 %v1789, %v1788
    %v1791 = vmul.f32 0.5, %v1790
    %v1792 = vsub.f32 1.5, %v1791
    %v1793 = vmul.f32 %v1788, %v1792
    %vm1794 = vweird.f32 %v1777
    %vm1795 = vweird.f32 %v1788
    %vm1796 = vmor %vm1794, %vm1795
    %v1797 = vsel %vm1796, %v1788, %v1793
    %v1798 = vmul.f32 %v1764, %v1787
    %v1799 = vmul.f32 %v1765, %v1797
    %v1800 = vperm.slane %v126, 1
    %v1801 = vmul.f32 %v1798, %v1800
    %v1802 = vmul.f32 %v1799, %v1800
    %v1803 = vperm.slane %v126, 2
    %v1804 = vadd.f32 %v1801, %v1803
    %v1805 = vadd.f32 %v1802, %v1803
    %v1806 = vld [vmem:[#allocation10] sm:$0xff]
    %v1807 = vld [vmem:[#allocation10 + $0x8] sm:$0xff]
    %v1808 = vld [vmem:[#allocation10 + $0x10] sm:$0xff]
    %v1809 = vld [vmem:[#allocation10 + $0x18] sm:$0xff]
    %v1810 = vld [vmem:[#allocation10 + $0x20] sm:$0xff]
    %v1811 = vld [vmem:[#allocation10 + $0x28] sm:$0xff]
    %v1812 = vperm.slane %v124, 5
    %v1814 = vsel %vm141, %v1804, 0
    %v1817 = vsel %vm141, %v1805, 0
    %1819 = vmatpush.msra.mxu0 0.0
    %1820 = vmatpush.msra.mxu0 0.0
    %1821 = vmatpush.msra.mxu0 0.0
    %1822 = vmatpush.msra.mxu0 0.0
    %1823 = vmatpush.msra.mxu0 0.0
    %1824 = vmatpush.msra.mxu0 0.0
    %1825 = vmatpush.msra.mxu0 0.0
    %1826 = vmatpush.msra.mxu0 0.0
    %1827 = vmatpush.msra.mxu0 0.0
    %1828 = vmatpush.msra.mxu0 0.0
    %1829 = vmatpush.msra.mxu0 %v1811
    %1830 = vmatpush.msra.mxu0 %v1810
    %1831 = vmatpush.msra.mxu0 %v1809
    %1832 = vmatpush.msra.mxu0 %v1808
    %1833 = vmatpush.msra.mxu0 %v1807
    %1834 = vmatpush.msra.mxu0 %v1806
    %1835 = vmatmul.f32.gmra.mxu0 %v1814
    %v1836 = vpop.f32.mrf.mxu0
    %v1837 = vadd.f32 %v1812, %v1836
    %1838 = vmatmul.f32.gmra.mxu0 %v1817
    %v1839 = vpop.f32.mrf.mxu0
    %v1840 = vadd.f32 %v1812, %v1839
    %1841 = vdwg.mxu0
    %v1842 = vmax.f32 %v1837, 0.0
    %v1843 = vmax.f32 %v1840, 0.0
    %v1844 = vld [vmem:[%s8] sm:$0xff]
    %v1845 = vld [vmem:[%s8 + $0x8] sm:$0xff]
    %v1846 = vld [vmem:[%s8 + $0x10] sm:$0xff]
    %v1847 = vld [vmem:[%s8 + $0x18] sm:$0xff]
    %v1848 = vld [vmem:[%s8 + $0x20] sm:$0xff]
    %v1849 = vld [vmem:[%s8 + $0x28] sm:$0xff]
    %v1850 = vld [vmem:[%s8 + $0x30] sm:$0xff]
    %v1851 = vld [vmem:[%s8 + $0x38] sm:$0xff]
    %v1852 = vperm.slane %v124, 6
    %vm1853 = vcmask 523264
    %v1855 = vsel %vm1853, %v1842, 0
    %v1858 = vsel %vm1853, %v1843, 0
    %1860 = vmatpush.msra.mxu0 0.0
    %1861 = vmatpush.msra.mxu0 0.0
    %1862 = vmatpush.msra.mxu0 0.0
    %1863 = vmatpush.msra.mxu0 0.0
    %1864 = vmatpush.msra.mxu0 0.0
    %1865 = vmatpush.msra.mxu0 0.0
    %1866 = vmatpush.msra.mxu0 0.0
    %1867 = vmatpush.msra.mxu0 0.0
    %1868 = vmatpush.msra.mxu0 %v1851
    %1869 = vmatpush.msra.mxu0 %v1850
    %1870 = vmatpush.msra.mxu0 %v1849
    %1871 = vmatpush.msra.mxu0 %v1848
    %1872 = vmatpush.msra.mxu0 %v1847
    %1873 = vmatpush.msra.mxu0 %v1846
    %1874 = vmatpush.msra.mxu0 %v1845
    %1875 = vmatpush.msra.mxu0 %v1844
    %1876 = vmatmul.f32.gmra.mxu0 %v1855
    %v1877 = vpop.f32.mrf.mxu0
    %v1878 = vadd.f32 %v1852, %v1877
    %1879 = vmatmul.f32.gmra.mxu0 %v1858
    %v1880 = vpop.f32.mrf.mxu0
    %v1881 = vadd.f32 %v1852, %v1880
    %1882 = vdwg.mxu0
    %v1883 = vadd.f32 %v1804, %v1878
    %v1884 = vadd.f32 %v1805, %v1881
    %v1885 = vsel %vm141, %v1883, 0.0
    %1886 = vadd.xlane.f32.xlu0 %v1885
    %v1887 = vpop.xlane.xlu0 %1886
    %v1888 = vsel %vm141, %v1884, 0.0
    %1889 = vadd.xlane.f32.xlu0 %v1888
    %v1890 = vpop.xlane.xlu0 %1889
    %v1891 = vmul.f32 %v1887, %v883
    %v1892 = vmul.f32 %v1890, %v883
    %v1893 = vsub.f32 %v1883, %v1891
    %v1894 = vsub.f32 %v1884, %v1892
    %v1895 = vmul.f32 %v1893, %v1893
    %v1896 = vmul.f32 %v1894, %v1894
    %v1897 = vsel %vm141, %v1895, 0.0
    %1898 = vadd.xlane.f32.xlu0 %v1897
    %v1899 = vpop.xlane.xlu0 %1898
    %v1900 = vsel %vm141, %v1896, 0.0
    %1901 = vadd.xlane.f32.xlu0 %v1900
    %v1902 = vpop.xlane.xlu0 %1901
    %v1903 = vmul.f32 %v1899, %v883
    %v1904 = vmul.f32 %v1902, %v883
    %v1905 = vadd.f32 %v1903, 1e-05
    %v1906 = vadd.f32 %v1904, 1e-05
    %v1907 = vrsqrt.pop %v1905
    %v1908 = vmul.f32 %v1907, %v1905
    %v1909 = vmul.f32 %v1908, %v1907
    %v1910 = vmul.f32 0.5, %v1909
    %v1911 = vsub.f32 1.5, %v1910
    %v1912 = vmul.f32 %v1907, %v1911
    %vm1913 = vweird.f32 %v1905
    %vm1914 = vweird.f32 %v1907
    %vm1915 = vmor %vm1913, %vm1914
    %v1916 = vsel %vm1915, %v1907, %v1912
    %v1917 = vrsqrt.pop %v1906
    %v1918 = vmul.f32 %v1917, %v1906
    %v1919 = vmul.f32 %v1918, %v1917
    %v1920 = vmul.f32 0.5, %v1919
    %v1921 = vsub.f32 1.5, %v1920
    %v1922 = vmul.f32 %v1917, %v1921
    %vm1923 = vweird.f32 %v1906
    %vm1924 = vweird.f32 %v1917
    %vm1925 = vmor %vm1923, %vm1924
    %v1926 = vsel %vm1925, %v1917, %v1922
    %v1927 = vmul.f32 %v1893, %v1916
    %v1928 = vmul.f32 %v1894, %v1926
    %v1929 = vperm.slane %v126, 3
    %v1930 = vmul.f32 %v1927, %v1929
    %v1931 = vmul.f32 %v1928, %v1929
    %v1932 = vperm.slane %v126, 4
    %v1933 = vadd.f32 %v1930, %v1932
    %v1934 = vadd.f32 %v1931, %v1932
    %s1935 = scalar_lea.vmem %s9, 32
    %v1936 = vld [vmem:[%s1935] sm:$0xff]
    %v1937 = vld [vmem:[%s1935 + $0x8] sm:$0xff]
    %v1938 = vld [vmem:[%s1935 + $0x10] sm:$0x1f]
    %s1939 = scalar_lea.vmem %s4, 96
    %v1940 = vld [vmem:[%s1939] sm:$0xff]
    %v1941 = vld [vmem:[%s1939 + $0x8] sm:$0xff]
    %v1942 = vld [vmem:[%s1939 + $0x10] sm:$0xff]
    %v1943 = vld [vmem:[%s1939 + $0x18] sm:$0xff]
    %v1944 = vld [vmem:[%s1939 + $0x20] sm:$0xff]
    %v1945 = vld [vmem:[%s1939 + $0x28] sm:$0xff]
    %v1946 = vld [vmem:[%s1939 + $0x30] sm:$0xff]
    %v1947 = vld [vmem:[%s1939 + $0x38] sm:$0xff]
    %v1948 = vld [vmem:[%s1939 + $0x40] sm:$0xff]
    %v1949 = vld [vmem:[%s1939 + $0x48] sm:$0xff]
    %v1950 = vld [vmem:[%s1939 + $0x50] sm:$0xff]
    %v1951 = vld [vmem:[%s1939 + $0x58] sm:$0xff]
    %v1952 = vperm.slane %v1936, 0
    %v1953 = vperm.slane %v1937, 0
    %v1955 = vsel %vm141, %v1933, 0
    %v1958 = vsel %vm141, %v1934, 0
    %1960 = vmatpush.msra.mxu0 0.0
    %1961 = vmatpush.msra.mxu0 0.0
    %1962 = vmatpush.msra.mxu0 0.0
    %1963 = vmatpush.msra.mxu0 0.0
    %1964 = vmatpush.msra.mxu0 0.0
    %1965 = vmatpush.msra.mxu0 0.0
    %1966 = vmatpush.msra.mxu0 0.0
    %1967 = vmatpush.msra.mxu0 0.0
    %1968 = vmatpush.msra.mxu0 0.0
    %1969 = vmatpush.msra.mxu0 0.0
    %1970 = vmatpush.msra.mxu0 %v1950
    %1971 = vmatpush.msra.mxu0 %v1948
    %1972 = vmatpush.msra.mxu0 %v1946
    %1973 = vmatpush.msra.mxu0 %v1944
    %1974 = vmatpush.msra.mxu0 %v1942
    %1975 = vmatpush.msra.mxu0 %v1940
    %1976 = vmatmul.f32.gmra.mxu0 %v1955
    %v1977 = vpop.f32.mrf.mxu0
    %v1978 = vadd.f32 %v1952, %v1977
    %1979 = vmatmul.f32.gmra.mxu0 %v1958
    %v1980 = vpop.f32.mrf.mxu0
    %v1981 = vadd.f32 %v1952, %v1980
    %1982 = vdwg.mxu0
    %1983 = vmatpush.msra.mxu0 0.0
    %1984 = vmatpush.msra.mxu0 0.0
    %1985 = vmatpush.msra.mxu0 0.0
    %1986 = vmatpush.msra.mxu0 0.0
    %1987 = vmatpush.msra.mxu0 0.0
    %1988 = vmatpush.msra.mxu0 0.0
    %1989 = vmatpush.msra.mxu0 0.0
    %1990 = vmatpush.msra.mxu0 0.0
    %1991 = vmatpush.msra.mxu0 0.0
    %1992 = vmatpush.msra.mxu0 0.0
    %1993 = vmatpush.msra.mxu0 %v1951
    %1994 = vmatpush.msra.mxu0 %v1949
    %1995 = vmatpush.msra.mxu0 %v1947
    %1996 = vmatpush.msra.mxu0 %v1945
    %1997 = vmatpush.msra.mxu0 %v1943
    %1998 = vmatpush.msra.mxu0 %v1941
    %1999 = vmatmul.f32.gmra.mxu0 %v1955
    %v2000 = vpop.f32.mrf.mxu0
    %v2001 = vadd.f32 %v1953, %v2000
    %2002 = vmatmul.f32.gmra.mxu0 %v1958
    %v2003 = vpop.f32.mrf.mxu0
    %v2004 = vadd.f32 %v1953, %v2003
    %2005 = vdwg.mxu0
    %2008 = vrot.lane.b32.xlu0 %v1978, 120
    %v2009 = vpop.permute.xlu0 %2008
    %2010 = vrot.lane.b32.xlu0 %v1981, 120
    %v2011 = vpop.permute.xlu0 %2010
    %2012 = vrot.lane.b32.xlu0 %v1978, 112
    %v2013 = vpop.permute.xlu0 %2012
    %2014 = vrot.lane.b32.xlu0 %v1981, 112
    %v2015 = vpop.permute.xlu0 %2014
    %2016 = vrot.lane.b32.xlu0 %v1978, 104
    %v2017 = vpop.permute.xlu0 %2016
    %2018 = vrot.lane.b32.xlu0 %v1981, 104
    %v2019 = vpop.permute.xlu0 %2018
    %2020 = vrot.lane.b32.xlu0 %v1978, 96
    %v2021 = vpop.permute.xlu0 %2020
    %2022 = vrot.lane.b32.xlu0 %v1981, 96
    %v2023 = vpop.permute.xlu0 %2022
    %2024 = vrot.lane.b32.xlu0 %v1978, 88
    %v2025 = vpop.permute.xlu0 %2024
    %2026 = vrot.lane.b32.xlu0 %v1981, 88
    %v2027 = vpop.permute.xlu0 %2026
    %2030 = vrot.lane.b32.xlu0 %v2001, 96
    %v2031 = vpop.permute.xlu0 %2030
    %2032 = vrot.lane.b32.xlu0 %v2004, 96
    %v2033 = vpop.permute.xlu0 %2032
    %2034 = vrot.lane.b32.xlu0 %v2001, 88
    %v2035 = vpop.permute.xlu0 %2034
    %2036 = vrot.lane.b32.xlu0 %v2004, 88
    %v2037 = vpop.permute.xlu0 %2036
    %2038 = vrot.lane.b32.xlu0 %v1978, 80
    %v2039 = vpop.permute.xlu0 %2038
    %2040 = vrot.lane.b32.xlu0 %v1981, 80
    %v2041 = vpop.permute.xlu0 %2040
    %v2042 = vsel %vm230, %v1978, 0
    %v2044 = vsel %vm230, %v1981, 0
    %v2046 = vsel %vm230, %v2039, 0
    %v2048 = vsel %vm230, %v2041, 0
    %2050 = vmatpush.xpose.msra.mxu0 0.0
    %2051 = vmatpush.xpose.msra.mxu0 0.0
    %2052 = vmatpush.xpose.msra.mxu0 0.0
    %2053 = vmatpush.xpose.msra.mxu0 0.0
    %2054 = vmatpush.xpose.msra.mxu0 0.0
    %2055 = vmatpush.xpose.msra.mxu0 0.0
    %2056 = vmatpush.xpose.msra.mxu0 0.0
    %2057 = vmatpush.xpose.msra.mxu0 0.0
    %2058 = vmatpush.xpose.msra.mxu0 0.0
    %2059 = vmatpush.xpose.msra.mxu0 0.0
    %2060 = vmatpush.xpose.msra.mxu0 0.0
    %2061 = vmatpush.xpose.msra.mxu0 0.0
    %2062 = vmatpush.xpose.msra.mxu0 0.0
    %2063 = vmatpush.xpose.msra.mxu0 0.0
    %2064 = vmatpush.xpose.msra.mxu0 %v2048
    %2065 = vmatpush.xpose.msra.mxu0 %v2046
    %2066 = vmatmul.f32.gmra.mxu0 %v2042
    %v2067 = vpop.f32.mrf.mxu0
    %v2068 = vadd.f32 %v120, %v2067
    %2069 = vmatmul.f32.gmra.mxu0 %v2044
    %v2070 = vpop.f32.mrf.mxu0
    %v2071 = vadd.f32 %v121, %v2070
    %2072 = vdwg.mxu0
    %2073 = vrot.lane.b32.xlu0 %v2009, 80
    %v2074 = vpop.permute.xlu0 %2073
    %2075 = vrot.lane.b32.xlu0 %v2011, 80
    %v2076 = vpop.permute.xlu0 %2075
    %v2077 = vsel %vm230, %v2009, 0
    %v2079 = vsel %vm230, %v2011, 0
    %v2081 = vsel %vm230, %v2074, 0
    %v2083 = vsel %vm230, %v2076, 0
    %2085 = vmatpush.xpose.msra.mxu0 0.0
    %2086 = vmatpush.xpose.msra.mxu0 0.0
    %2087 = vmatpush.xpose.msra.mxu0 0.0
    %2088 = vmatpush.xpose.msra.mxu0 0.0
    %2089 = vmatpush.xpose.msra.mxu0 0.0
    %2090 = vmatpush.xpose.msra.mxu0 0.0
    %2091 = vmatpush.xpose.msra.mxu0 0.0
    %2092 = vmatpush.xpose.msra.mxu0 0.0
    %2093 = vmatpush.xpose.msra.mxu0 0.0
    %2094 = vmatpush.xpose.msra.mxu0 0.0
    %2095 = vmatpush.xpose.msra.mxu0 0.0
    %2096 = vmatpush.xpose.msra.mxu0 0.0
    %2097 = vmatpush.xpose.msra.mxu0 0.0
    %2098 = vmatpush.xpose.msra.mxu0 0.0
    %2099 = vmatpush.xpose.msra.mxu0 %v2083
    %2100 = vmatpush.xpose.msra.mxu0 %v2081
    %2101 = vmatmul.f32.gmra.mxu0 %v2077
    %v2102 = vpop.f32.mrf.mxu0
    %v2103 = vadd.f32 %v120, %v2102
    %2104 = vmatmul.f32.gmra.mxu0 %v2079
    %v2105 = vpop.f32.mrf.mxu0
    %v2106 = vadd.f32 %v121, %v2105
    %2107 = vdwg.mxu0
    %2108 = vrot.lane.b32.xlu0 %v2013, 80
    %v2109 = vpop.permute.xlu0 %2108
    %2110 = vrot.lane.b32.xlu0 %v2015, 80
    %v2111 = vpop.permute.xlu0 %2110
    %v2112 = vsel %vm230, %v2013, 0
    %v2114 = vsel %vm230, %v2015, 0
    %v2116 = vsel %vm230, %v2109, 0
    %v2118 = vsel %vm230, %v2111, 0
    %2120 = vmatpush.xpose.msra.mxu0 0.0
    %2121 = vmatpush.xpose.msra.mxu0 0.0
    %2122 = vmatpush.xpose.msra.mxu0 0.0
    %2123 = vmatpush.xpose.msra.mxu0 0.0
    %2124 = vmatpush.xpose.msra.mxu0 0.0
    %2125 = vmatpush.xpose.msra.mxu0 0.0
    %2126 = vmatpush.xpose.msra.mxu0 0.0
    %2127 = vmatpush.xpose.msra.mxu0 0.0
    %2128 = vmatpush.xpose.msra.mxu0 0.0
    %2129 = vmatpush.xpose.msra.mxu0 0.0
    %2130 = vmatpush.xpose.msra.mxu0 0.0
    %2131 = vmatpush.xpose.msra.mxu0 0.0
    %2132 = vmatpush.xpose.msra.mxu0 0.0
    %2133 = vmatpush.xpose.msra.mxu0 0.0
    %2134 = vmatpush.xpose.msra.mxu0 %v2118
    %2135 = vmatpush.xpose.msra.mxu0 %v2116
    %2136 = vmatmul.f32.gmra.mxu0 %v2112
    %v2137 = vpop.f32.mrf.mxu0
    %v2138 = vadd.f32 %v120, %v2137
    %2139 = vmatmul.f32.gmra.mxu0 %v2114
    %v2140 = vpop.f32.mrf.mxu0
    %v2141 = vadd.f32 %v121, %v2140
    %2142 = vdwg.mxu0
    %2143 = vrot.lane.b32.xlu0 %v2017, 80
    %v2144 = vpop.permute.xlu0 %2143
    %2145 = vrot.lane.b32.xlu0 %v2019, 80
    %v2146 = vpop.permute.xlu0 %2145
    %v2147 = vsel %vm230, %v2017, 0
    %v2149 = vsel %vm230, %v2019, 0
    %v2151 = vsel %vm230, %v2144, 0
    %v2153 = vsel %vm230, %v2146, 0
    %2155 = vmatpush.xpose.msra.mxu0 0.0
    %2156 = vmatpush.xpose.msra.mxu0 0.0
    %2157 = vmatpush.xpose.msra.mxu0 0.0
    %2158 = vmatpush.xpose.msra.mxu0 0.0
    %2159 = vmatpush.xpose.msra.mxu0 0.0
    %2160 = vmatpush.xpose.msra.mxu0 0.0
    %2161 = vmatpush.xpose.msra.mxu0 0.0
    %2162 = vmatpush.xpose.msra.mxu0 0.0
    %2163 = vmatpush.xpose.msra.mxu0 0.0
    %2164 = vmatpush.xpose.msra.mxu0 0.0
    %2165 = vmatpush.xpose.msra.mxu0 0.0
    %2166 = vmatpush.xpose.msra.mxu0 0.0
    %2167 = vmatpush.xpose.msra.mxu0 0.0
    %2168 = vmatpush.xpose.msra.mxu0 0.0
    %2169 = vmatpush.xpose.msra.mxu0 %v2153
    %2170 = vmatpush.xpose.msra.mxu0 %v2151
    %2171 = vmatmul.f32.gmra.mxu0 %v2147
    %v2172 = vpop.f32.mrf.mxu0
    %v2173 = vadd.f32 %v120, %v2172
    %2174 = vmatmul.f32.gmra.mxu0 %v2149
    %v2175 = vpop.f32.mrf.mxu0
    %v2176 = vadd.f32 %v121, %v2175
    %2177 = vdwg.mxu0
    %2178 = vrot.lane.b32.xlu0 %v2021, 80
    %v2179 = vpop.permute.xlu0 %2178
    %2180 = vrot.lane.b32.xlu0 %v2023, 80
    %v2181 = vpop.permute.xlu0 %2180
    %v2182 = vsel %vm230, %v2021, 0
    %v2184 = vsel %vm230, %v2023, 0
    %v2186 = vsel %vm230, %v2179, 0
    %v2188 = vsel %vm230, %v2181, 0
    %2190 = vmatpush.xpose.msra.mxu0 0.0
    %2191 = vmatpush.xpose.msra.mxu0 0.0
    %2192 = vmatpush.xpose.msra.mxu0 0.0
    %2193 = vmatpush.xpose.msra.mxu0 0.0
    %2194 = vmatpush.xpose.msra.mxu0 0.0
    %2195 = vmatpush.xpose.msra.mxu0 0.0
    %2196 = vmatpush.xpose.msra.mxu0 0.0
    %2197 = vmatpush.xpose.msra.mxu0 0.0
    %2198 = vmatpush.xpose.msra.mxu0 0.0
    %2199 = vmatpush.xpose.msra.mxu0 0.0
    %2200 = vmatpush.xpose.msra.mxu0 0.0
    %2201 = vmatpush.xpose.msra.mxu0 0.0
    %2202 = vmatpush.xpose.msra.mxu0 0.0
    %2203 = vmatpush.xpose.msra.mxu0 0.0
    %2204 = vmatpush.xpose.msra.mxu0 %v2188
    %2205 = vmatpush.xpose.msra.mxu0 %v2186
    %2206 = vmatmul.f32.gmra.mxu0 %v2182
    %v2207 = vpop.f32.mrf.mxu0
    %v2208 = vadd.f32 %v120, %v2207
    %2209 = vmatmul.f32.gmra.mxu0 %v2184
    %v2210 = vpop.f32.mrf.mxu0
    %v2211 = vadd.f32 %v121, %v2210
    %2212 = vdwg.mxu0
    %2213 = vrot.lane.b32.xlu0 %v2025, 80
    %v2214 = vpop.permute.xlu0 %2213
    %2215 = vrot.lane.b32.xlu0 %v2027, 80
    %v2216 = vpop.permute.xlu0 %2215
    %v2217 = vsel %vm230, %v2025, 0
    %v2219 = vsel %vm230, %v2027, 0
    %v2221 = vsel %vm230, %v2214, 0
    %v2223 = vsel %vm230, %v2216, 0
    %2225 = vmatpush.xpose.msra.mxu0 0.0
    %2226 = vmatpush.xpose.msra.mxu0 0.0
    %2227 = vmatpush.xpose.msra.mxu0 0.0
    %2228 = vmatpush.xpose.msra.mxu0 0.0
    %2229 = vmatpush.xpose.msra.mxu0 0.0
    %2230 = vmatpush.xpose.msra.mxu0 0.0
    %2231 = vmatpush.xpose.msra.mxu0 0.0
    %2232 = vmatpush.xpose.msra.mxu0 0.0
    %2233 = vmatpush.xpose.msra.mxu0 0.0
    %2234 = vmatpush.xpose.msra.mxu0 0.0
    %2235 = vmatpush.xpose.msra.mxu0 0.0
    %2236 = vmatpush.xpose.msra.mxu0 0.0
    %2237 = vmatpush.xpose.msra.mxu0 0.0
    %2238 = vmatpush.xpose.msra.mxu0 0.0
    %2239 = vmatpush.xpose.msra.mxu0 %v2223
    %2240 = vmatpush.xpose.msra.mxu0 %v2221
    %2241 = vmatmul.f32.gmra.mxu0 %v2217
    %v2242 = vpop.f32.mrf.mxu0
    %v2243 = vadd.f32 %v120, %v2242
    %2244 = vmatmul.f32.gmra.mxu0 %v2219
    %v2245 = vpop.f32.mrf.mxu0
    %v2246 = vadd.f32 %v121, %v2245
    %2247 = vdwg.mxu0
    %v2248 = vsel %vm437, %v2068, -inf
    %2249 = vmax.xlane.f32.xlu0 %v2248
    %v2250 = vpop.xlane.xlu0 %2249
    %v2251 = vsel %vm437, %v2071, -inf
    %2252 = vmax.xlane.f32.xlu0 %v2251
    %v2253 = vpop.xlane.xlu0 %2252
    %v2254 = vsel %vm437, %v2103, -inf
    %2255 = vmax.xlane.f32.xlu0 %v2254
    %v2256 = vpop.xlane.xlu0 %2255
    %v2257 = vsel %vm437, %v2106, -inf
    %2258 = vmax.xlane.f32.xlu0 %v2257
    %v2259 = vpop.xlane.xlu0 %2258
    %v2260 = vsel %vm437, %v2138, -inf
    %2261 = vmax.xlane.f32.xlu0 %v2260
    %v2262 = vpop.xlane.xlu0 %2261
    %v2263 = vsel %vm437, %v2141, -inf
    %2264 = vmax.xlane.f32.xlu0 %v2263
    %v2265 = vpop.xlane.xlu0 %2264
    %v2266 = vsel %vm437, %v2173, -inf
    %2267 = vmax.xlane.f32.xlu0 %v2266
    %v2268 = vpop.xlane.xlu0 %2267
    %v2269 = vsel %vm437, %v2176, -inf
    %2270 = vmax.xlane.f32.xlu0 %v2269
    %v2271 = vpop.xlane.xlu0 %2270
    %v2272 = vsel %vm437, %v2208, -inf
    %2273 = vmax.xlane.f32.xlu0 %v2272
    %v2274 = vpop.xlane.xlu0 %2273
    %v2275 = vsel %vm437, %v2211, -inf
    %2276 = vmax.xlane.f32.xlu0 %v2275
    %v2277 = vpop.xlane.xlu0 %2276
    %v2278 = vsel %vm437, %v2243, -inf
    %2279 = vmax.xlane.f32.xlu0 %v2278
    %v2280 = vpop.xlane.xlu0 %2279
    %v2281 = vsel %vm437, %v2246, -inf
    %2282 = vmax.xlane.f32.xlu0 %v2281
    %v2283 = vpop.xlane.xlu0 %2282
    %v2284 = vsub.f32 %v2068, %v2250
    %v2285 = vsub.f32 %v2071, %v2253
    %v2286 = vsub.f32 %v2103, %v2256
    %v2287 = vsub.f32 %v2106, %v2259
    %v2288 = vsub.f32 %v2138, %v2262
    %v2289 = vsub.f32 %v2141, %v2265
    %v2290 = vsub.f32 %v2173, %v2268
    %v2291 = vsub.f32 %v2176, %v2271
    %v2292 = vsub.f32 %v2208, %v2274
    %v2293 = vsub.f32 %v2211, %v2277
    %v2294 = vsub.f32 %v2243, %v2280
    %v2295 = vsub.f32 %v2246, %v2283
    %v2296 = vmul.f32 %v2284, 1.442695
    %v2297 = vpow.pop %v2296
    %v2298 = vmul.f32 %v2285, 1.442695
    %v2299 = vpow.pop %v2298
    %v2300 = vmul.f32 %v2286, 1.442695
    %v2301 = vpow.pop %v2300
    %v2302 = vmul.f32 %v2287, 1.442695
    %v2303 = vpow.pop %v2302
    %v2304 = vmul.f32 %v2288, 1.442695
    %v2305 = vpow.pop %v2304
    %v2306 = vmul.f32 %v2289, 1.442695
    %v2307 = vpow.pop %v2306
    %v2308 = vmul.f32 %v2290, 1.442695
    %v2309 = vpow.pop %v2308
    %v2310 = vmul.f32 %v2291, 1.442695
    %v2311 = vpow.pop %v2310
    %v2312 = vmul.f32 %v2292, 1.442695
    %v2313 = vpow.pop %v2312
    %v2314 = vmul.f32 %v2293, 1.442695
    %v2315 = vpow.pop %v2314
    %v2316 = vmul.f32 %v2294, 1.442695
    %v2317 = vpow.pop %v2316
    %v2318 = vmul.f32 %v2295, 1.442695
    %v2319 = vpow.pop %v2318
    %v2320 = vsel %vm437, %v2297, 0.0
    %2321 = vadd.xlane.f32.xlu0 %v2320
    %v2322 = vpop.xlane.xlu0 %2321
    %v2323 = vsel %vm437, %v2299, 0.0
    %2324 = vadd.xlane.f32.xlu0 %v2323
    %v2325 = vpop.xlane.xlu0 %2324
    %v2326 = vsel %vm437, %v2301, 0.0
    %2327 = vadd.xlane.f32.xlu0 %v2326
    %v2328 = vpop.xlane.xlu0 %2327
    %v2329 = vsel %vm437, %v2303, 0.0
    %2330 = vadd.xlane.f32.xlu0 %v2329
    %v2331 = vpop.xlane.xlu0 %2330
    %v2332 = vsel %vm437, %v2305, 0.0
    %2333 = vadd.xlane.f32.xlu0 %v2332
    %v2334 = vpop.xlane.xlu0 %2333
    %v2335 = vsel %vm437, %v2307, 0.0
    %2336 = vadd.xlane.f32.xlu0 %v2335
    %v2337 = vpop.xlane.xlu0 %2336
    %v2338 = vsel %vm437, %v2309, 0.0
    %2339 = vadd.xlane.f32.xlu0 %v2338
    %v2340 = vpop.xlane.xlu0 %2339
    %v2341 = vsel %vm437, %v2311, 0.0
    %2342 = vadd.xlane.f32.xlu0 %v2341
    %v2343 = vpop.xlane.xlu0 %2342
    %v2344 = vsel %vm437, %v2313, 0.0
    %2345 = vadd.xlane.f32.xlu0 %v2344
    %v2346 = vpop.xlane.xlu0 %2345
    %v2347 = vsel %vm437, %v2315, 0.0
    %2348 = vadd.xlane.f32.xlu0 %v2347
    %v2349 = vpop.xlane.xlu0 %2348
    %v2350 = vsel %vm437, %v2317, 0.0
    %2351 = vadd.xlane.f32.xlu0 %v2350
    %v2352 = vpop.xlane.xlu0 %2351
    %v2353 = vsel %vm437, %v2319, 0.0
    %2354 = vadd.xlane.f32.xlu0 %v2353
    %v2355 = vpop.xlane.xlu0 %2354
    %v2356 = vrcp.pop %v2322
    %v2357 = vrcp.pop %v2325
    %v2358 = vrcp.pop %v2328
    %v2359 = vrcp.pop %v2331
    %v2360 = vrcp.pop %v2334
    %v2361 = vrcp.pop %v2337
    %v2362 = vrcp.pop %v2340
    %v2363 = vrcp.pop %v2343
    %v2364 = vrcp.pop %v2346
    %v2365 = vrcp.pop %v2349
    %v2366 = vrcp.pop %v2352
    %v2367 = vrcp.pop %v2355
    %v2368 = vmul.f32 %v2297, %v2356
    %v2369 = vmul.f32 %v2299, %v2357
    %v2370 = vmul.f32 %v2301, %v2358
    %v2371 = vmul.f32 %v2303, %v2359
    %v2372 = vmul.f32 %v2305, %v2360
    %v2373 = vmul.f32 %v2307, %v2361
    %v2374 = vmul.f32 %v2309, %v2362
    %v2375 = vmul.f32 %v2311, %v2363
    %v2376 = vmul.f32 %v2313, %v2364
    %v2377 = vmul.f32 %v2315, %v2365
    %v2378 = vmul.f32 %v2317, %v2366
    %v2379 = vmul.f32 %v2319, %v2367
    %2380 = vrot.lane.b32.xlu0 %v1978, 32
    %v2381 = vpop.permute.xlu0 %2380
    %2382 = vrot.lane.b32.xlu0 %v1981, 32
    %v2383 = vpop.permute.xlu0 %2382
    %v2387 = vsel %vm437, %v2368, 0
    %v2390 = vsel %vm437, %v2369, 0
    %2392 = vmatpush.msra.mxu0 0.0
    %2393 = vmatpush.msra.mxu0 0.0
    %2394 = vmatpush.msra.mxu0 0.0
    %2395 = vmatpush.msra.mxu0 0.0
    %2396 = vmatpush.msra.mxu0 0.0
    %2397 = vmatpush.msra.mxu0 0.0
    %2398 = vmatpush.msra.mxu0 0.0
    %2399 = vmatpush.msra.mxu0 0.0
    %2400 = vmatpush.msra.mxu0 0.0
    %2401 = vmatpush.msra.mxu0 0.0
    %2402 = vmatpush.msra.mxu0 0.0
    %2403 = vmatpush.msra.mxu0 0.0
    %2404 = vmatpush.msra.mxu0 0.0
    %2405 = vmatpush.msra.mxu0 0.0
    %2406 = vmatpush.msra.mxu0 %v2383
    %2407 = vmatpush.msra.mxu0 %v2381
    %2408 = vmatmul.f32.gmra.mxu0 %v2387
    %v2409 = vpop.f32.mrf.mxu0
    %v2410 = vadd.f32 0.0, %v2409
    %2411 = vmatmul.f32.gmra.mxu0 %v2390
    %v2412 = vpop.f32.mrf.mxu0
    %v2413 = vadd.f32 0.0, %v2412
    %2414 = vdwg.mxu0
    %2415 = vrot.lane.b32.xlu0 %v2009, 32
    %v2416 = vpop.permute.xlu0 %2415
    %2417 = vrot.lane.b32.xlu0 %v2011, 32
    %v2418 = vpop.permute.xlu0 %2417
    %v2422 = vsel %vm437, %v2370, 0
    %v2425 = vsel %vm437, %v2371, 0
    %2427 = vmatpush.msra.mxu0 0.0
    %2428 = vmatpush.msra.mxu0 0.0
    %2429 = vmatpush.msra.mxu0 0.0
    %2430 = vmatpush.msra.mxu0 0.0
    %2431 = vmatpush.msra.mxu0 0.0
    %2432 = vmatpush.msra.mxu0 0.0
    %2433 = vmatpush.msra.mxu0 0.0
    %2434 = vmatpush.msra.mxu0 0.0
    %2435 = vmatpush.msra.mxu0 0.0
    %2436 = vmatpush.msra.mxu0 0.0
    %2437 = vmatpush.msra.mxu0 0.0
    %2438 = vmatpush.msra.mxu0 0.0
    %2439 = vmatpush.msra.mxu0 0.0
    %2440 = vmatpush.msra.mxu0 0.0
    %2441 = vmatpush.msra.mxu0 %v2418
    %2442 = vmatpush.msra.mxu0 %v2416
    %2443 = vmatmul.f32.gmra.mxu0 %v2422
    %v2444 = vpop.f32.mrf.mxu0
    %v2445 = vadd.f32 0.0, %v2444
    %2446 = vmatmul.f32.gmra.mxu0 %v2425
    %v2447 = vpop.f32.mrf.mxu0
    %v2448 = vadd.f32 0.0, %v2447
    %2449 = vdwg.mxu0
    %2450 = vrot.lane.b32.xlu0 %v2013, 32
    %v2451 = vpop.permute.xlu0 %2450
    %2452 = vrot.lane.b32.xlu0 %v2015, 32
    %v2453 = vpop.permute.xlu0 %2452
    %v2457 = vsel %vm437, %v2372, 0
    %v2460 = vsel %vm437, %v2373, 0
    %2462 = vmatpush.msra.mxu0 0.0
    %2463 = vmatpush.msra.mxu0 0.0
    %2464 = vmatpush.msra.mxu0 0.0
    %2465 = vmatpush.msra.mxu0 0.0
    %2466 = vmatpush.msra.mxu0 0.0
    %2467 = vmatpush.msra.mxu0 0.0
    %2468 = vmatpush.msra.mxu0 0.0
    %2469 = vmatpush.msra.mxu0 0.0
    %2470 = vmatpush.msra.mxu0 0.0
    %2471 = vmatpush.msra.mxu0 0.0
    %2472 = vmatpush.msra.mxu0 0.0
    %2473 = vmatpush.msra.mxu0 0.0
    %2474 = vmatpush.msra.mxu0 0.0
    %2475 = vmatpush.msra.mxu0 0.0
    %2476 = vmatpush.msra.mxu0 %v2453
    %2477 = vmatpush.msra.mxu0 %v2451
    %2478 = vmatmul.f32.gmra.mxu0 %v2457
    %v2479 = vpop.f32.mrf.mxu0
    %v2480 = vadd.f32 0.0, %v2479
    %2481 = vmatmul.f32.gmra.mxu0 %v2460
    %v2482 = vpop.f32.mrf.mxu0
    %v2483 = vadd.f32 0.0, %v2482
    %2484 = vdwg.mxu0
    %2485 = vrot.lane.b32.xlu0 %v2017, 32
    %v2486 = vpop.permute.xlu0 %2485
    %2487 = vrot.lane.b32.xlu0 %v2019, 32
    %v2488 = vpop.permute.xlu0 %2487
    %v2492 = vsel %vm437, %v2374, 0
    %v2495 = vsel %vm437, %v2375, 0
    %2497 = vmatpush.msra.mxu0 0.0
    %2498 = vmatpush.msra.mxu0 0.0
    %2499 = vmatpush.msra.mxu0 0.0
    %2500 = vmatpush.msra.mxu0 0.0
    %2501 = vmatpush.msra.mxu0 0.0
    %2502 = vmatpush.msra.mxu0 0.0
    %2503 = vmatpush.msra.mxu0 0.0
    %2504 = vmatpush.msra.mxu0 0.0
    %2505 = vmatpush.msra.mxu0 0.0
    %2506 = vmatpush.msra.mxu0 0.0
    %2507 = vmatpush.msra.mxu0 0.0
    %2508 = vmatpush.msra.mxu0 0.0
    %2509 = vmatpush.msra.mxu0 0.0
    %2510 = vmatpush.msra.mxu0 0.0
    %2511 = vmatpush.msra.mxu0 %v2488
    %2512 = vmatpush.msra.mxu0 %v2486
    %2513 = vmatmul.f32.gmra.mxu0 %v2492
    %v2514 = vpop.f32.mrf.mxu0
    %v2515 = vadd.f32 0.0, %v2514
    %2516 = vmatmul.f32.gmra.mxu0 %v2495
    %v2517 = vpop.f32.mrf.mxu0
    %v2518 = vadd.f32 0.0, %v2517
    %2519 = vdwg.mxu0
    %2520 = vrot.lane.b32.xlu0 %v2031, 32
    %v2521 = vpop.permute.xlu0 %2520
    %2522 = vrot.lane.b32.xlu0 %v2033, 32
    %v2523 = vpop.permute.xlu0 %2522
    %v2527 = vsel %vm437, %v2376, 0
    %v2530 = vsel %vm437, %v2377, 0
    %2532 = vmatpush.msra.mxu0 0.0
    %2533 = vmatpush.msra.mxu0 0.0
    %2534 = vmatpush.msra.mxu0 0.0
    %2535 = vmatpush.msra.mxu0 0.0
    %2536 = vmatpush.msra.mxu0 0.0
    %2537 = vmatpush.msra.mxu0 0.0
    %2538 = vmatpush.msra.mxu0 0.0
    %2539 = vmatpush.msra.mxu0 0.0
    %2540 = vmatpush.msra.mxu0 0.0
    %2541 = vmatpush.msra.mxu0 0.0
    %2542 = vmatpush.msra.mxu0 0.0
    %2543 = vmatpush.msra.mxu0 0.0
    %2544 = vmatpush.msra.mxu0 0.0
    %2545 = vmatpush.msra.mxu0 0.0
    %2546 = vmatpush.msra.mxu0 %v2523
    %2547 = vmatpush.msra.mxu0 %v2521
    %2548 = vmatmul.f32.gmra.mxu0 %v2527
    %v2549 = vpop.f32.mrf.mxu0
    %v2550 = vadd.f32 0.0, %v2549
    %2551 = vmatmul.f32.gmra.mxu0 %v2530
    %v2552 = vpop.f32.mrf.mxu0
    %v2553 = vadd.f32 0.0, %v2552
    %2554 = vdwg.mxu0
    %2555 = vrot.lane.b32.xlu0 %v2035, 32
    %v2556 = vpop.permute.xlu0 %2555
    %2557 = vrot.lane.b32.xlu0 %v2037, 32
    %v2558 = vpop.permute.xlu0 %2557
    %v2562 = vsel %vm437, %v2378, 0
    %v2565 = vsel %vm437, %v2379, 0
    %2567 = vmatpush.msra.mxu0 0.0
    %2568 = vmatpush.msra.mxu0 0.0
    %2569 = vmatpush.msra.mxu0 0.0
    %2570 = vmatpush.msra.mxu0 0.0
    %2571 = vmatpush.msra.mxu0 0.0
    %2572 = vmatpush.msra.mxu0 0.0
    %2573 = vmatpush.msra.mxu0 0.0
    %2574 = vmatpush.msra.mxu0 0.0
    %2575 = vmatpush.msra.mxu0 0.0
    %2576 = vmatpush.msra.mxu0 0.0
    %2577 = vmatpush.msra.mxu0 0.0
    %2578 = vmatpush.msra.mxu0 0.0
    %2579 = vmatpush.msra.mxu0 0.0
    %2580 = vmatpush.msra.mxu0 0.0
    %2581 = vmatpush.msra.mxu0 %v2558
    %2582 = vmatpush.msra.mxu0 %v2556
    %2583 = vmatmul.f32.gmra.mxu0 %v2562
    %v2584 = vpop.f32.mrf.mxu0
    %v2585 = vadd.f32 0.0, %v2584
    %2586 = vmatmul.f32.gmra.mxu0 %v2565
    %v2587 = vpop.f32.mrf.mxu0
    %v2588 = vadd.f32 0.0, %v2587
    %2589 = vdwg.mxu0
    %2592 = vrot.lane.b32.xlu0 %v2445, 8
    %v2593 = vpop.permute.xlu0 %2592
    %2594 = vrot.lane.b32.xlu0 %v2448, 8
    %v2595 = vpop.permute.xlu0 %2594
    %2600 = vrot.lane.b32.xlu0 %v2480, 16
    %v2601 = vpop.permute.xlu0 %2600
    %2602 = vrot.lane.b32.xlu0 %v2483, 16
    %v2603 = vpop.permute.xlu0 %2602
    %2608 = vrot.lane.b32.xlu0 %v2515, 24
    %v2609 = vpop.permute.xlu0 %2608
    %2610 = vrot.lane.b32.xlu0 %v2518, 24
    %v2611 = vpop.permute.xlu0 %2610
    %2616 = vrot.lane.b32.xlu0 %v2550, 32
    %v2617 = vpop.permute.xlu0 %2616
    %2618 = vrot.lane.b32.xlu0 %v2553, 32
    %v2619 = vpop.permute.xlu0 %2618
    %2624 = vrot.lane.b32.xlu0 %v2585, 40
    %v2625 = vpop.permute.xlu0 %2624
    %2626 = vrot.lane.b32.xlu0 %v2588, 40
    %v2627 = vpop.permute.xlu0 %2626
    %v2630 = vsel %vm230, %v2410, %v2593
    %v2631 = vsel %vm230, %v2413, %v2595
    %v2632 = vsel %vm437, %v2630, %v2601
    %v2633 = vsel %vm437, %v2631, %v2603
    %v2634 = vsel %vm824, %v2632, %v2609
    %v2635 = vsel %vm824, %v2633, %v2611
    %v2636 = vsel %vm827, %v2634, %v2617
    %v2637 = vsel %vm827, %v2635, %v2619
    %v2638 = vsel %vm830, %v2636, %v2625
    %v2639 = vsel %vm830, %v2637, %v2627
    %s2640 = scalar_lea.vmem [#allocation7], 144
    %v2641 = vld [vmem:[%s2640] sm:$0xff]
    %v2642 = vld [vmem:[%s2640 + $0x8] sm:$0xff]
    %v2643 = vld [vmem:[%s2640 + $0x10] sm:$0xff]
    %v2644 = vld [vmem:[%s2640 + $0x18] sm:$0xff]
    %v2645 = vld [vmem:[%s2640 + $0x20] sm:$0xff]
    %v2646 = vld [vmem:[%s2640 + $0x28] sm:$0xff]
    %v2647 = vperm.slane %v1936, 1
    %v2649 = vsel %vm141, %v2638, 0
    %v2652 = vsel %vm141, %v2639, 0
    %2654 = vmatpush.msra.mxu0 0.0
    %2655 = vmatpush.msra.mxu0 0.0
    %2656 = vmatpush.msra.mxu0 0.0
    %2657 = vmatpush.msra.mxu0 0.0
    %2658 = vmatpush.msra.mxu0 0.0
    %2659 = vmatpush.msra.mxu0 0.0
    %2660 = vmatpush.msra.mxu0 0.0
    %2661 = vmatpush.msra.mxu0 0.0
    %2662 = vmatpush.msra.mxu0 0.0
    %2663 = vmatpush.msra.mxu0 0.0
    %2664 = vmatpush.msra.mxu0 %v2646
    %2665 = vmatpush.msra.mxu0 %v2645
    %2666 = vmatpush.msra.mxu0 %v2644
    %2667 = vmatpush.msra.mxu0 %v2643
    %2668 = vmatpush.msra.mxu0 %v2642
    %2669 = vmatpush.msra.mxu0 %v2641
    %2670 = vmatmul.f32.gmra.mxu0 %v2649
    %v2671 = vpop.f32.mrf.mxu0
    %v2672 = vadd.f32 %v2647, %v2671
    %2673 = vmatmul.f32.gmra.mxu0 %v2652
    %v2674 = vpop.f32.mrf.mxu0
    %v2675 = vadd.f32 %v2647, %v2674
    %2676 = vdwg.mxu0
    %v2677 = vadd.f32 %v1933, %v2672
    %v2678 = vadd.f32 %v1934, %v2675
    %v2679 = vsel %vm141, %v2677, 0.0
    %2680 = vadd.xlane.f32.xlu0 %v2679
    %v2681 = vpop.xlane.xlu0 %2680
    %v2682 = vsel %vm141, %v2678, 0.0
    %2683 = vadd.xlane.f32.xlu0 %v2682
    %v2684 = vpop.xlane.xlu0 %2683
    %v2685 = vmul.f32 %v2681, %v883
    %v2686 = vmul.f32 %v2684, %v883
    %v2687 = vsub.f32 %v2677, %v2685
    %v2688 = vsub.f32 %v2678, %v2686
    %v2689 = vmul.f32 %v2687, %v2687
    %v2690 = vmul.f32 %v2688, %v2688
    %v2691 = vsel %vm141, %v2689, 0.0
    %2692 = vadd.xlane.f32.xlu0 %v2691
    %v2693 = vpop.xlane.xlu0 %2692
    %v2694 = vsel %vm141, %v2690, 0.0
    %2695 = vadd.xlane.f32.xlu0 %v2694
    %v2696 = vpop.xlane.xlu0 %2695
    %v2697 = vmul.f32 %v2693, %v883
    %v2698 = vmul.f32 %v2696, %v883
    %v2699 = vadd.f32 %v2697, 1e-05
    %v2700 = vadd.f32 %v2698, 1e-05
    %v2701 = vrsqrt.pop %v2699
    %v2702 = vmul.f32 %v2701, %v2699
    %v2703 = vmul.f32 %v2702, %v2701
    %v2704 = vmul.f32 0.5, %v2703
    %v2705 = vsub.f32 1.5, %v2704
    %v2706 = vmul.f32 %v2701, %v2705
    %vm2707 = vweird.f32 %v2699
    %vm2708 = vweird.f32 %v2701
    %vm2709 = vmor %vm2707, %vm2708
    %v2710 = vsel %vm2709, %v2701, %v2706
    %v2711 = vrsqrt.pop %v2700
    %v2712 = vmul.f32 %v2711, %v2700
    %v2713 = vmul.f32 %v2712, %v2711
    %v2714 = vmul.f32 0.5, %v2713
    %v2715 = vsub.f32 1.5, %v2714
    %v2716 = vmul.f32 %v2711, %v2715
    %vm2717 = vweird.f32 %v2700
    %vm2718 = vweird.f32 %v2711
    %vm2719 = vmor %vm2717, %vm2718
    %v2720 = vsel %vm2719, %v2711, %v2716
    %v2721 = vmul.f32 %v2687, %v2710
    %v2722 = vmul.f32 %v2688, %v2720
    %v2723 = vperm.slane %v1936, 7
    %v2724 = vmul.f32 %v2721, %v2723
    %v2725 = vmul.f32 %v2722, %v2723
    %v2726 = vperm.slane %v1938, 0
    %v2727 = vadd.f32 %v2724, %v2726
    %v2728 = vadd.f32 %v2725, %v2726
    %s2729 = scalar_lea.vmem [#allocation7], 192
    %v2730 = vld [vmem:[%s2729] sm:$0xff]
    %v2731 = vld [vmem:[%s2729 + $0x8] sm:$0xff]
    %v2732 = vld [vmem:[%s2729 + $0x10] sm:$0xff]
    %v2733 = vld [vmem:[%s2729 + $0x18] sm:$0xff]
    %v2734 = vld [vmem:[%s2729 + $0x20] sm:$0xff]
    %v2735 = vld [vmem:[%s2729 + $0x28] sm:$0xff]
    %v2736 = vperm.slane %v1936, 2
    %v2738 = vsel %vm141, %v2727, 0
    %v2741 = vsel %vm141, %v2728, 0
    %2743 = vmatpush.msra.mxu0 0.0
    %2744 = vmatpush.msra.mxu0 0.0
    %2745 = vmatpush.msra.mxu0 0.0
    %2746 = vmatpush.msra.mxu0 0.0
    %2747 = vmatpush.msra.mxu0 0.0
    %2748 = vmatpush.msra.mxu0 0.0
    %2749 = vmatpush.msra.mxu0 0.0
    %2750 = vmatpush.msra.mxu0 0.0
    %2751 = vmatpush.msra.mxu0 0.0
    %2752 = vmatpush.msra.mxu0 0.0
    %2753 = vmatpush.msra.mxu0 %v2735
    %2754 = vmatpush.msra.mxu0 %v2734
    %2755 = vmatpush.msra.mxu0 %v2733
    %2756 = vmatpush.msra.mxu0 %v2732
    %2757 = vmatpush.msra.mxu0 %v2731
    %2758 = vmatpush.msra.mxu0 %v2730
    %2759 = vmatmul.f32.gmra.mxu0 %v2738
    %v2760 = vpop.f32.mrf.mxu0
    %v2761 = vadd.f32 %v2736, %v2760
    %2762 = vmatmul.f32.gmra.mxu0 %v2741
    %v2763 = vpop.f32.mrf.mxu0
    %v2764 = vadd.f32 %v2736, %v2763
    %2765 = vdwg.mxu0
    %s2766 = scalar_lea.vmem [#allocation8], 48
    %v2767 = vld [vmem:[%s2766] sm:$0xff]
    %v2768 = vld [vmem:[%s2766 + $0x8] sm:$0xff]
    %v2769 = vld [vmem:[%s2766 + $0x10] sm:$0xff]
    %v2770 = vld [vmem:[%s2766 + $0x18] sm:$0xff]
    %v2771 = vld [vmem:[%s2766 + $0x20] sm:$0xff]
    %v2772 = vld [vmem:[%s2766 + $0x28] sm:$0xff]
    %v2773 = vperm.slane %v1936, 3
    %2774 = vmatpush.msra.mxu0 0.0
    %2775 = vmatpush.msra.mxu0 0.0
    %2776 = vmatpush.msra.mxu0 0.0
    %2777 = vmatpush.msra.mxu0 0.0
    %2778 = vmatpush.msra.mxu0 0.0
    %2779 = vmatpush.msra.mxu0 0.0
    %2780 = vmatpush.msra.mxu0 0.0
    %2781 = vmatpush.msra.mxu0 0.0
    %2782 = vmatpush.msra.mxu0 0.0
    %2783 = vmatpush.msra.mxu0 0.0
    %2784 = vmatpush.msra.mxu0 %v2772
    %2785 = vmatpush.msra.mxu0 %v2771
    %2786 = vmatpush.msra.mxu0 %v2770
    %2787 = vmatpush.msra.mxu0 %v2769
    %2788 = vmatpush.msra.mxu0 %v2768
    %2789 = vmatpush.msra.mxu0 %v2767
    %2790 = vmatmul.f32.gmra.mxu0 %v973
    %v2791 = vpop.f32.mrf.mxu0
    %v2792 = vadd.f32 %v2773, %v2791
    %2793 = vmatmul.f32.gmra.mxu0 %v976
    %v2794 = vpop.f32.mrf.mxu0
    %v2795 = vadd.f32 %v2773, %v2794
    %2796 = vmatmul.f32.gmra.mxu0 %v979
    %v2797 = vpop.f32.mrf.mxu0
    %v2798 = vadd.f32 %v2773, %v2797
    %2799 = vmatmul.f32.gmra.mxu0 %v982
    %v2800 = vpop.f32.mrf.mxu0
    %v2801 = vadd.f32 %v2773, %v2800
    %2802 = vdwg.mxu0
    %2805 = vrot.lane.b32.xlu0 %v2761, 120
    %v2806 = vpop.permute.xlu0 %2805
    %2807 = vrot.lane.b32.xlu0 %v2764, 120
    %v2808 = vpop.permute.xlu0 %2807
    %2809 = vrot.lane.b32.xlu0 %v2761, 112
    %v2810 = vpop.permute.xlu0 %2809
    %2811 = vrot.lane.b32.xlu0 %v2764, 112
    %v2812 = vpop.permute.xlu0 %2811
    %2813 = vrot.lane.b32.xlu0 %v2761, 104
    %v2814 = vpop.permute.xlu0 %2813
    %2815 = vrot.lane.b32.xlu0 %v2764, 104
    %v2816 = vpop.permute.xlu0 %2815
    %2817 = vrot.lane.b32.xlu0 %v2761, 96
    %v2818 = vpop.permute.xlu0 %2817
    %2819 = vrot.lane.b32.xlu0 %v2764, 96
    %v2820 = vpop.permute.xlu0 %2819
    %2821 = vrot.lane.b32.xlu0 %v2761, 88
    %v2822 = vpop.permute.xlu0 %2821
    %2823 = vrot.lane.b32.xlu0 %v2764, 88
    %v2824 = vpop.permute.xlu0 %2823
    %2829 = vrot.lane.b32.xlu0 %v2792, 120
    %v2830 = vpop.permute.xlu0 %2829
    %2831 = vrot.lane.b32.xlu0 %v2795, 120
    %v2832 = vpop.permute.xlu0 %2831
    %2833 = vrot.lane.b32.xlu0 %v2798, 120
    %v2834 = vpop.permute.xlu0 %2833
    %2835 = vrot.lane.b32.xlu0 %v2801, 120
    %v2836 = vpop.permute.xlu0 %2835
    %2837 = vrot.lane.b32.xlu0 %v2792, 112
    %v2838 = vpop.permute.xlu0 %2837
    %2839 = vrot.lane.b32.xlu0 %v2795, 112
    %v2840 = vpop.permute.xlu0 %2839
    %2841 = vrot.lane.b32.xlu0 %v2798, 112
    %v2842 = vpop.permute.xlu0 %2841
    %2843 = vrot.lane.b32.xlu0 %v2801, 112
    %v2844 = vpop.permute.xlu0 %2843
    %2845 = vrot.lane.b32.xlu0 %v2792, 104
    %v2846 = vpop.permute.xlu0 %2845
    %2847 = vrot.lane.b32.xlu0 %v2795, 104
    %v2848 = vpop.permute.xlu0 %2847
    %2849 = vrot.lane.b32.xlu0 %v2798, 104
    %v2850 = vpop.permute.xlu0 %2849
    %2851 = vrot.lane.b32.xlu0 %v2801, 104
    %v2852 = vpop.permute.xlu0 %2851
    %2853 = vrot.lane.b32.xlu0 %v2792, 96
    %v2854 = vpop.permute.xlu0 %2853
    %2855 = vrot.lane.b32.xlu0 %v2795, 96
    %v2856 = vpop.permute.xlu0 %2855
    %2857 = vrot.lane.b32.xlu0 %v2798, 96
    %v2858 = vpop.permute.xlu0 %2857
    %2859 = vrot.lane.b32.xlu0 %v2801, 96
    %v2860 = vpop.permute.xlu0 %2859
    %2861 = vrot.lane.b32.xlu0 %v2792, 88
    %v2862 = vpop.permute.xlu0 %2861
    %2863 = vrot.lane.b32.xlu0 %v2795, 88
    %v2864 = vpop.permute.xlu0 %2863
    %2865 = vrot.lane.b32.xlu0 %v2798, 88
    %v2866 = vpop.permute.xlu0 %2865
    %2867 = vrot.lane.b32.xlu0 %v2801, 88
    %v2868 = vpop.permute.xlu0 %2867
    %v2869 = vsel %vm230, %v2761, 0
    %v2871 = vsel %vm230, %v2764, 0
    %v2873 = vsel %vm230, %v2792, 0
    %v2875 = vsel %vm230, %v2795, 0
    %v2877 = vsel %vm230, %v2798, 0
    %v2879 = vsel %vm230, %v2801, 0
    %2881 = vmatpush.xpose.msra.mxu0 0.0
    %2882 = vmatpush.xpose.msra.mxu0 0.0
    %2883 = vmatpush.xpose.msra.mxu0 0.0
    %2884 = vmatpush.xpose.msra.mxu0 0.0
    %2885 = vmatpush.xpose.msra.mxu0 0.0
    %2886 = vmatpush.xpose.msra.mxu0 0.0
    %2887 = vmatpush.xpose.msra.mxu0 0.0
    %2888 = vmatpush.xpose.msra.mxu0 0.0
    %2889 = vmatpush.xpose.msra.mxu0 0.0
    %2890 = vmatpush.xpose.msra.mxu0 0.0
    %2891 = vmatpush.xpose.msra.mxu0 0.0
    %2892 = vmatpush.xpose.msra.mxu0 0.0
    %2893 = vmatpush.xpose.msra.mxu0 %v2879
    %2894 = vmatpush.xpose.msra.mxu0 %v2877
    %2895 = vmatpush.xpose.msra.mxu0 %v2875
    %2896 = vmatpush.xpose.msra.mxu0 %v2873
    %2897 = vmatmul.f32.gmra.mxu0 %v2869
    %v2898 = vpop.f32.mrf.mxu0
    %v2899 = vadd.f32 %v122, %v2898
    %2900 = vmatmul.f32.gmra.mxu0 %v2871
    %v2901 = vpop.f32.mrf.mxu0
    %v2902 = vadd.f32 %v123, %v2901
    %2903 = vdwg.mxu0
    %v2904 = vsel %vm230, %v2806, 0
    %v2906 = vsel %vm230, %v2808, 0
    %v2908 = vsel %vm230, %v2830, 0
    %v2910 = vsel %vm230, %v2832, 0
    %v2912 = vsel %vm230, %v2834, 0
    %v2914 = vsel %vm230, %v2836, 0
    %2916 = vmatpush.xpose.msra.mxu0 0.0
    %2917 = vmatpush.xpose.msra.mxu0 0.0
    %2918 = vmatpush.xpose.msra.mxu0 0.0
    %2919 = vmatpush.xpose.msra.mxu0 0.0
    %2920 = vmatpush.xpose.msra.mxu0 0.0
    %2921 = vmatpush.xpose.msra.mxu0 0.0
    %2922 = vmatpush.xpose.msra.mxu0 0.0
    %2923 = vmatpush.xpose.msra.mxu0 0.0
    %2924 = vmatpush.xpose.msra.mxu0 0.0
    %2925 = vmatpush.xpose.msra.mxu0 0.0
    %2926 = vmatpush.xpose.msra.mxu0 0.0
    %2927 = vmatpush.xpose.msra.mxu0 0.0
    %2928 = vmatpush.xpose.msra.mxu0 %v2914
    %2929 = vmatpush.xpose.msra.mxu0 %v2912
    %2930 = vmatpush.xpose.msra.mxu0 %v2910
    %2931 = vmatpush.xpose.msra.mxu0 %v2908
    %2932 = vmatmul.f32.gmra.mxu0 %v2904
    %v2933 = vpop.f32.mrf.mxu0
    %v2934 = vadd.f32 %v122, %v2933
    %2935 = vmatmul.f32.gmra.mxu0 %v2906
    %v2936 = vpop.f32.mrf.mxu0
    %v2937 = vadd.f32 %v123, %v2936
    %2938 = vdwg.mxu0
    %v2939 = vsel %vm230, %v2810, 0
    %v2941 = vsel %vm230, %v2812, 0
    %v2943 = vsel %vm230, %v2838, 0
    %v2945 = vsel %vm230, %v2840, 0
    %v2947 = vsel %vm230, %v2842, 0
    %v2949 = vsel %vm230, %v2844, 0
    %2951 = vmatpush.xpose.msra.mxu0 0.0
    %2952 = vmatpush.xpose.msra.mxu0 0.0
    %2953 = vmatpush.xpose.msra.mxu0 0.0
    %2954 = vmatpush.xpose.msra.mxu0 0.0
    %2955 = vmatpush.xpose.msra.mxu0 0.0
    %2956 = vmatpush.xpose.msra.mxu0 0.0
    %2957 = vmatpush.xpose.msra.mxu0 0.0
    %2958 = vmatpush.xpose.msra.mxu0 0.0
    %2959 = vmatpush.xpose.msra.mxu0 0.0
    %2960 = vmatpush.xpose.msra.mxu0 0.0
    %2961 = vmatpush.xpose.msra.mxu0 0.0
    %2962 = vmatpush.xpose.msra.mxu0 0.0
    %2963 = vmatpush.xpose.msra.mxu0 %v2949
    %2964 = vmatpush.xpose.msra.mxu0 %v2947
    %2965 = vmatpush.xpose.msra.mxu0 %v2945
    %2966 = vmatpush.xpose.msra.mxu0 %v2943
    %2967 = vmatmul.f32.gmra.mxu0 %v2939
    %v2968 = vpop.f32.mrf.mxu0
    %v2969 = vadd.f32 %v122, %v2968
    %2970 = vmatmul.f32.gmra.mxu0 %v2941
    %v2971 = vpop.f32.mrf.mxu0
    %v2972 = vadd.f32 %v123, %v2971
    %2973 = vdwg.mxu0
    %v2974 = vsel %vm230, %v2814, 0
    %v2976 = vsel %vm230, %v2816, 0
    %v2978 = vsel %vm230, %v2846, 0
    %v2980 = vsel %vm230, %v2848, 0
    %v2982 = vsel %vm230, %v2850, 0
    %v2984 = vsel %vm230, %v2852, 0
    %2986 = vmatpush.xpose.msra.mxu0 0.0
    %2987 = vmatpush.xpose.msra.mxu0 0.0
    %2988 = vmatpush.xpose.msra.mxu0 0.0
    %2989 = vmatpush.xpose.msra.mxu0 0.0
    %2990 = vmatpush.xpose.msra.mxu0 0.0
    %2991 = vmatpush.xpose.msra.mxu0 0.0
    %2992 = vmatpush.xpose.msra.mxu0 0.0
    %2993 = vmatpush.xpose.msra.mxu0 0.0
    %2994 = vmatpush.xpose.msra.mxu0 0.0
    %2995 = vmatpush.xpose.msra.mxu0 0.0
    %2996 = vmatpush.xpose.msra.mxu0 0.0
    %2997 = vmatpush.xpose.msra.mxu0 0.0
    %2998 = vmatpush.xpose.msra.mxu0 %v2984
    %2999 = vmatpush.xpose.msra.mxu0 %v2982
    %3000 = vmatpush.xpose.msra.mxu0 %v2980
    %3001 = vmatpush.xpose.msra.mxu0 %v2978
    %3002 = vmatmul.f32.gmra.mxu0 %v2974
    %v3003 = vpop.f32.mrf.mxu0
    %v3004 = vadd.f32 %v122, %v3003
    %3005 = vmatmul.f32.gmra.mxu0 %v2976
    %v3006 = vpop.f32.mrf.mxu0
    %v3007 = vadd.f32 %v123, %v3006
    %3008 = vdwg.mxu0
    %v3009 = vsel %vm230, %v2818, 0
    %v3011 = vsel %vm230, %v2820, 0
    %v3013 = vsel %vm230, %v2854, 0
    %v3015 = vsel %vm230, %v2856, 0
    %v3017 = vsel %vm230, %v2858, 0
    %v3019 = vsel %vm230, %v2860, 0
    %3021 = vmatpush.xpose.msra.mxu0 0.0
    %3022 = vmatpush.xpose.msra.mxu0 0.0
    %3023 = vmatpush.xpose.msra.mxu0 0.0
    %3024 = vmatpush.xpose.msra.mxu0 0.0
    %3025 = vmatpush.xpose.msra.mxu0 0.0
    %3026 = vmatpush.xpose.msra.mxu0 0.0
    %3027 = vmatpush.xpose.msra.mxu0 0.0
    %3028 = vmatpush.xpose.msra.mxu0 0.0
    %3029 = vmatpush.xpose.msra.mxu0 0.0
    %3030 = vmatpush.xpose.msra.mxu0 0.0
    %3031 = vmatpush.xpose.msra.mxu0 0.0
    %3032 = vmatpush.xpose.msra.mxu0 0.0
    %3033 = vmatpush.xpose.msra.mxu0 %v3019
    %3034 = vmatpush.xpose.msra.mxu0 %v3017
    %3035 = vmatpush.xpose.msra.mxu0 %v3015
    %3036 = vmatpush.xpose.msra.mxu0 %v3013
    %3037 = vmatmul.f32.gmra.mxu0 %v3009
    %v3038 = vpop.f32.mrf.mxu0
    %v3039 = vadd.f32 %v122, %v3038
    %3040 = vmatmul.f32.gmra.mxu0 %v3011
    %v3041 = vpop.f32.mrf.mxu0
    %v3042 = vadd.f32 %v123, %v3041
    %3043 = vdwg.mxu0
    %v3044 = vsel %vm230, %v2822, 0
    %v3046 = vsel %vm230, %v2824, 0
    %v3048 = vsel %vm230, %v2862, 0
    %v3050 = vsel %vm230, %v2864, 0
    %v3052 = vsel %vm230, %v2866, 0
    %v3054 = vsel %vm230, %v2868, 0
    %3056 = vmatpush.xpose.msra.mxu0 0.0
    %3057 = vmatpush.xpose.msra.mxu0 0.0
    %3058 = vmatpush.xpose.msra.mxu0 0.0
    %3059 = vmatpush.xpose.msra.mxu0 0.0
    %3060 = vmatpush.xpose.msra.mxu0 0.0
    %3061 = vmatpush.xpose.msra.mxu0 0.0
    %3062 = vmatpush.xpose.msra.mxu0 0.0
    %3063 = vmatpush.xpose.msra.mxu0 0.0
    %3064 = vmatpush.xpose.msra.mxu0 0.0
    %3065 = vmatpush.xpose.msra.mxu0 0.0
    %3066 = vmatpush.xpose.msra.mxu0 0.0
    %3067 = vmatpush.xpose.msra.mxu0 0.0
    %3068 = vmatpush.xpose.msra.mxu0 %v3054
    %3069 = vmatpush.xpose.msra.mxu0 %v3052
    %3070 = vmatpush.xpose.msra.mxu0 %v3050
    %3071 = vmatpush.xpose.msra.mxu0 %v3048
    %3072 = vmatmul.f32.gmra.mxu0 %v3044
    %v3073 = vpop.f32.mrf.mxu0
    %v3074 = vadd.f32 %v122, %v3073
    %3075 = vmatmul.f32.gmra.mxu0 %v3046
    %v3076 = vpop.f32.mrf.mxu0
    %v3077 = vadd.f32 %v123, %v3076
    %3078 = vdwg.mxu0
    %v3079 = vsel %vm827, %v2899, -inf
    %3080 = vmax.xlane.f32.xlu0 %v3079
    %v3081 = vpop.xlane.xlu0 %3080
    %v3082 = vsel %vm827, %v2902, -inf
    %3083 = vmax.xlane.f32.xlu0 %v3082
    %v3084 = vpop.xlane.xlu0 %3083
    %v3085 = vsel %vm827, %v2934, -inf
    %3086 = vmax.xlane.f32.xlu0 %v3085
    %v3087 = vpop.xlane.xlu0 %3086
    %v3088 = vsel %vm827, %v2937, -inf
    %3089 = vmax.xlane.f32.xlu0 %v3088
    %v3090 = vpop.xlane.xlu0 %3089
    %v3091 = vsel %vm827, %v2969, -inf
    %3092 = vmax.xlane.f32.xlu0 %v3091
    %v3093 = vpop.xlane.xlu0 %3092
    %v3094 = vsel %vm827, %v2972, -inf
    %3095 = vmax.xlane.f32.xlu0 %v3094
    %v3096 = vpop.xlane.xlu0 %3095
    %v3097 = vsel %vm827, %v3004, -inf
    %3098 = vmax.xlane.f32.xlu0 %v3097
    %v3099 = vpop.xlane.xlu0 %3098
    %v3100 = vsel %vm827, %v3007, -inf
    %3101 = vmax.xlane.f32.xlu0 %v3100
    %v3102 = vpop.xlane.xlu0 %3101
    %v3103 = vsel %vm827, %v3039, -inf
    %3104 = vmax.xlane.f32.xlu0 %v3103
    %v3105 = vpop.xlane.xlu0 %3104
    %v3106 = vsel %vm827, %v3042, -inf
    %3107 = vmax.xlane.f32.xlu0 %v3106
    %v3108 = vpop.xlane.xlu0 %3107
    %v3109 = vsel %vm827, %v3074, -inf
    %3110 = vmax.xlane.f32.xlu0 %v3109
    %v3111 = vpop.xlane.xlu0 %3110
    %v3112 = vsel %vm827, %v3077, -inf
    %3113 = vmax.xlane.f32.xlu0 %v3112
    %v3114 = vpop.xlane.xlu0 %3113
    %v3115 = vsub.f32 %v2899, %v3081
    %v3116 = vsub.f32 %v2902, %v3084
    %v3117 = vsub.f32 %v2934, %v3087
    %v3118 = vsub.f32 %v2937, %v3090
    %v3119 = vsub.f32 %v2969, %v3093
    %v3120 = vsub.f32 %v2972, %v3096
    %v3121 = vsub.f32 %v3004, %v3099
    %v3122 = vsub.f32 %v3007, %v3102
    %v3123 = vsub.f32 %v3039, %v3105
    %v3124 = vsub.f32 %v3042, %v3108
    %v3125 = vsub.f32 %v3074, %v3111
    %v3126 = vsub.f32 %v3077, %v3114
    %v3127 = vmul.f32 %v3115, 1.442695
    %v3128 = vpow.pop %v3127
    %v3129 = vmul.f32 %v3116, 1.442695
    %v3130 = vpow.pop %v3129
    %v3131 = vmul.f32 %v3117, 1.442695
    %v3132 = vpow.pop %v3131
    %v3133 = vmul.f32 %v3118, 1.442695
    %v3134 = vpow.pop %v3133
    %v3135 = vmul.f32 %v3119, 1.442695
    %v3136 = vpow.pop %v3135
    %v3137 = vmul.f32 %v3120, 1.442695
    %v3138 = vpow.pop %v3137
    %v3139 = vmul.f32 %v3121, 1.442695
    %v3140 = vpow.pop %v3139
    %v3141 = vmul.f32 %v3122, 1.442695
    %v3142 = vpow.pop %v3141
    %v3143 = vmul.f32 %v3123, 1.442695
    %v3144 = vpow.pop %v3143
    %v3145 = vmul.f32 %v3124, 1.442695
    %v3146 = vpow.pop %v3145
    %v3147 = vmul.f32 %v3125, 1.442695
    %v3148 = vpow.pop %v3147
    %v3149 = vmul.f32 %v3126, 1.442695
    %v3150 = vpow.pop %v3149
    %v3151 = vsel %vm827, %v3128, 0.0
    %3152 = vadd.xlane.f32.xlu0 %v3151
    %v3153 = vpop.xlane.xlu0 %3152
    %v3154 = vsel %vm827, %v3130, 0.0
    %3155 = vadd.xlane.f32.xlu0 %v3154
    %v3156 = vpop.xlane.xlu0 %3155
    %v3157 = vsel %vm827, %v3132, 0.0
    %3158 = vadd.xlane.f32.xlu0 %v3157
    %v3159 = vpop.xlane.xlu0 %3158
    %v3160 = vsel %vm827, %v3134, 0.0
    %3161 = vadd.xlane.f32.xlu0 %v3160
    %v3162 = vpop.xlane.xlu0 %3161
    %v3163 = vsel %vm827, %v3136, 0.0
    %3164 = vadd.xlane.f32.xlu0 %v3163
    %v3165 = vpop.xlane.xlu0 %3164
    %v3166 = vsel %vm827, %v3138, 0.0
    %3167 = vadd.xlane.f32.xlu0 %v3166
    %v3168 = vpop.xlane.xlu0 %3167
    %v3169 = vsel %vm827, %v3140, 0.0
    %3170 = vadd.xlane.f32.xlu0 %v3169
    %v3171 = vpop.xlane.xlu0 %3170
    %v3172 = vsel %vm827, %v3142, 0.0
    %3173 = vadd.xlane.f32.xlu0 %v3172
    %v3174 = vpop.xlane.xlu0 %3173
    %v3175 = vsel %vm827, %v3144, 0.0
    %3176 = vadd.xlane.f32.xlu0 %v3175
    %v3177 = vpop.xlane.xlu0 %3176
    %v3178 = vsel %vm827, %v3146, 0.0
    %3179 = vadd.xlane.f32.xlu0 %v3178
    %v3180 = vpop.xlane.xlu0 %3179
    %v3181 = vsel %vm827, %v3148, 0.0
    %3182 = vadd.xlane.f32.xlu0 %v3181
    %v3183 = vpop.xlane.xlu0 %3182
    %v3184 = vsel %vm827, %v3150, 0.0
    %3185 = vadd.xlane.f32.xlu0 %v3184
    %v3186 = vpop.xlane.xlu0 %3185
    %v3187 = vrcp.pop %v3153
    %v3188 = vrcp.pop %v3156
    %v3189 = vrcp.pop %v3159
    %v3190 = vrcp.pop %v3162
    %v3191 = vrcp.pop %v3165
    %v3192 = vrcp.pop %v3168
    %v3193 = vrcp.pop %v3171
    %v3194 = vrcp.pop %v3174
    %v3195 = vrcp.pop %v3177
    %v3196 = vrcp.pop %v3180
    %v3197 = vrcp.pop %v3183
    %v3198 = vrcp.pop %v3186
    %v3199 = vmul.f32 %v3128, %v3187
    %v3200 = vmul.f32 %v3130, %v3188
    %v3201 = vmul.f32 %v3132, %v3189
    %v3202 = vmul.f32 %v3134, %v3190
    %v3203 = vmul.f32 %v3136, %v3191
    %v3204 = vmul.f32 %v3138, %v3192
    %v3205 = vmul.f32 %v3140, %v3193
    %v3206 = vmul.f32 %v3142, %v3194
    %v3207 = vmul.f32 %v3144, %v3195
    %v3208 = vmul.f32 %v3146, %v3196
    %v3209 = vmul.f32 %v3148, %v3197
    %v3210 = vmul.f32 %v3150, %v3198
    %3211 = vrot.lane.b32.xlu0 %v2792, 80
    %v3212 = vpop.permute.xlu0 %3211
    %3213 = vrot.lane.b32.xlu0 %v2795, 80
    %v3214 = vpop.permute.xlu0 %3213
    %3215 = vrot.lane.b32.xlu0 %v2798, 80
    %v3216 = vpop.permute.xlu0 %3215
    %3217 = vrot.lane.b32.xlu0 %v2801, 80
    %v3218 = vpop.permute.xlu0 %3217
    %v3224 = vsel %vm827, %v3199, 0
    %v3227 = vsel %vm827, %v3200, 0
    %3229 = vmatpush.msra.mxu0 0.0
    %3230 = vmatpush.msra.mxu0 0.0
    %3231 = vmatpush.msra.mxu0 0.0
    %3232 = vmatpush.msra.mxu0 0.0
    %3233 = vmatpush.msra.mxu0 0.0
    %3234 = vmatpush.msra.mxu0 0.0
    %3235 = vmatpush.msra.mxu0 0.0
    %3236 = vmatpush.msra.mxu0 0.0
    %3237 = vmatpush.msra.mxu0 0.0
    %3238 = vmatpush.msra.mxu0 0.0
    %3239 = vmatpush.msra.mxu0 0.0
    %3240 = vmatpush.msra.mxu0 0.0
    %3241 = vmatpush.msra.mxu0 %v3218
    %3242 = vmatpush.msra.mxu0 %v3216
    %3243 = vmatpush.msra.mxu0 %v3214
    %3244 = vmatpush.msra.mxu0 %v3212
    %3245 = vmatmul.f32.gmra.mxu0 %v3224
    %v3246 = vpop.f32.mrf.mxu0
    %v3247 = vadd.f32 0.0, %v3246
    %3248 = vmatmul.f32.gmra.mxu0 %v3227
    %v3249 = vpop.f32.mrf.mxu0
    %v3250 = vadd.f32 0.0, %v3249
    %3251 = vdwg.mxu0
    %3252 = vrot.lane.b32.xlu0 %v2830, 80
    %v3253 = vpop.permute.xlu0 %3252
    %3254 = vrot.lane.b32.xlu0 %v2832, 80
    %v3255 = vpop.permute.xlu0 %3254
    %3256 = vrot.lane.b32.xlu0 %v2834, 80
    %v3257 = vpop.permute.xlu0 %3256
    %3258 = vrot.lane.b32.xlu0 %v2836, 80
    %v3259 = vpop.permute.xlu0 %3258
    %v3265 = vsel %vm827, %v3201, 0
    %v3268 = vsel %vm827, %v3202, 0
    %3270 = vmatpush.msra.mxu0 0.0
    %3271 = vmatpush.msra.mxu0 0.0
    %3272 = vmatpush.msra.mxu0 0.0
    %3273 = vmatpush.msra.mxu0 0.0
    %3274 = vmatpush.msra.mxu0 0.0
    %3275 = vmatpush.msra.mxu0 0.0
    %3276 = vmatpush.msra.mxu0 0.0
    %3277 = vmatpush.msra.mxu0 0.0
    %3278 = vmatpush.msra.mxu0 0.0
    %3279 = vmatpush.msra.mxu0 0.0
    %3280 = vmatpush.msra.mxu0 0.0
    %3281 = vmatpush.msra.mxu0 0.0
    %3282 = vmatpush.msra.mxu0 %v3259
    %3283 = vmatpush.msra.mxu0 %v3257
    %3284 = vmatpush.msra.mxu0 %v3255
    %3285 = vmatpush.msra.mxu0 %v3253
    %3286 = vmatmul.f32.gmra.mxu0 %v3265
    %v3287 = vpop.f32.mrf.mxu0
    %v3288 = vadd.f32 0.0, %v3287
    %3289 = vmatmul.f32.gmra.mxu0 %v3268
    %v3290 = vpop.f32.mrf.mxu0
    %v3291 = vadd.f32 0.0, %v3290
    %3292 = vdwg.mxu0
    %3293 = vrot.lane.b32.xlu0 %v2838, 80
    %v3294 = vpop.permute.xlu0 %3293
    %3295 = vrot.lane.b32.xlu0 %v2840, 80
    %v3296 = vpop.permute.xlu0 %3295
    %3297 = vrot.lane.b32.xlu0 %v2842, 80
    %v3298 = vpop.permute.xlu0 %3297
    %3299 = vrot.lane.b32.xlu0 %v2844, 80
    %v3300 = vpop.permute.xlu0 %3299
    %v3306 = vsel %vm827, %v3203, 0
    %v3309 = vsel %vm827, %v3204, 0
    %3311 = vmatpush.msra.mxu0 0.0
    %3312 = vmatpush.msra.mxu0 0.0
    %3313 = vmatpush.msra.mxu0 0.0
    %3314 = vmatpush.msra.mxu0 0.0
    %3315 = vmatpush.msra.mxu0 0.0
    %3316 = vmatpush.msra.mxu0 0.0
    %3317 = vmatpush.msra.mxu0 0.0
    %3318 = vmatpush.msra.mxu0 0.0
    %3319 = vmatpush.msra.mxu0 0.0
    %3320 = vmatpush.msra.mxu0 0.0
    %3321 = vmatpush.msra.mxu0 0.0
    %3322 = vmatpush.msra.mxu0 0.0
    %3323 = vmatpush.msra.mxu0 %v3300
    %3324 = vmatpush.msra.mxu0 %v3298
    %3325 = vmatpush.msra.mxu0 %v3296
    %3326 = vmatpush.msra.mxu0 %v3294
    %3327 = vmatmul.f32.gmra.mxu0 %v3306
    %v3328 = vpop.f32.mrf.mxu0
    %v3329 = vadd.f32 0.0, %v3328
    %3330 = vmatmul.f32.gmra.mxu0 %v3309
    %v3331 = vpop.f32.mrf.mxu0
    %v3332 = vadd.f32 0.0, %v3331
    %3333 = vdwg.mxu0
    %3334 = vrot.lane.b32.xlu0 %v2846, 80
    %v3335 = vpop.permute.xlu0 %3334
    %3336 = vrot.lane.b32.xlu0 %v2848, 80
    %v3337 = vpop.permute.xlu0 %3336
    %3338 = vrot.lane.b32.xlu0 %v2850, 80
    %v3339 = vpop.permute.xlu0 %3338
    %3340 = vrot.lane.b32.xlu0 %v2852, 80
    %v3341 = vpop.permute.xlu0 %3340
    %v3347 = vsel %vm827, %v3205, 0
    %v3350 = vsel %vm827, %v3206, 0
    %3352 = vmatpush.msra.mxu0 0.0
    %3353 = vmatpush.msra.mxu0 0.0
    %3354 = vmatpush.msra.mxu0 0.0
    %3355 = vmatpush.msra.mxu0 0.0
    %3356 = vmatpush.msra.mxu0 0.0
    %3357 = vmatpush.msra.mxu0 0.0
    %3358 = vmatpush.msra.mxu0 0.0
    %3359 = vmatpush.msra.mxu0 0.0
    %3360 = vmatpush.msra.mxu0 0.0
    %3361 = vmatpush.msra.mxu0 0.0
    %3362 = vmatpush.msra.mxu0 0.0
    %3363 = vmatpush.msra.mxu0 0.0
    %3364 = vmatpush.msra.mxu0 %v3341
    %3365 = vmatpush.msra.mxu0 %v3339
    %3366 = vmatpush.msra.mxu0 %v3337
    %3367 = vmatpush.msra.mxu0 %v3335
    %3368 = vmatmul.f32.gmra.mxu0 %v3347
    %v3369 = vpop.f32.mrf.mxu0
    %v3370 = vadd.f32 0.0, %v3369
    %3371 = vmatmul.f32.gmra.mxu0 %v3350
    %v3372 = vpop.f32.mrf.mxu0
    %v3373 = vadd.f32 0.0, %v3372
    %3374 = vdwg.mxu0
    %3375 = vrot.lane.b32.xlu0 %v2854, 80
    %v3376 = vpop.permute.xlu0 %3375
    %3377 = vrot.lane.b32.xlu0 %v2856, 80
    %v3378 = vpop.permute.xlu0 %3377
    %3379 = vrot.lane.b32.xlu0 %v2858, 80
    %v3380 = vpop.permute.xlu0 %3379
    %3381 = vrot.lane.b32.xlu0 %v2860, 80
    %v3382 = vpop.permute.xlu0 %3381
    %v3388 = vsel %vm827, %v3207, 0
    %v3391 = vsel %vm827, %v3208, 0
    %3393 = vmatpush.msra.mxu0 0.0
    %3394 = vmatpush.msra.mxu0 0.0
    %3395 = vmatpush.msra.mxu0 0.0
    %3396 = vmatpush.msra.mxu0 0.0
    %3397 = vmatpush.msra.mxu0 0.0
    %3398 = vmatpush.msra.mxu0 0.0
    %3399 = vmatpush.msra.mxu0 0.0
    %3400 = vmatpush.msra.mxu0 0.0
    %3401 = vmatpush.msra.mxu0 0.0
    %3402 = vmatpush.msra.mxu0 0.0
    %3403 = vmatpush.msra.mxu0 0.0
    %3404 = vmatpush.msra.mxu0 0.0
    %3405 = vmatpush.msra.mxu0 %v3382
    %3406 = vmatpush.msra.mxu0 %v3380
    %3407 = vmatpush.msra.mxu0 %v3378
    %3408 = vmatpush.msra.mxu0 %v3376
    %3409 = vmatmul.f32.gmra.mxu0 %v3388
    %v3410 = vpop.f32.mrf.mxu0
    %v3411 = vadd.f32 0.0, %v3410
    %3412 = vmatmul.f32.gmra.mxu0 %v3391
    %v3413 = vpop.f32.mrf.mxu0
    %v3414 = vadd.f32 0.0, %v3413
    %3415 = vdwg.mxu0
    %3416 = vrot.lane.b32.xlu0 %v2862, 80
    %v3417 = vpop.permute.xlu0 %3416
    %3418 = vrot.lane.b32.xlu0 %v2864, 80
    %v3419 = vpop.permute.xlu0 %3418
    %3420 = vrot.lane.b32.xlu0 %v2866, 80
    %v3421 = vpop.permute.xlu0 %3420
    %3422 = vrot.lane.b32.xlu0 %v2868, 80
    %v3423 = vpop.permute.xlu0 %3422
    %v3429 = vsel %vm827, %v3209, 0
    %v3432 = vsel %vm827, %v3210, 0
    %3434 = vmatpush.msra.mxu0 0.0
    %3435 = vmatpush.msra.mxu0 0.0
    %3436 = vmatpush.msra.mxu0 0.0
    %3437 = vmatpush.msra.mxu0 0.0
    %3438 = vmatpush.msra.mxu0 0.0
    %3439 = vmatpush.msra.mxu0 0.0
    %3440 = vmatpush.msra.mxu0 0.0
    %3441 = vmatpush.msra.mxu0 0.0
    %3442 = vmatpush.msra.mxu0 0.0
    %3443 = vmatpush.msra.mxu0 0.0
    %3444 = vmatpush.msra.mxu0 0.0
    %3445 = vmatpush.msra.mxu0 0.0
    %3446 = vmatpush.msra.mxu0 %v3423
    %3447 = vmatpush.msra.mxu0 %v3421
    %3448 = vmatpush.msra.mxu0 %v3419
    %3449 = vmatpush.msra.mxu0 %v3417
    %3450 = vmatmul.f32.gmra.mxu0 %v3429
    %v3451 = vpop.f32.mrf.mxu0
    %v3452 = vadd.f32 0.0, %v3451
    %3453 = vmatmul.f32.gmra.mxu0 %v3432
    %v3454 = vpop.f32.mrf.mxu0
    %v3455 = vadd.f32 0.0, %v3454
    %3456 = vdwg.mxu0
    %3459 = vrot.lane.b32.xlu0 %v3288, 8
    %v3460 = vpop.permute.xlu0 %3459
    %3461 = vrot.lane.b32.xlu0 %v3291, 8
    %v3462 = vpop.permute.xlu0 %3461
    %3467 = vrot.lane.b32.xlu0 %v3329, 16
    %v3468 = vpop.permute.xlu0 %3467
    %3469 = vrot.lane.b32.xlu0 %v3332, 16
    %v3470 = vpop.permute.xlu0 %3469
    %3475 = vrot.lane.b32.xlu0 %v3370, 24
    %v3476 = vpop.permute.xlu0 %3475
    %3477 = vrot.lane.b32.xlu0 %v3373, 24
    %v3478 = vpop.permute.xlu0 %3477
    %3483 = vrot.lane.b32.xlu0 %v3411, 32
    %v3484 = vpop.permute.xlu0 %3483
    %3485 = vrot.lane.b32.xlu0 %v3414, 32
    %v3486 = vpop.permute.xlu0 %3485
    %3491 = vrot.lane.b32.xlu0 %v3452, 40
    %v3492 = vpop.permute.xlu0 %3491
    %3493 = vrot.lane.b32.xlu0 %v3455, 40
    %v3494 = vpop.permute.xlu0 %3493
    %v3497 = vsel %vm230, %v3247, %v3460
    %v3498 = vsel %vm230, %v3250, %v3462
    %v3499 = vsel %vm437, %v3497, %v3468
    %v3500 = vsel %vm437, %v3498, %v3470
    %v3501 = vsel %vm824, %v3499, %v3476
    %v3502 = vsel %vm824, %v3500, %v3478
    %v3503 = vsel %vm827, %v3501, %v3484
    %v3504 = vsel %vm827, %v3502, %v3486
    %v3505 = vsel %vm830, %v3503, %v3492
    %v3506 = vsel %vm830, %v3504, %v3494
    %s3507 = scalar_lea.vmem [#allocation7], 240
    %v3508 = vld [vmem:[%s3507] sm:$0xff]
    %v3509 = vld [vmem:[%s3507 + $0x8] sm:$0xff]
    %v3510 = vld [vmem:[%s3507 + $0x10] sm:$0xff]
    %v3511 = vld [vmem:[%s3507 + $0x18] sm:$0xff]
    %v3512 = vld [vmem:[%s3507 + $0x20] sm:$0xff]
    %v3513 = vld [vmem:[%s3507 + $0x28] sm:$0xff]
    %v3514 = vperm.slane %v1936, 4
    %v3516 = vsel %vm141, %v3505, 0
    %v3519 = vsel %vm141, %v3506, 0
    %3521 = vmatpush.msra.mxu0 0.0
    %3522 = vmatpush.msra.mxu0 0.0
    %3523 = vmatpush.msra.mxu0 0.0
    %3524 = vmatpush.msra.mxu0 0.0
    %3525 = vmatpush.msra.mxu0 0.0
    %3526 = vmatpush.msra.mxu0 0.0
    %3527 = vmatpush.msra.mxu0 0.0
    %3528 = vmatpush.msra.mxu0 0.0
    %3529 = vmatpush.msra.mxu0 0.0
    %3530 = vmatpush.msra.mxu0 0.0
    %3531 = vmatpush.msra.mxu0 %v3513
    %3532 = vmatpush.msra.mxu0 %v3512
    %3533 = vmatpush.msra.mxu0 %v3511
    %3534 = vmatpush.msra.mxu0 %v3510
    %3535 = vmatpush.msra.mxu0 %v3509
    %3536 = vmatpush.msra.mxu0 %v3508
    %3537 = vmatmul.f32.gmra.mxu0 %v3516
    %v3538 = vpop.f32.mrf.mxu0
    %v3539 = vadd.f32 %v3514, %v3538
    %3540 = vmatmul.f32.gmra.mxu0 %v3519
    %v3541 = vpop.f32.mrf.mxu0
    %v3542 = vadd.f32 %v3514, %v3541
    %3543 = vdwg.mxu0
    %v3544 = vadd.f32 %v2727, %v3539
    %v3545 = vadd.f32 %v2728, %v3542
    %v3546 = vsel %vm141, %v3544, 0.0
    %3547 = vadd.xlane.f32.xlu0 %v3546
    %v3548 = vpop.xlane.xlu0 %3547
    %v3549 = vsel %vm141, %v3545, 0.0
    %3550 = vadd.xlane.f32.xlu0 %v3549
    %v3551 = vpop.xlane.xlu0 %3550
    %v3552 = vmul.f32 %v3548, %v883
    %v3553 = vmul.f32 %v3551, %v883
    %v3554 = vsub.f32 %v3544, %v3552
    %v3555 = vsub.f32 %v3545, %v3553
    %v3556 = vmul.f32 %v3554, %v3554
    %v3557 = vmul.f32 %v3555, %v3555
    %v3558 = vsel %vm141, %v3556, 0.0
    %3559 = vadd.xlane.f32.xlu0 %v3558
    %v3560 = vpop.xlane.xlu0 %3559
    %v3561 = vsel %vm141, %v3557, 0.0
    %3562 = vadd.xlane.f32.xlu0 %v3561
    %v3563 = vpop.xlane.xlu0 %3562
    %v3564 = vmul.f32 %v3560, %v883
    %v3565 = vmul.f32 %v3563, %v883
    %v3566 = vadd.f32 %v3564, 1e-05
    %v3567 = vadd.f32 %v3565, 1e-05
    %v3568 = vrsqrt.pop %v3566
    %v3569 = vmul.f32 %v3568, %v3566
    %v3570 = vmul.f32 %v3569, %v3568
    %v3571 = vmul.f32 0.5, %v3570
    %v3572 = vsub.f32 1.5, %v3571
    %v3573 = vmul.f32 %v3568, %v3572
    %vm3574 = vweird.f32 %v3566
    %vm3575 = vweird.f32 %v3568
    %vm3576 = vmor %vm3574, %vm3575
    %v3577 = vsel %vm3576, %v3568, %v3573
    %v3578 = vrsqrt.pop %v3567
    %v3579 = vmul.f32 %v3578, %v3567
    %v3580 = vmul.f32 %v3579, %v3578
    %v3581 = vmul.f32 0.5, %v3580
    %v3582 = vsub.f32 1.5, %v3581
    %v3583 = vmul.f32 %v3578, %v3582
    %vm3584 = vweird.f32 %v3567
    %vm3585 = vweird.f32 %v3578
    %vm3586 = vmor %vm3584, %vm3585
    %v3587 = vsel %vm3586, %v3578, %v3583
    %v3588 = vmul.f32 %v3554, %v3577
    %v3589 = vmul.f32 %v3555, %v3587
    %v3590 = vperm.slane %v1938, 1
    %v3591 = vmul.f32 %v3588, %v3590
    %v3592 = vmul.f32 %v3589, %v3590
    %v3593 = vperm.slane %v1938, 2
    %v3594 = vadd.f32 %v3591, %v3593
    %v3595 = vadd.f32 %v3592, %v3593
    %s3596 = scalar_lea.vmem [#allocation10], 48
    %v3597 = vld [vmem:[%s3596] sm:$0xff]
    %v3598 = vld [vmem:[%s3596 + $0x8] sm:$0xff]
    %v3599 = vld [vmem:[%s3596 + $0x10] sm:$0xff]
    %v3600 = vld [vmem:[%s3596 + $0x18] sm:$0xff]
    %v3601 = vld [vmem:[%s3596 + $0x20] sm:$0xff]
    %v3602 = vld [vmem:[%s3596 + $0x28] sm:$0xff]
    %v3603 = vperm.slane %v1936, 5
    %v3605 = vsel %vm141, %v3594, 0
    %v3608 = vsel %vm141, %v3595, 0
    %3610 = vmatpush.msra.mxu0 0.0
    %3611 = vmatpush.msra.mxu0 0.0
    %3612 = vmatpush.msra.mxu0 0.0
    %3613 = vmatpush.msra.mxu0 0.0
    %3614 = vmatpush.msra.mxu0 0.0
    %3615 = vmatpush.msra.mxu0 0.0
    %3616 = vmatpush.msra.mxu0 0.0
    %3617 = vmatpush.msra.mxu0 0.0
    %3618 = vmatpush.msra.mxu0 0.0
    %3619 = vmatpush.msra.mxu0 0.0
    %3620 = vmatpush.msra.mxu0 %v3602
    %3621 = vmatpush.msra.mxu0 %v3601
    %3622 = vmatpush.msra.mxu0 %v3600
    %3623 = vmatpush.msra.mxu0 %v3599
    %3624 = vmatpush.msra.mxu0 %v3598
    %3625 = vmatpush.msra.mxu0 %v3597
    %3626 = vmatmul.f32.gmra.mxu0 %v3605
    %v3627 = vpop.f32.mrf.mxu0
    %v3628 = vadd.f32 %v3603, %v3627
    %3629 = vmatmul.f32.gmra.mxu0 %v3608
    %v3630 = vpop.f32.mrf.mxu0
    %v3631 = vadd.f32 %v3603, %v3630
    %3632 = vdwg.mxu0
    %v3633 = vmax.f32 %v3628, 0.0
    %v3634 = vmax.f32 %v3631, 0.0
    %s3635 = scalar_lea.vmem %s8, 64
    %v3636 = vld [vmem:[%s3635] sm:$0xff]
    %v3637 = vld [vmem:[%s3635 + $0x8] sm:$0xff]
    %v3638 = vld [vmem:[%s3635 + $0x10] sm:$0xff]
    %v3639 = vld [vmem:[%s3635 + $0x18] sm:$0xff]
    %v3640 = vld [vmem:[%s3635 + $0x20] sm:$0xff]
    %v3641 = vld [vmem:[%s3635 + $0x28] sm:$0xff]
    %v3642 = vld [vmem:[%s3635 + $0x30] sm:$0xff]
    %v3643 = vld [vmem:[%s3635 + $0x38] sm:$0xff]
    %v3644 = vperm.slane %v1936, 6
    %v3646 = vsel %vm1853, %v3633, 0
    %v3649 = vsel %vm1853, %v3634, 0
    %3651 = vmatpush.msra.mxu0 0.0
    %3652 = vmatpush.msra.mxu0 0.0
    %3653 = vmatpush.msra.mxu0 0.0
    %3654 = vmatpush.msra.mxu0 0.0
    %3655 = vmatpush.msra.mxu0 0.0
    %3656 = vmatpush.msra.mxu0 0.0
    %3657 = vmatpush.msra.mxu0 0.0
    %3658 = vmatpush.msra.mxu0 0.0
    %3659 = vmatpush.msra.mxu0 %v3643
    %3660 = vmatpush.msra.mxu0 %v3642
    %3661 = vmatpush.msra.mxu0 %v3641
    %3662 = vmatpush.msra.mxu0 %v3640
    %3663 = vmatpush.msra.mxu0 %v3639
    %3664 = vmatpush.msra.mxu0 %v3638
    %3665 = vmatpush.msra.mxu0 %v3637
    %3666 = vmatpush.msra.mxu0 %v3636
    %3667 = vmatmul.f32.gmra.mxu0 %v3646
    %v3668 = vpop.f32.mrf.mxu0
    %v3669 = vadd.f32 %v3644, %v3668
    %3670 = vmatmul.f32.gmra.mxu0 %v3649
    %v3671 = vpop.f32.mrf.mxu0
    %v3672 = vadd.f32 %v3644, %v3671
    %3673 = vdwg.mxu0
    %v3674 = vadd.f32 %v3594, %v3669
    %v3675 = vadd.f32 %v3595, %v3672
    %v3676 = vsel %vm141, %v3674, 0.0
    %3677 = vadd.xlane.f32.xlu0 %v3676
    %v3678 = vpop.xlane.xlu0 %3677
    %v3679 = vsel %vm141, %v3675, 0.0
    %3680 = vadd.xlane.f32.xlu0 %v3679
    %v3681 = vpop.xlane.xlu0 %3680
    %v3682 = vmul.f32 %v3678, %v883
    %v3683 = vmul.f32 %v3681, %v883
    %v3684 = vsub.f32 %v3674, %v3682
    %v3685 = vsub.f32 %v3675, %v3683
    %v3686 = vmul.f32 %v3684, %v3684
    %v3687 = vmul.f32 %v3685, %v3685
    %v3688 = vsel %vm141, %v3686, 0.0
    %3689 = vadd.xlane.f32.xlu0 %v3688
    %v3690 = vpop.xlane.xlu0 %3689
    %v3691 = vsel %vm141, %v3687, 0.0
    %3692 = vadd.xlane.f32.xlu0 %v3691
    %v3693 = vpop.xlane.xlu0 %3692
    %v3694 = vmul.f32 %v3690, %v883
    %v3695 = vmul.f32 %v3693, %v883
    %v3696 = vadd.f32 %v3694, 1e-05
    %v3697 = vadd.f32 %v3695, 1e-05
    %v3698 = vrsqrt.pop %v3696
    %v3699 = vmul.f32 %v3698, %v3696
    %v3700 = vmul.f32 %v3699, %v3698
    %v3701 = vmul.f32 0.5, %v3700
    %v3702 = vsub.f32 1.5, %v3701
    %v3703 = vmul.f32 %v3698, %v3702
    %vm3704 = vweird.f32 %v3696
    %vm3705 = vweird.f32 %v3698
    %vm3706 = vmor %vm3704, %vm3705
    %v3707 = vsel %vm3706, %v3698, %v3703
    %v3708 = vrsqrt.pop %v3697
    %v3709 = vmul.f32 %v3708, %v3697
    %v3710 = vmul.f32 %v3709, %v3708
    %v3711 = vmul.f32 0.5, %v3710
    %v3712 = vsub.f32 1.5, %v3711
    %v3713 = vmul.f32 %v3708, %v3712
    %vm3714 = vweird.f32 %v3697
    %vm3715 = vweird.f32 %v3708
    %vm3716 = vmor %vm3714, %vm3715
    %v3717 = vsel %vm3716, %v3708, %v3713
    %v3718 = vmul.f32 %v3684, %v3707
    %v3719 = vmul.f32 %v3685, %v3717
    %v3720 = vperm.slane %v1938, 3
    %v3721 = vmul.f32 %v3718, %v3720
    %v3722 = vmul.f32 %v3719, %v3720
    %v3723 = vperm.slane %v1938, 4
    %v3724 = vadd.f32 %v3721, %v3723
    %v3725 = vadd.f32 %v3722, %v3723
    %3726 = vst.msk [vmem:[#allocation11] sm:$0xff] %vm141, %v3724
    %3727 = vst.msk [vmem:[#allocation11 + $0x8] sm:$0xff] %vm141, %v3725
    // Predicated region
    $region62: #{tpu_custom_call.1} parent=1 // pred_check
      _
    $region63: #{tpu_custom_call.1} parent=1 // pred_check_branch
      %3729 = sbr.rel (0) target = $region65
    $region64: #{tpu_custom_call.1} parent=1 // pred_region
      %3731 = vsyncadd [#allocation4], 0
      %s3732 = sshll.u32 [#allocation11], 4
      %s3733 = int_to_ptr.vmem [resolvable:$true] %s3732
      %s3734 = sshll.u32 %s10, 4
      %s3735 = int_to_ptr.hbm [resolvable:$true] %s3734
      %3740 = dma.vmem_to_hbm [thread:$0]  %s3733, 256, %s3735, [#allocation4], 128, 128, 8
    $region65: #{tpu_custom_call.1} parent=1 // pred_fallthru
      _
    // Predicated region
    $region66: #{tpu_custom_call.1} parent=1 // pred_check
      _
    $region67: #{tpu_custom_call.1} parent=1 // pred_check_branch
      %3742 = sbr.rel (0) target = $region69
    $region68: #{tpu_custom_call.1} parent=1 // pred_region
      %3744 = dma.done [#allocation4], 256
    $region69: #{tpu_custom_call.1} parent=1 // pred_fallthru
      _
    %3745 = vsyncpa [#allocation3], 1
    %3746 = vsyncpa [#allocation6], 1
    %3747 = vsyncpa [#allocation9], 1
    %3748 = vsyncpa [#allocation4], 1

</llo_original>
